<compile_context>
chip_gen: v7x
topology: tpu7x:2x2x1
jax: 0.10.0
libtpu: 0.0.40
codegen_flags: <defaults>
</compile_context>

<pallas_src>
import jax
import jax.numpy as jnp
from jax.experimental import pallas as pl
from jax.experimental.pallas import tpu as pltpu


def _conv3d_relu_kernel(x_ref, w_ref, o_ref, acc_ref):
    # x_ref:   (1, TD, H+2, W, 9C)  -- kd/kw taps pre-packed into the lane dim
    # w_ref:   (3, 9C, C)           -- one (9C, C) weight matrix per kh tap
    # o_ref:   (1, TD, H, W, C)
    # acc_ref: (TD*H*W, C) float32 VMEM accumulator
    _, TD, Hp, W, K9 = x_ref.shape
    H = Hp - 2
    for kh in range(3):  # only 3 fat matmuls per grid step (K = 9C)
        patch = x_ref[0, :, pl.ds(kh, H), :, :].reshape(TD * H * W, K9)
        contrib = jnp.dot(patch, w_ref[kh], preferred_element_type=jnp.float32)
        if kh == 0:
            acc_ref[...] = contrib
        else:
            acc_ref[...] = acc_ref[...] + contrib
    out = jnp.maximum(acc_ref[...], 0.0)  # fused ReLU
    o_ref[...] = out.reshape(o_ref.shape).astype(o_ref.dtype)


def _pick_depth_tile(D, target=4):
    for t in range(min(D, target), 0, -1):
        if D % t == 0:
            return t
    return 1


def conv_relu_3d(x_ncdhw, weight_oidhw, *, depth_tile=4):
    """x_ncdhw: (N, C, D, H, W); weight_oidhw: (C, C, 3, 3, 3). Returns NCDHW."""
    N, C, D, H, W = x_ncdhw.shape
    dtype = x_ncdhw.dtype
    K9 = 9 * C

    # NCDHW -> NDHWC (channels last -> TPU lane axis), zero-pad spatial dims by 1.
    x = jnp.transpose(x_ncdhw, (0, 2, 3, 4, 1))
    x_pad = jnp.pad(x, ((0, 0), (1, 1), (1, 1), (1, 1), (0, 0)))

    # Pack the (kd, kw) taps into the channel dim:
    #   xp[n, d, hp, w, (kd*3 + kw)*C + ci] = x_pad[n, d+kd, hp, w+kw, ci]
    # Shape: (N, D, H+2, W, 9C).  (3x3 = 9x HBM for the input, but it eliminates the
    # depth halo and all kw-offset relayouts inside the kernel.)
    parts = [x_pad[:, kd:kd + D, :, kw:kw + W, :]
             for kd in range(3) for kw in range(3)]
    xp = jnp.concatenate(parts, axis=-1)

    # Weights: (Cout, Cin, kd, kh, kw) -> (kh, kd, kw, Cin, Cout) -> (3, 9C, Cout).
    # Cast once here; no per-tap casts inside the kernel loop.
    wp = jnp.transpose(weight_oidhw, (3, 2, 4, 1, 0)).reshape(3, K9, C).astype(dtype)

    TD = _pick_depth_tile(D, depth_tile)
    grid = (N, D // TD)

    out_ndhwc = pl.pallas_call(
        _conv3d_relu_kernel,
        out_shape=jax.ShapeDtypeStruct((N, D, H, W, C), dtype),
        grid_spec=pltpu.PrefetchScalarGridSpec(
            num_scalar_prefetch=0,
            grid=grid,
            in_specs=[
                # Only the TD depth planes needed this step (no halo: kd is packed),
                # so VMEM per step is bounded regardless of D.
                pl.BlockSpec((1, TD, H + 2, W, K9), lambda n, d: (n, d, 0, 0, 0)),
                # Full packed weights, same block for every grid point.
                pl.BlockSpec((3, K9, C), lambda n, d: (0, 0, 0)),
            ],
            out_specs=pl.BlockSpec((1, TD, H, W, C), lambda n, d: (n, d, 0, 0, 0)),
            scratch_shapes=[pltpu.VMEM((TD * H * W, C), jnp.float32)],
        ),
        # No cross-step accumulation -> both grid axes parallel (megacore / v7x 2 TCs).
        compiler_params=pltpu.CompilerParams(
            dimension_semantics=("parallel", "parallel")),
    )(xp, wp)

    # NDHWC -> NCDHW
    return jnp.transpose(out_ndhwc, (0, 4, 1, 2, 3))


if __name__ == "__main__":
    key = jax.random.PRNGKey(0)
    k_x, k_w = jax.random.split(key)

    # VDSR uses 64 channels; keep spatial dims small for the demo.
    N, C, D, H, W = 2, 64, 8, 8, 8
    x = jax.random.normal(k_x, (N, C, D, H, W), dtype=jnp.float32)

    # Deterministic synthetic weight init (same scale spirit as nn.Conv3d default).
    fan_in = C * 3 * 3 * 3
    bound = 1.0 / (fan_in ** 0.5)
    weight = jax.random.uniform(k_w, (C, C, 3, 3, 3), dtype=jnp.float32,
                                minval=-bound, maxval=bound)

    out = conv_relu_3d(x, weight)
    out = jax.block_until_ready(out)

    # Reference: XLA conv (same semantics as torch.nn.Conv3d, pad=1, no bias) + ReLU.
    ref = jax.lax.conv_general_dilated(
        x, weight, window_strides=(1, 1, 1),
        padding=((1, 1), (1, 1), (1, 1)),
        dimension_numbers=("NCDHW", "OIDHW", "NCDHW"),
        precision=jax.lax.Precision.HIGHEST)
    ref = jnp.maximum(ref, 0.0)

    assert out.shape == (N, C, D, H, W)
    assert jnp.allclose(out, ref, atol=2e-3, rtol=2e-3), "mismatch vs reference conv"
    print("KERNEL_OK")
</pallas_src>

<mosaic_0001>
module attributes {stable_mosaic.version = 11 : i64} {
  func.func @_conv3d_relu_kernel(%arg0: i32, %arg1: i32, %arg2: memref<1x4x10x8x576xf32, #tpu.memory_space<vmem>>, %arg3: memref<3x576x64xf32, #tpu.memory_space<vmem>>, %arg4: memref<1x4x8x8x64xf32, #tpu.memory_space<vmem>>, %arg5: memref<256x64xf32, #tpu.memory_space<vmem>>) attributes {dimension_semantics = [#tpu.dimension_semantics<parallel>, #tpu.dimension_semantics<parallel>], iteration_bounds = array<i64: 2, 2>, scalar_prefetch = 0 : i64, scratch_operands = 1 : i64, tpu.core_type = #tpu.core_type<tc>, window_params = [{transform_indices = @transform_0, window_bounds = array<i64: 1, 4, 10, 8, 576>}, {pipeline_mode = #tpu.pipeline_mode<synchronous>, transform_indices = @transform_1, window_bounds = array<i64: 3, 576, 64>}, {transform_indices = @transform_2, window_bounds = array<i64: 1, 4, 8, 8, 64>}]} {
    %c0 = arith.constant 0 : index
    %c0_0 = arith.constant 0 : index
    %c0_1 = arith.constant 0 : index
    %c0_2 = arith.constant 0 : index
    %c0_3 = arith.constant 0 : index
    %0 = vector.load %arg2[%c0, %c0_0, %c0_1, %c0_2, %c0_3] : memref<1x4x10x8x576xf32, #tpu.memory_space<vmem>>, vector<1x4x8x8x576xf32>
    %1 = vector.shape_cast %0 : vector<1x4x8x8x576xf32> to vector<4x8x8x576xf32>
    %2 = vector.shape_cast %1 : vector<4x8x8x576xf32> to vector<256x576xf32>
    %c0_4 = arith.constant 0 : index
    %c0_5 = arith.constant 0 : index
    %c0_6 = arith.constant 0 : index
    %3 = vector.load %arg3[%c0_4, %c0_5, %c0_6] : memref<3x576x64xf32, #tpu.memory_space<vmem>>, vector<1x576x64xf32>
    %4 = vector.shape_cast %3 : vector<1x576x64xf32> to vector<576x64xf32>
    %cst = arith.constant dense<0.000000e+00> : vector<256x64xf32>
    %5 = tpu.matmul %2, %4, %cst {dimension_numbers = #tpu.dot_dimension_numbers<[1], [0], [0], [1], [0, 0, 1, 1], [], []>} : vector<256x576xf32>, vector<576x64xf32>, vector<256x64xf32> -> vector<256x64xf32>
    %c0_7 = arith.constant 0 : index
    %c0_8 = arith.constant 0 : index
    %6 = vector.load %arg5[%c0_7, %c0_8] : memref<256x64xf32, #tpu.memory_space<vmem>>, vector<256x64xf32>
    tpu.vector_store %arg5[%c0_7, %c0_8], %5 {strides = array<i32>} : memref<256x64xf32, #tpu.memory_space<vmem>>, vector<256x64xf32>,
    %c0_9 = arith.constant 0 : index
    %c0_10 = arith.constant 0 : index
    %c1 = arith.constant 1 : index
    %c0_11 = arith.constant 0 : index
    %c0_12 = arith.constant 0 : index
    %7 = vector.load %arg2[%c0_9, %c0_10, %c1, %c0_11, %c0_12] : memref<1x4x10x8x576xf32, #tpu.memory_space<vmem>>, vector<1x4x8x8x576xf32>
    %8 = vector.shape_cast %7 : vector<1x4x8x8x576xf32> to vector<4x8x8x576xf32>
    %9 = vector.shape_cast %8 : vector<4x8x8x576xf32> to vector<256x576xf32>
    %c1_13 = arith.constant 1 : index
    %c0_14 = arith.constant 0 : index
    %c0_15 = arith.constant 0 : index
    %10 = vector.load %arg3[%c1_13, %c0_14, %c0_15] : memref<3x576x64xf32, #tpu.memory_space<vmem>>, vector<1x576x64xf32>
    %11 = vector.shape_cast %10 : vector<1x576x64xf32> to vector<576x64xf32>
    %cst_16 = arith.constant dense<0.000000e+00> : vector<256x64xf32>
    %12 = tpu.matmul %9, %11, %cst_16 {dimension_numbers = #tpu.dot_dimension_numbers<[1], [0], [0], [1], [0, 0, 1, 1], [], []>} : vector<256x576xf32>, vector<576x64xf32>, vector<256x64xf32> -> vector<256x64xf32>
    %c0_17 = arith.constant 0 : index
    %c0_18 = arith.constant 0 : index
    %13 = vector.load %arg5[%c0_17, %c0_18] : memref<256x64xf32, #tpu.memory_space<vmem>>, vector<256x64xf32>
    %14 = arith.addf %13, %12 : vector<256x64xf32>
    %c0_19 = arith.constant 0 : index
    %c0_20 = arith.constant 0 : index
    %15 = vector.load %arg5[%c0_19, %c0_20] : memref<256x64xf32, #tpu.memory_space<vmem>>, vector<256x64xf32>
    tpu.vector_store %arg5[%c0_19, %c0_20], %14 {strides = array<i32>} : memref<256x64xf32, #tpu.memory_space<vmem>>, vector<256x64xf32>,
    %c0_21 = arith.constant 0 : index
    %c0_22 = arith.constant 0 : index
    %c2 = arith.constant 2 : index
    %c0_23 = arith.constant 0 : index
    %c0_24 = arith.constant 0 : index
    %16 = vector.load %arg2[%c0_21, %c0_22, %c2, %c0_23, %c0_24] : memref<1x4x10x8x576xf32, #tpu.memory_space<vmem>>, vector<1x4x8x8x576xf32>
    %17 = vector.shape_cast %16 : vector<1x4x8x8x576xf32> to vector<4x8x8x576xf32>
    %18 = vector.shape_cast %17 : vector<4x8x8x576xf32> to vector<256x576xf32>
    %c2_25 = arith.constant 2 : index
    %c0_26 = arith.constant 0 : index
    %c0_27 = arith.constant 0 : index
    %19 = vector.load %arg3[%c2_25, %c0_26, %c0_27] : memref<3x576x64xf32, #tpu.memory_space<vmem>>, vector<1x576x64xf32>
    %20 = vector.shape_cast %19 : vector<1x576x64xf32> to vector<576x64xf32>
    %cst_28 = arith.constant dense<0.000000e+00> : vector<256x64xf32>
    %21 = tpu.matmul %18, %20, %cst_28 {dimension_numbers = #tpu.dot_dimension_numbers<[1], [0], [0], [1], [0, 0, 1, 1], [], []>} : vector<256x576xf32>, vector<576x64xf32>, vector<256x64xf32> -> vector<256x64xf32>
    %c0_29 = arith.constant 0 : index
    %c0_30 = arith.constant 0 : index
    %22 = vector.load %arg5[%c0_29, %c0_30] : memref<256x64xf32, #tpu.memory_space<vmem>>, vector<256x64xf32>
    %23 = arith.addf %22, %21 : vector<256x64xf32>
    %c0_31 = arith.constant 0 : index
    %c0_32 = arith.constant 0 : index
    %24 = vector.load %arg5[%c0_31, %c0_32] : memref<256x64xf32, #tpu.memory_space<vmem>>, vector<256x64xf32>
    tpu.vector_store %arg5[%c0_31, %c0_32], %23 {strides = array<i32>} : memref<256x64xf32, #tpu.memory_space<vmem>>, vector<256x64xf32>,
    %c0_33 = arith.constant 0 : index
    %c0_34 = arith.constant 0 : index
    %25 = vector.load %arg5[%c0_33, %c0_34] : memref<256x64xf32, #tpu.memory_space<vmem>>, vector<256x64xf32>
    %cst_35 = arith.constant 0.000000e+00 : f32
    %26 = vector.broadcast %cst_35 : f32 to vector<256x64xf32>
    %27 = arith.maximumf %25, %26 : vector<256x64xf32>
    %28 = vector.shape_cast %27 : vector<256x64xf32> to vector<1x4x8x8x64xf32>
    %c0_36 = arith.constant 0 : index
    %c0_37 = arith.constant 0 : index
    %c0_38 = arith.constant 0 : index
    %c0_39 = arith.constant 0 : index
    %c0_40 = arith.constant 0 : index
    %29 = vector.load %arg4[%c0_36, %c0_37, %c0_38, %c0_39, %c0_40] : memref<1x4x8x8x64xf32, #tpu.memory_space<vmem>>, vector<1x4x8x8x64xf32>
    tpu.vector_store %arg4[%c0_36, %c0_37, %c0_38, %c0_39, %c0_40], %28 {strides = array<i32>} : memref<1x4x8x8x64xf32, #tpu.memory_space<vmem>>, vector<1x4x8x8x64xf32>,
    return
  }
  func.func @transform_0(%arg0: i32, %arg1: i32) -> (i32, i32, i32, i32, i32) {
    %c0_i32 = arith.constant 0 : i32
    %c0_i32_0 = arith.constant 0 : i32
    %c0_i32_1 = arith.constant 0 : i32
    %c0_i32_2 = arith.constant 0 : i32
    return %arg0, %arg1, %c0_i32, %c0_i32_0, %c0_i32_1 : i32, i32, i32, i32, i32
  }
  func.func @transform_1(%arg0: i32, %arg1: i32) -> (i32, i32, i32) {
    %c0_i32 = arith.constant 0 : i32
    %c0_i32_0 = arith.constant 0 : i32
    %c0_i32_1 = arith.constant 0 : i32
    %c0_i32_2 = arith.constant 0 : i32
    return %c0_i32, %c0_i32_0, %c0_i32_1 : i32, i32, i32
  }
  func.func @transform_2(%arg0: i32, %arg1: i32) -> (i32, i32, i32, i32, i32) {
    %c0_i32 = arith.constant 0 : i32
    %c0_i32_0 = arith.constant 0 : i32
    %c0_i32_1 = arith.constant 0 : i32
    %c0_i32_2 = arith.constant 0 : i32
    return %arg0, %arg1, %c0_i32, %c0_i32_0, %c0_i32_1 : i32, i32, i32, i32, i32
  }
}

</mosaic_0001>

<llo_original>
// kernel: tpu_custom_call.1
$region0: #{tpu_custom_call.1}
  #allocation0 [shape = 'u32[]', space=smem, size = 0x4, offset = 0x4, fixed_abs, tag = 'smem constant byte address 0x4 - core index']
  #allocation1 [shape = 'u32[144,128]{1,0:T(1,128)}', space=vmem, size = 0x12000, scoped, tag = 'internal scratch']
  #allocation2 [shape = 'f32[256,64]{1,0:T(8,128)}', space=vmem, size = 0x20000, scoped, tag = 'scratch operand']
  %s0 = inlined_call_operand.hbm [shape: f32[2,8,10,8,576], index: 0, kind: input, shape index: {}]
  %s1 = inlined_call_operand.vmem [shape: f32[3,576,64], index: 1, kind: input, shape index: {}]
  %s2 = inlined_call_operand.hbm [shape: f32[2,8,8,8,64], index: 2, kind: output, shape index: {}]
  %s3 = sld [smem:[#allocation0]]
  $region45: #{tpu_custom_call.1} parent=0
    _
  %s5 = ssub.s32 1, %s3
  %s6 = scalar_select 0, %s5, %s3
  $region1: #{tpu_custom_call.1} parent=0
    #allocation3 [shape = 'u8[1638400]{0}', space=vmem, size = 0x190000, scoped, tag = 'input window, operand 0']
    #allocation4 [shape = 's32[2]{0}', space=sflag, size = 0x8, scoped, tag = 'scoped memory for tpu_custom_call.1']
    #allocation5 [shape = 's32[2]{0}', space=sflag, size = 0x8, scoped, tag = 'scoped memory for tpu_custom_call.1']
    #allocation6 [shape = 'u8[262144]{0}', space=vmem, size = 0x40000, scoped, tag = 'output window, operand 0']
    %7 = vsyncpa [#allocation4], 0
    %s8 = scalar_lea.sflag [#allocation4], 1
    %9 = vsyncpa %s8, 0
    %10 = vsyncpa [#allocation5], 0
    %s11 = scalar_lea.sflag [#allocation5], 1
    %12 = vsyncpa %s11, 0
    loop: start=0, step=1, limit=6
    $region2: #{tpu_custom_call.1} parent=1 // loop_pre_header
      _
    $region3: #{tpu_custom_call.1} parent=1 // loop_header
      %s14 = sphi 0, %s18
      %p15 = scmp.ge.s32.totalorder %s14, 6
      %s21 = sphi 0, %s33
      %s22 = sphi 0, %s29
      %s23 = sphi 0, %s21
      %s24 = sphi 0, %s22
      %s25 = sphi 0, %s23
      %s26 = sphi 0, %s24
      %s38 = sphi 0, %s40
      %s41 = sphi 0, %s38
      %s42 = sphi 0, %s41
      %s58 = sphi 0, %s42
      %s62 = sphi 0, %s62
      %s64 = sphi 0, %s62
      %s65 = sphi 0, %s64
      %s79 = sphi 0, %s65
      %s87 = sphi 0, %s89
      %s90 = sphi 0, %s87
      %s91 = sphi 0, %s90
      %s107 = sphi 0, %s91
    $region4: #{tpu_custom_call.1} parent=1 // loop_header_branch
      %17 = sbr.rel (%p15) target = $region8
    $region5: #{tpu_custom_call.1} parent=1 // loop_body
      %s19 = ssub.s32 %s14, 1
      %s20 = ssub.s32 %s14, 2
      %s27 = sadd.s32 1, %s22
      %p28 = scmp.ge.s32.totalorder %s27, 2
      %s29 = scalar_select %p28, 0, %s27
      %s30 = sadd.s32 1, %s21
      %s31 = scalar_select %p28, %s30, %s21
      %p32 = scmp.ge.s32.totalorder %s31, 2
      %s33 = scalar_select %p32, 0, %s31
      %s34 = ssub.s32 %s21, %s33
      %s35 = ssub.s32 %s22, %s29
      %s36 = sor.u32 %s34, %s35
      %p37 = scmp.eq.s32.totalorder %s36, 0
      %s39 = sadd.s32 %s38, 1
      %s40 = scalar_select %p37, %s38, %s39
      %p43 = pneg %p37
      %p44 = scmp.eq.s32.totalorder %s14, 3
      %p45 = por %p43, %p44
      %p46 = scmp.ne.s32.totalorder %s38, %s41
      %p47 = scmp.eq.s32.totalorder %s14, 0
      %p48 = por %p46, %p47
      %p49 = scmp.ne.s32.totalorder %s38, %s41
      %p50 = scmp.eq.s32.totalorder %s19, 3
      %p51 = por %p49, %p50
      %p52 = scmp.ne.s32.totalorder %s41, %s42
      %p53 = scmp.eq.s32.totalorder %s19, 0
      %p54 = por %p52, %p53
      %p55 = scmp.ne.s32.totalorder %s41, %s42
      %p56 = scmp.eq.s32.totalorder %s20, 3
      %p57 = por %p55, %p56
      %p59 = scmp.ne.s32.totalorder %s42, %s58
      %p60 = scmp.eq.s32.totalorder %s20, 0
      %p61 = por %p59, %p60
      %s63 = sadd.s32 %s62, 1
      %p66 = scmp.eq.s32.totalorder %s14, 3
      %p67 = scmp.ne.s32.totalorder %s62, %s64
      %p68 = scmp.eq.s32.totalorder %s14, 0
      %p69 = por %p67, %p68
      %p70 = scmp.ne.s32.totalorder %s62, %s64
      %p71 = scmp.eq.s32.totalorder %s19, 3
      %p72 = por %p70, %p71
      %p73 = scmp.ne.s32.totalorder %s64, %s65
      %p74 = scmp.eq.s32.totalorder %s19, 0
      %p75 = por %p73, %p74
      %p76 = scmp.ne.s32.totalorder %s64, %s65
      %p77 = scmp.eq.s32.totalorder %s20, 3
      %p78 = por %p76, %p77
      %p80 = scmp.ne.s32.totalorder %s65, %s79
      %p81 = scmp.eq.s32.totalorder %s20, 0
      %p82 = por %p80, %p81
      %s83 = ssub.s32 %s21, %s33
      %s84 = ssub.s32 %s22, %s29
      %s85 = sor.u32 %s83, %s84
      %p86 = scmp.eq.s32.totalorder %s85, 0
      %s88 = sadd.s32 %s87, 1
      %s89 = scalar_select %p86, %s87, %s88
      %p92 = pneg %p86
      %p93 = scmp.eq.s32.totalorder %s14, 3
      %p94 = por %p92, %p93
      %p95 = scmp.ne.s32.totalorder %s87, %s90
      %p96 = scmp.eq.s32.totalorder %s14, 0
      %p97 = por %p95, %p96
      %p98 = scmp.ne.s32.totalorder %s87, %s90
      %p99 = scmp.eq.s32.totalorder %s19, 3
      %p100 = por %p98, %p99
      %p101 = scmp.ne.s32.totalorder %s90, %s91
      %p102 = scmp.eq.s32.totalorder %s19, 0
      %p103 = por %p101, %p102
      %p104 = scmp.ne.s32.totalorder %s90, %s91
      %p105 = scmp.eq.s32.totalorder %s20, 3
      %p106 = por %p104, %p105
      %p108 = scmp.ne.s32.totalorder %s91, %s107
      %p109 = scmp.eq.s32.totalorder %s20, 0
      %p110 = por %p108, %p109
      %p111 = scmp.le.s32.totalorder 1, %s14
      %p112 = scmp.lt.s32.totalorder %s14, 5
      %p113 = pnand %p111, %p112
      %p114 = pneg %p113
      // Predicated region
      $region9: #{tpu_custom_call.1} parent=5 // pred_check
        _
      $region10: #{tpu_custom_call.1} parent=5 // pred_check_branch
        %116 = sbr.rel (%p113) target = $region12
      $region11: #{tpu_custom_call.1} parent=5 // pred_region
        %s117 = ssub.s32 %s14, 1
        // Predicated region
        $region13: #{tpu_custom_call.1} parent=11 // pred_check
          %p118 = pneg %p75
        $region14: #{tpu_custom_call.1} parent=11 // pred_check_branch
          %120 = sbr.rel (%p118) target = $region16
        $region15: #{tpu_custom_call.1} parent=11 // pred_region
          _
        $region16: #{tpu_custom_call.1} parent=11 // pred_fallthru
          _
      $region12: #{tpu_custom_call.1} parent=5 // pred_fallthru
        _
      %p121 = scmp.lt.s32.totalorder %s14, 4
      // Predicated region
      $region17: #{tpu_custom_call.1} parent=5 // pred_check
        %p122 = pneg %p121
      $region18: #{tpu_custom_call.1} parent=5 // pred_check_branch
        %124 = sbr.rel (%p122) target = $region20
      $region19: #{tpu_custom_call.1} parent=5 // pred_region
        // Predicated region
        $region21: #{tpu_custom_call.1} parent=19 // pred_check
          %p125 = pneg %p48
        $region22: #{tpu_custom_call.1} parent=19 // pred_check_branch
          %127 = sbr.rel (%p125) target = $region24
        $region23: #{tpu_custom_call.1} parent=19 // pred_region
          %s128 = sand.u32 %s38, 1
          %s129 = scalar_lea.sflag [#allocation4], %s128
          %s130 = sand.u32 %s38, 1
          %s131 = smul.addr %s130, 1600
          %s132 = scalar_lea.vmem [#allocation3], %s131
          %s133 = smul.u32 4, %s22
          %s135 = ssub.s32 25600, 25600
          %136 = vsyncadd %s129, %s135
          %s137 = smul.addr %s133, 50
          %s138 = smul.addr %s21, 400
          %s139 = sadd.s32 %s137, %s138
          %s140 = smul.addr %s139, 128
          %s141 = scalar_lea.hbm %s0, %s140
          %s142 = sshll.u32 %s132, 4
          %s143 = int_to_ptr.vmem [resolvable:$true] %s142
          %148 = dma.hbm_to_vmem [thread:$0]  %s141, 25600, %s143, %s129, 640, 640, 40
        $region24: #{tpu_custom_call.1} parent=19 // pred_fallthru
          _
      $region20: #{tpu_custom_call.1} parent=5 // pred_fallthru
        _
      %p149 = scmp.le.s32.totalorder 1, %s14
      %p150 = scmp.lt.s32.totalorder %s14, 5
      %p151 = pnand %p149, %p150
      %p152 = pneg %p151
      // Predicated region
      $region25: #{tpu_custom_call.1} parent=5 // pred_check
        _
      $region26: #{tpu_custom_call.1} parent=5 // pred_check_branch
        %154 = sbr.rel (%p151) target = $region28
      $region27: #{tpu_custom_call.1} parent=5 // pred_region
        %s155 = ssub.s32 %s14, 1
        %s156 = sand.u32 %s41, 1
        %s157 = scalar_lea.sflag [#allocation4], %s156
        %s158 = sand.u32 %s41, 1
        %s159 = smul.addr %s158, 1600
        %s160 = scalar_lea.vmem [#allocation3], %s159
        // Predicated region
        $region29: #{tpu_custom_call.1} parent=27 // pred_check
          %p161 = pneg %p54
        $region30: #{tpu_custom_call.1} parent=27 // pred_check_branch
          %163 = sbr.rel (%p161) target = $region32
        $region31: #{tpu_custom_call.1} parent=27 // pred_region
          %164 = dma.done %s157, 25600
        $region32: #{tpu_custom_call.1} parent=27 // pred_fallthru
          _
        %s165 = sand.u32 %s41, 1
        %s166 = scalar_lea.sflag [#allocation4], %s165
        %s167 = sand.u32 %s41, 1
        %s168 = smul.addr %s167, 1600
        %s169 = scalar_lea.vmem [#allocation3], %s168
        %p170 = pneg %p54
        %p171 = pneg %p51
        %p172 = pneg %p75
        %p173 = pneg %p72
        %p174 = pneg %p103
        %p175 = pneg %p100
        %s176 = sand.u32 %s90, 1
        %s177 = scalar_lea.sflag [#allocation5], %s176
        %s178 = sand.u32 %s90, 1
        %s179 = smul.addr %s178, 256
        %s180 = scalar_lea.vmem [#allocation6], %s179
        %s181 = smul.u32 4, %s24
        %s182 = smul.u32 4, %s24
        %v183 = vld [vmem:[%s160] sm:$0xff]
        %v184 = vld [vmem:[%s160 + $0x8] sm:$0xff]
        %v185 = vld [vmem:[%s160 + $0x10] sm:$0xff]
        %v186 = vld [vmem:[%s160 + $0x18] sm:$0xff]
        %v187 = vld [vmem:[%s160 + $0x20] sm:$0xff]
        %v188 = vld [vmem:[%s160 + $0x28] sm:$0xff]
        %v189 = vld [vmem:[%s160 + $0x30] sm:$0xff]
        %v190 = vld [vmem:[%s160 + $0x38] sm:$0xff]
        %v191 = vld [vmem:[%s160 + $0x40] sm:$0xff]
        %v192 = vld [vmem:[%s160 + $0x48] sm:$0xff]
        %v193 = vld [vmem:[%s160 + $0x50] sm:$0xff]
        %v194 = vld [vmem:[%s160 + $0x58] sm:$0xff]
        %v195 = vld [vmem:[%s160 + $0x60] sm:$0xff]
        %v196 = vld [vmem:[%s160 + $0x68] sm:$0xff]
        %v197 = vld [vmem:[%s160 + $0x70] sm:$0xff]
        %v198 = vld [vmem:[%s160 + $0x78] sm:$0xff]
        %v199 = vld [vmem:[%s160 + $0x80] sm:$0xff]
        %v200 = vld [vmem:[%s160 + $0x88] sm:$0xff]
        %v201 = vld [vmem:[%s160 + $0x90] sm:$0xff]
        %v202 = vld [vmem:[%s160 + $0x98] sm:$0xff]
        %v203 = vld [vmem:[%s160 + $0xa0] sm:$0xff]
        %v204 = vld [vmem:[%s160 + $0xa8] sm:$0xff]
        %v205 = vld [vmem:[%s160 + $0xb0] sm:$0xff]
        %v206 = vld [vmem:[%s160 + $0xb8] sm:$0xff]
        %v207 = vld [vmem:[%s160 + $0xc0] sm:$0xff]
        %v208 = vld [vmem:[%s160 + $0xc8] sm:$0xff]
        %v209 = vld [vmem:[%s160 + $0xd0] sm:$0xff]
        %v210 = vld [vmem:[%s160 + $0xd8] sm:$0xff]
        %v211 = vld [vmem:[%s160 + $0xe0] sm:$0xff]
        %v212 = vld [vmem:[%s160 + $0xe8] sm:$0xff]
        %v213 = vld [vmem:[%s160 + $0xf0] sm:$0xff]
        %v214 = vld [vmem:[%s160 + $0xf8] sm:$0xff]
        %v215 = vld [vmem:[%s160 + $0x100] sm:$0xff]
        %v216 = vld [vmem:[%s160 + $0x108] sm:$0xff]
        %v217 = vld [vmem:[%s160 + $0x110] sm:$0xff]
        %v218 = vld [vmem:[%s160 + $0x118] sm:$0xff]
        %v219 = vld [vmem:[%s160 + $0x120] sm:$0xff]
        %v220 = vld [vmem:[%s160 + $0x128] sm:$0xff]
        %v221 = vld [vmem:[%s160 + $0x130] sm:$0xff]
        %v222 = vld [vmem:[%s160 + $0x138] sm:$0xff]
        %v223 = vld [vmem:[%s160 + $0x190] sm:$0xff]
        %v224 = vld [vmem:[%s160 + $0x198] sm:$0xff]
        %v225 = vld [vmem:[%s160 + $0x1a0] sm:$0xff]
        %v226 = vld [vmem:[%s160 + $0x1a8] sm:$0xff]
        %v227 = vld [vmem:[%s160 + $0x1b0] sm:$0xff]
        %v228 = vld [vmem:[%s160 + $0x1b8] sm:$0xff]
        %v229 = vld [vmem:[%s160 + $0x1c0] sm:$0xff]
        %v230 = vld [vmem:[%s160 + $0x1c8] sm:$0xff]
        %v231 = vld [vmem:[%s160 + $0x1d0] sm:$0xff]
        %v232 = vld [vmem:[%s160 + $0x1d8] sm:$0xff]
        %v233 = vld [vmem:[%s160 + $0x1e0] sm:$0xff]
        %v234 = vld [vmem:[%s160 + $0x1e8] sm:$0xff]
        %v235 = vld [vmem:[%s160 + $0x1f0] sm:$0xff]
        %v236 = vld [vmem:[%s160 + $0x1f8] sm:$0xff]
        %v237 = vld [vmem:[%s160 + $0x200] sm:$0xff]
        %v238 = vld [vmem:[%s160 + $0x208] sm:$0xff]
        %v239 = vld [vmem:[%s160 + $0x210] sm:$0xff]
        %v240 = vld [vmem:[%s160 + $0x218] sm:$0xff]
        %v241 = vld [vmem:[%s160 + $0x220] sm:$0xff]
        %v242 = vld [vmem:[%s160 + $0x228] sm:$0xff]
        %v243 = vld [vmem:[%s160 + $0x230] sm:$0xff]
        %v244 = vld [vmem:[%s160 + $0x238] sm:$0xff]
        %v245 = vld [vmem:[%s160 + $0x240] sm:$0xff]
        %v246 = vld [vmem:[%s160 + $0x248] sm:$0xff]
        %v247 = vld [vmem:[%s160 + $0x250] sm:$0xff]
        %v248 = vld [vmem:[%s160 + $0x258] sm:$0xff]
        %v249 = vld [vmem:[%s160 + $0x260] sm:$0xff]
        %v250 = vld [vmem:[%s160 + $0x268] sm:$0xff]
        %v251 = vld [vmem:[%s160 + $0x270] sm:$0xff]
        %v252 = vld [vmem:[%s160 + $0x278] sm:$0xff]
        %v253 = vld [vmem:[%s160 + $0x280] sm:$0xff]
        %v254 = vld [vmem:[%s160 + $0x288] sm:$0xff]
        %v255 = vld [vmem:[%s160 + $0x290] sm:$0xff]
        %v256 = vld [vmem:[%s160 + $0x298] sm:$0xff]
        %v257 = vld [vmem:[%s160 + $0x2a0] sm:$0xff]
        %v258 = vld [vmem:[%s160 + $0x2a8] sm:$0xff]
        %v259 = vld [vmem:[%s160 + $0x2b0] sm:$0xff]
        %v260 = vld [vmem:[%s160 + $0x2b8] sm:$0xff]
        %v261 = vld [vmem:[%s160 + $0x2c0] sm:$0xff]
        %v262 = vld [vmem:[%s160 + $0x2c8] sm:$0xff]
        %v263 = vld [vmem:[%s160 + $0x320] sm:$0xff]
        %v264 = vld [vmem:[%s160 + $0x328] sm:$0xff]
        %v265 = vld [vmem:[%s160 + $0x330] sm:$0xff]
        %v266 = vld [vmem:[%s160 + $0x338] sm:$0xff]
        %v267 = vld [vmem:[%s160 + $0x340] sm:$0xff]
        %v268 = vld [vmem:[%s160 + $0x348] sm:$0xff]
        %v269 = vld [vmem:[%s160 + $0x350] sm:$0xff]
        %v270 = vld [vmem:[%s160 + $0x358] sm:$0xff]
        %v271 = vld [vmem:[%s160 + $0x360] sm:$0xff]
        %v272 = vld [vmem:[%s160 + $0x368] sm:$0xff]
        %v273 = vld [vmem:[%s160 + $0x370] sm:$0xff]
        %v274 = vld [vmem:[%s160 + $0x378] sm:$0xff]
        %v275 = vld [vmem:[%s160 + $0x380] sm:$0xff]
        %v276 = vld [vmem:[%s160 + $0x388] sm:$0xff]
        %v277 = vld [vmem:[%s160 + $0x390] sm:$0xff]
        %v278 = vld [vmem:[%s160 + $0x398] sm:$0xff]
        %v279 = vld [vmem:[%s160 + $0x3a0] sm:$0xff]
        %v280 = vld [vmem:[%s160 + $0x3a8] sm:$0xff]
        %v281 = vld [vmem:[%s160 + $0x3b0] sm:$0xff]
        %v282 = vld [vmem:[%s160 + $0x3b8] sm:$0xff]
        %v283 = vld [vmem:[%s160 + $0x3c0] sm:$0xff]
        %v284 = vld [vmem:[%s160 + $0x3c8] sm:$0xff]
        %v285 = vld [vmem:[%s160 + $0x3d0] sm:$0xff]
        %v286 = vld [vmem:[%s160 + $0x3d8] sm:$0xff]
        %v287 = vld [vmem:[%s160 + $0x3e0] sm:$0xff]
        %v288 = vld [vmem:[%s160 + $0x3e8] sm:$0xff]
        %v289 = vld [vmem:[%s160 + $0x3f0] sm:$0xff]
        %v290 = vld [vmem:[%s160 + $0x3f8] sm:$0xff]
        %v291 = vld [vmem:[%s160 + $0x400] sm:$0xff]
        %v292 = vld [vmem:[%s160 + $0x408] sm:$0xff]
        %v293 = vld [vmem:[%s160 + $0x410] sm:$0xff]
        %v294 = vld [vmem:[%s160 + $0x418] sm:$0xff]
        %v295 = vld [vmem:[%s160 + $0x420] sm:$0xff]
        %v296 = vld [vmem:[%s160 + $0x428] sm:$0xff]
        %v297 = vld [vmem:[%s160 + $0x430] sm:$0xff]
        %v298 = vld [vmem:[%s160 + $0x438] sm:$0xff]
        %v299 = vld [vmem:[%s160 + $0x440] sm:$0xff]
        %v300 = vld [vmem:[%s160 + $0x448] sm:$0xff]
        %v301 = vld [vmem:[%s160 + $0x450] sm:$0xff]
        %v302 = vld [vmem:[%s160 + $0x458] sm:$0xff]
        %v303 = vld [vmem:[%s160 + $0x4b0] sm:$0xff]
        %v304 = vld [vmem:[%s160 + $0x4b8] sm:$0xff]
        %v305 = vld [vmem:[%s160 + $0x4c0] sm:$0xff]
        %v306 = vld [vmem:[%s160 + $0x4c8] sm:$0xff]
        %v307 = vld [vmem:[%s160 + $0x4d0] sm:$0xff]
        %v308 = vld [vmem:[%s160 + $0x4d8] sm:$0xff]
        %v309 = vld [vmem:[%s160 + $0x4e0] sm:$0xff]
        %v310 = vld [vmem:[%s160 + $0x4e8] sm:$0xff]
        %v311 = vld [vmem:[%s160 + $0x4f0] sm:$0xff]
        %v312 = vld [vmem:[%s160 + $0x4f8] sm:$0xff]
        %v313 = vld [vmem:[%s160 + $0x500] sm:$0xff]
        %v314 = vld [vmem:[%s160 + $0x508] sm:$0xff]
        %v315 = vld [vmem:[%s160 + $0x510] sm:$0xff]
        %v316 = vld [vmem:[%s160 + $0x518] sm:$0xff]
        %v317 = vld [vmem:[%s160 + $0x520] sm:$0xff]
        %v318 = vld [vmem:[%s160 + $0x528] sm:$0xff]
        %v319 = vld [vmem:[%s160 + $0x530] sm:$0xff]
        %v320 = vld [vmem:[%s160 + $0x538] sm:$0xff]
        %v321 = vld [vmem:[%s160 + $0x540] sm:$0xff]
        %v322 = vld [vmem:[%s160 + $0x548] sm:$0xff]
        %v323 = vld [vmem:[%s160 + $0x550] sm:$0xff]
        %v324 = vld [vmem:[%s160 + $0x558] sm:$0xff]
        %v325 = vld [vmem:[%s160 + $0x560] sm:$0xff]
        %v326 = vld [vmem:[%s160 + $0x568] sm:$0xff]
        %v327 = vld [vmem:[%s160 + $0x570] sm:$0xff]
        %v328 = vld [vmem:[%s160 + $0x578] sm:$0xff]
        %v329 = vld [vmem:[%s160 + $0x580] sm:$0xff]
        %v330 = vld [vmem:[%s160 + $0x588] sm:$0xff]
        %v331 = vld [vmem:[%s160 + $0x590] sm:$0xff]
        %v332 = vld [vmem:[%s160 + $0x598] sm:$0xff]
        %v333 = vld [vmem:[%s160 + $0x5a0] sm:$0xff]
        %v334 = vld [vmem:[%s160 + $0x5a8] sm:$0xff]
        %v335 = vld [vmem:[%s160 + $0x5b0] sm:$0xff]
        %v336 = vld [vmem:[%s160 + $0x5b8] sm:$0xff]
        %v337 = vld [vmem:[%s160 + $0x5c0] sm:$0xff]
        %v338 = vld [vmem:[%s160 + $0x5c8] sm:$0xff]
        %v339 = vld [vmem:[%s160 + $0x5d0] sm:$0xff]
        %v340 = vld [vmem:[%s160 + $0x5d8] sm:$0xff]
        %v341 = vld [vmem:[%s160 + $0x5e0] sm:$0xff]
        %v342 = vld [vmem:[%s160 + $0x5e8] sm:$0xff]
        %v343 = vld [vmem:[%s1] sm:$0xff]
        %v344 = vld [vmem:[%s1 + $0x8] sm:$0xff]
        %v345 = vld [vmem:[%s1 + $0x10] sm:$0xff]
        %v346 = vld [vmem:[%s1 + $0x18] sm:$0xff]
        %v347 = vld [vmem:[%s1 + $0x20] sm:$0xff]
        %v348 = vld [vmem:[%s1 + $0x28] sm:$0xff]
        %v349 = vld [vmem:[%s1 + $0x30] sm:$0xff]
        %v350 = vld [vmem:[%s1 + $0x38] sm:$0xff]
        %v351 = vld [vmem:[%s1 + $0x40] sm:$0xff]
        %v352 = vld [vmem:[%s1 + $0x48] sm:$0xff]
        %v353 = vld [vmem:[%s1 + $0x50] sm:$0xff]
        %v354 = vld [vmem:[%s1 + $0x58] sm:$0xff]
        %v355 = vld [vmem:[%s1 + $0x60] sm:$0xff]
        %v356 = vld [vmem:[%s1 + $0x68] sm:$0xff]
        %v357 = vld [vmem:[%s1 + $0x70] sm:$0xff]
        %v358 = vld [vmem:[%s1 + $0x78] sm:$0xff]
        %v359 = vld [vmem:[%s1 + $0x80] sm:$0xff]
        %v360 = vld [vmem:[%s1 + $0x88] sm:$0xff]
        %v361 = vld [vmem:[%s1 + $0x90] sm:$0xff]
        %v362 = vld [vmem:[%s1 + $0x98] sm:$0xff]
        %v363 = vld [vmem:[%s1 + $0xa0] sm:$0xff]
        %v364 = vld [vmem:[%s1 + $0xa8] sm:$0xff]
        %v365 = vld [vmem:[%s1 + $0xb0] sm:$0xff]
        %v366 = vld [vmem:[%s1 + $0xb8] sm:$0xff]
        %v367 = vld [vmem:[%s1 + $0xc0] sm:$0xff]
        %v368 = vld [vmem:[%s1 + $0xc8] sm:$0xff]
        %v369 = vld [vmem:[%s1 + $0xd0] sm:$0xff]
        %v370 = vld [vmem:[%s1 + $0xd8] sm:$0xff]
        %v371 = vld [vmem:[%s1 + $0xe0] sm:$0xff]
        %v372 = vld [vmem:[%s1 + $0xe8] sm:$0xff]
        %v373 = vld [vmem:[%s1 + $0xf0] sm:$0xff]
        %v374 = vld [vmem:[%s1 + $0xf8] sm:$0xff]
        %v375 = vld [vmem:[%s1 + $0x100] sm:$0xff]
        %v376 = vld [vmem:[%s1 + $0x108] sm:$0xff]
        %v377 = vld [vmem:[%s1 + $0x110] sm:$0xff]
        %v378 = vld [vmem:[%s1 + $0x118] sm:$0xff]
        %v379 = vld [vmem:[%s1 + $0x120] sm:$0xff]
        %v380 = vld [vmem:[%s1 + $0x128] sm:$0xff]
        %v381 = vld [vmem:[%s1 + $0x130] sm:$0xff]
        %v382 = vld [vmem:[%s1 + $0x138] sm:$0xff]
        %v383 = vld [vmem:[%s1 + $0x140] sm:$0xff]
        %v384 = vld [vmem:[%s1 + $0x148] sm:$0xff]
        %v385 = vld [vmem:[%s1 + $0x150] sm:$0xff]
        %v386 = vld [vmem:[%s1 + $0x158] sm:$0xff]
        %v387 = vld [vmem:[%s1 + $0x160] sm:$0xff]
        %v388 = vld [vmem:[%s1 + $0x168] sm:$0xff]
        %v389 = vld [vmem:[%s1 + $0x170] sm:$0xff]
        %v390 = vld [vmem:[%s1 + $0x178] sm:$0xff]
        %v391 = vld [vmem:[%s1 + $0x180] sm:$0xff]
        %v392 = vld [vmem:[%s1 + $0x188] sm:$0xff]
        %v393 = vld [vmem:[%s1 + $0x190] sm:$0xff]
        %v394 = vld [vmem:[%s1 + $0x198] sm:$0xff]
        %v395 = vld [vmem:[%s1 + $0x1a0] sm:$0xff]
        %v396 = vld [vmem:[%s1 + $0x1a8] sm:$0xff]
        %v397 = vld [vmem:[%s1 + $0x1b0] sm:$0xff]
        %v398 = vld [vmem:[%s1 + $0x1b8] sm:$0xff]
        %v399 = vld [vmem:[%s1 + $0x1c0] sm:$0xff]
        %v400 = vld [vmem:[%s1 + $0x1c8] sm:$0xff]
        %v401 = vld [vmem:[%s1 + $0x1d0] sm:$0xff]
        %v402 = vld [vmem:[%s1 + $0x1d8] sm:$0xff]
        %v403 = vld [vmem:[%s1 + $0x1e0] sm:$0xff]
        %v404 = vld [vmem:[%s1 + $0x1e8] sm:$0xff]
        %v405 = vld [vmem:[%s1 + $0x1f0] sm:$0xff]
        %v406 = vld [vmem:[%s1 + $0x1f8] sm:$0xff]
        %v407 = vld [vmem:[%s1 + $0x200] sm:$0xff]
        %v408 = vld [vmem:[%s1 + $0x208] sm:$0xff]
        %v409 = vld [vmem:[%s1 + $0x210] sm:$0xff]
        %v410 = vld [vmem:[%s1 + $0x218] sm:$0xff]
        %v411 = vld [vmem:[%s1 + $0x220] sm:$0xff]
        %v412 = vld [vmem:[%s1 + $0x228] sm:$0xff]
        %v413 = vld [vmem:[%s1 + $0x230] sm:$0xff]
        %v414 = vld [vmem:[%s1 + $0x238] sm:$0xff]
        %vm415 = vcmask 523264
        %v417 = vsel %vm415, %v187, 0
        %v420 = vsel %vm415, %v192, 0
        %v423 = vsel %vm415, %v197, 0
        %v426 = vsel %vm415, %v202, 0
        %v429 = vsel %vm415, %v207, 0
        %v432 = vsel %vm415, %v212, 0
        %v435 = vsel %vm415, %v217, 0
        %v438 = vsel %vm415, %v222, 0
        %v441 = vsel %vm415, %v227, 0
        %v444 = vsel %vm415, %v232, 0
        %v447 = vsel %vm415, %v237, 0
        %v450 = vsel %vm415, %v242, 0
        %v453 = vsel %vm415, %v247, 0
        %v456 = vsel %vm415, %v252, 0
        %v459 = vsel %vm415, %v257, 0
        %v462 = vsel %vm415, %v262, 0
        %v465 = vsel %vm415, %v267, 0
        %v468 = vsel %vm415, %v272, 0
        %v471 = vsel %vm415, %v277, 0
        %v474 = vsel %vm415, %v282, 0
        %v477 = vsel %vm415, %v287, 0
        %v480 = vsel %vm415, %v292, 0
        %v483 = vsel %vm415, %v297, 0
        %v486 = vsel %vm415, %v302, 0
        %v489 = vsel %vm415, %v307, 0
        %v492 = vsel %vm415, %v312, 0
        %v495 = vsel %vm415, %v317, 0
        %v498 = vsel %vm415, %v322, 0
        %v501 = vsel %vm415, %v327, 0
        %v504 = vsel %vm415, %v332, 0
        %v507 = vsel %vm415, %v337, 0
        %v510 = vsel %vm415, %v342, 0
        %512 = vmatprep.subr.mxu0 0.0
        %513 = vmatpush1.msra.mxu0 %v343
        %514 = vmatprep.subr.mxu0 0.0
        %515 = vmatpush1.msra.mxu0 %v344
        %516 = vmatprep.subr.mxu0 0.0
        %517 = vmatpush1.msra.mxu0 %v345
        %518 = vmatprep.subr.mxu0 0.0
        %519 = vmatpush1.msra.mxu0 %v346
        %520 = vmatprep.subr.mxu0 0.0
        %521 = vmatpush1.msra.mxu0 %v347
        %522 = vmatprep.subr.mxu0 0.0
        %523 = vmatpush1.msra.mxu0 %v348
        %524 = vmatprep.subr.mxu0 0.0
        %525 = vmatpush1.msra.mxu0 %v349
        %526 = vmatprep.subr.mxu0 0.0
        %527 = vmatpush1.msra.mxu0 %v350
        %528 = vmatprep.subr.mxu0 0.0
        %529 = vmatpush1.msra.mxu0 %v351
        %530 = vmatprep.subr.mxu0 0.0
        %531 = vmatpush1.msra.mxu0 %v352
        %532 = vmatprep.subr.mxu0 0.0
        %533 = vmatpush1.msra.mxu0 %v353
        %534 = vmatprep.subr.mxu0 0.0
        %535 = vmatpush1.msra.mxu0 %v354
        %536 = vmatprep.subr.mxu0 0.0
        %537 = vmatpush1.msra.mxu0 %v355
        %538 = vmatprep.subr.mxu0 0.0
        %539 = vmatpush1.msra.mxu0 %v356
        %540 = vmatprep.subr.mxu0 0.0
        %541 = vmatpush1.msra.mxu0 %v357
        %542 = vmatprep.subr.mxu0 0.0
        %543 = vmatpush1.msra.mxu0 %v358
        %544 = vmatprep.subr.mxu0 0.0
        %545 = vmatpush1.msra.mxu0 %v359
        %546 = vmatprep.subr.mxu0 0.0
        %547 = vmatpush1.msra.mxu0 %v360
        %548 = vmatprep.subr.mxu0 0.0
        %549 = vmatpush1.msra.mxu0 %v361
        %550 = vmatprep.subr.mxu0 0.0
        %551 = vmatpush1.msra.mxu0 %v362
        %552 = vmatprep.subr.mxu0 0.0
        %553 = vmatpush1.msra.mxu0 %v363
        %554 = vmatprep.subr.mxu0 0.0
        %555 = vmatpush1.msra.mxu0 %v364
        %556 = vmatprep.subr.mxu0 0.0
        %557 = vmatpush1.msra.mxu0 %v365
        %558 = vmatprep.subr.mxu0 0.0
        %559 = vmatpush1.msra.mxu0 %v366
        %560 = vmatprep.subr.mxu0 0.0
        %561 = vmatpush1.msra.mxu0 %v367
        %562 = vmatprep.subr.mxu0 0.0
        %563 = vmatpush1.msra.mxu0 %v368
        %564 = vmatprep.subr.mxu0 0.0
        %565 = vmatpush1.msra.mxu0 %v369
        %566 = vmatprep.subr.mxu0 0.0
        %567 = vmatpush1.msra.mxu0 %v370
        %568 = vmatprep.subr.mxu0 0.0
        %569 = vmatpush1.msra.mxu0 %v371
        %570 = vmatprep.subr.mxu0 0.0
        %571 = vmatpush1.msra.mxu0 %v372
        %572 = vmatprep.subr.mxu0 0.0
        %573 = vmatpush1.msra.mxu0 %v373
        %574 = vmatprep.subr.mxu0 0.0
        %575 = vmatpush1.msra.mxu0 %v374
        %576 = vmatprep.mubr.f32.mxu0 %v184
        %577 = vmatmul.mubr.f32.gmra.mrb[0].mxu0 %v183
        %v578 = vpop.f32.mrb[0].mxu0
        %v579 = vadd.f32 0.0, %v578
        %v580 = vpop.f32.mrb[0].mxu0
        %581 = vmatprep.mubr.f32.mxu0 %v189
        %582 = vmatmul.mubr.f32.gmra.mrb[0].mxu0 %v188
        %v583 = vpop.f32.mrb[0].mxu0
        %v584 = vadd.f32 0.0, %v583
        %v585 = vpop.f32.mrb[0].mxu0
        %586 = vmatprep.mubr.f32.mxu0 %v194
        %587 = vmatmul.mubr.f32.gmra.mrb[0].mxu0 %v193
        %v588 = vpop.f32.mrb[0].mxu0
        %v589 = vadd.f32 0.0, %v588
        %v590 = vpop.f32.mrb[0].mxu0
        %591 = vmatprep.mubr.f32.mxu0 %v199
        %592 = vmatmul.mubr.f32.gmra.mrb[0].mxu0 %v198
        %v593 = vpop.f32.mrb[0].mxu0
        %v594 = vadd.f32 0.0, %v593
        %v595 = vpop.f32.mrb[0].mxu0
        %596 = vmatprep.mubr.f32.mxu0 %v204
        %597 = vmatmul.mubr.f32.gmra.mrb[0].mxu0 %v203
        %v598 = vpop.f32.mrb[0].mxu0
        %v599 = vadd.f32 0.0, %v598
        %v600 = vpop.f32.mrb[0].mxu0
        %601 = vmatprep.mubr.f32.mxu0 %v209
        %602 = vmatmul.mubr.f32.gmra.mrb[0].mxu0 %v208
        %v603 = vpop.f32.mrb[0].mxu0
        %v604 = vadd.f32 0.0, %v603
        %v605 = vpop.f32.mrb[0].mxu0
        %606 = vmatprep.mubr.f32.mxu0 %v214
        %607 = vmatmul.mubr.f32.gmra.mrb[0].mxu0 %v213
        %v608 = vpop.f32.mrb[0].mxu0
        %v609 = vadd.f32 0.0, %v608
        %v610 = vpop.f32.mrb[0].mxu0
        %611 = vmatprep.mubr.f32.mxu0 %v219
        %612 = vmatmul.mubr.f32.gmra.mrb[0].mxu0 %v218
        %v613 = vpop.f32.mrb[0].mxu0
        %v614 = vadd.f32 0.0, %v613
        %v615 = vpop.f32.mrb[0].mxu0
        %616 = vmatprep.mubr.f32.mxu0 %v224
        %617 = vmatmul.mubr.f32.gmra.mrb[0].mxu0 %v223
        %v618 = vpop.f32.mrb[0].mxu0
        %v619 = vadd.f32 0.0, %v618
        %v620 = vpop.f32.mrb[0].mxu0
        %621 = vmatprep.mubr.f32.mxu0 %v229
        %622 = vmatmul.mubr.f32.gmra.mrb[0].mxu0 %v228
        %v623 = vpop.f32.mrb[0].mxu0
        %v624 = vadd.f32 0.0, %v623
        %v625 = vpop.f32.mrb[0].mxu0
        %626 = vmatprep.mubr.f32.mxu0 %v234
        %627 = vmatmul.mubr.f32.gmra.mrb[0].mxu0 %v233
        %v628 = vpop.f32.mrb[0].mxu0
        %v629 = vadd.f32 0.0, %v628
        %v630 = vpop.f32.mrb[0].mxu0
        %631 = vmatprep.mubr.f32.mxu0 %v239
        %632 = vmatmul.mubr.f32.gmra.mrb[0].mxu0 %v238
        %v633 = vpop.f32.mrb[0].mxu0
        %v634 = vadd.f32 0.0, %v633
        %v635 = vpop.f32.mrb[0].mxu0
        %636 = vmatprep.mubr.f32.mxu0 %v244
        %637 = vmatmul.mubr.f32.gmra.mrb[0].mxu0 %v243
        %v638 = vpop.f32.mrb[0].mxu0
        %v639 = vadd.f32 0.0, %v638
        %v640 = vpop.f32.mrb[0].mxu0
        %641 = vmatprep.mubr.f32.mxu0 %v249
        %642 = vmatmul.mubr.f32.gmra.mrb[0].mxu0 %v248
        %v643 = vpop.f32.mrb[0].mxu0
        %v644 = vadd.f32 0.0, %v643
        %v645 = vpop.f32.mrb[0].mxu0
        %646 = vmatprep.mubr.f32.mxu0 %v254
        %647 = vmatmul.mubr.f32.gmra.mrb[0].mxu0 %v253
        %v648 = vpop.f32.mrb[0].mxu0
        %v649 = vadd.f32 0.0, %v648
        %v650 = vpop.f32.mrb[0].mxu0
        %651 = vmatprep.mubr.f32.mxu0 %v259
        %652 = vmatmul.mubr.f32.gmra.mrb[0].mxu0 %v258
        %v653 = vpop.f32.mrb[0].mxu0
        %v654 = vadd.f32 0.0, %v653
        %v655 = vpop.f32.mrb[0].mxu0
        %656 = vmatprep.mubr.f32.mxu0 %v264
        %657 = vmatmul.mubr.f32.gmra.mrb[0].mxu0 %v263
        %v658 = vpop.f32.mrb[0].mxu0
        %v659 = vadd.f32 0.0, %v658
        %v660 = vpop.f32.mrb[0].mxu0
        %661 = vmatprep.mubr.f32.mxu0 %v269
        %662 = vmatmul.mubr.f32.gmra.mrb[0].mxu0 %v268
        %v663 = vpop.f32.mrb[0].mxu0
        %v664 = vadd.f32 0.0, %v663
        %v665 = vpop.f32.mrb[0].mxu0
        %666 = vmatprep.mubr.f32.mxu0 %v274
        %667 = vmatmul.mubr.f32.gmra.mrb[0].mxu0 %v273
        %v668 = vpop.f32.mrb[0].mxu0
        %v669 = vadd.f32 0.0, %v668
        %v670 = vpop.f32.mrb[0].mxu0
        %671 = vmatprep.mubr.f32.mxu0 %v279
        %672 = vmatmul.mubr.f32.gmra.mrb[0].mxu0 %v278
        %v673 = vpop.f32.mrb[0].mxu0
        %v674 = vadd.f32 0.0, %v673
        %v675 = vpop.f32.mrb[0].mxu0
        %676 = vmatprep.mubr.f32.mxu0 %v284
        %677 = vmatmul.mubr.f32.gmra.mrb[0].mxu0 %v283
        %v678 = vpop.f32.mrb[0].mxu0
        %v679 = vadd.f32 0.0, %v678
        %v680 = vpop.f32.mrb[0].mxu0
        %681 = vmatprep.mubr.f32.mxu0 %v289
        %682 = vmatmul.mubr.f32.gmra.mrb[0].mxu0 %v288
        %v683 = vpop.f32.mrb[0].mxu0
        %v684 = vadd.f32 0.0, %v683
        %v685 = vpop.f32.mrb[0].mxu0
        %686 = vmatprep.mubr.f32.mxu0 %v294
        %687 = vmatmul.mubr.f32.gmra.mrb[0].mxu0 %v293
        %v688 = vpop.f32.mrb[0].mxu0
        %v689 = vadd.f32 0.0, %v688
        %v690 = vpop.f32.mrb[0].mxu0
        %691 = vmatprep.mubr.f32.mxu0 %v299
        %692 = vmatmul.mubr.f32.gmra.mrb[0].mxu0 %v298
        %v693 = vpop.f32.mrb[0].mxu0
        %v694 = vadd.f32 0.0, %v693
        %v695 = vpop.f32.mrb[0].mxu0
        %696 = vmatprep.mubr.f32.mxu0 %v304
        %697 = vmatmul.mubr.f32.gmra.mrb[0].mxu0 %v303
        %v698 = vpop.f32.mrb[0].mxu0
        %v699 = vadd.f32 0.0, %v698
        %v700 = vpop.f32.mrb[0].mxu0
        %701 = vmatprep.mubr.f32.mxu0 %v309
        %702 = vmatmul.mubr.f32.gmra.mrb[0].mxu0 %v308
        %v703 = vpop.f32.mrb[0].mxu0
        %v704 = vadd.f32 0.0, %v703
        %v705 = vpop.f32.mrb[0].mxu0
        %706 = vmatprep.mubr.f32.mxu0 %v314
        %707 = vmatmul.mubr.f32.gmra.mrb[0].mxu0 %v313
        %v708 = vpop.f32.mrb[0].mxu0
        %v709 = vadd.f32 0.0, %v708
        %v710 = vpop.f32.mrb[0].mxu0
        %711 = vmatprep.mubr.f32.mxu0 %v319
        %712 = vmatmul.mubr.f32.gmra.mrb[0].mxu0 %v318
        %v713 = vpop.f32.mrb[0].mxu0
        %v714 = vadd.f32 0.0, %v713
        %v715 = vpop.f32.mrb[0].mxu0
        %716 = vmatprep.mubr.f32.mxu0 %v324
        %717 = vmatmul.mubr.f32.gmra.mrb[0].mxu0 %v323
        %v718 = vpop.f32.mrb[0].mxu0
        %v719 = vadd.f32 0.0, %v718
        %v720 = vpop.f32.mrb[0].mxu0
        %721 = vmatprep.mubr.f32.mxu0 %v329
        %722 = vmatmul.mubr.f32.gmra.mrb[0].mxu0 %v328
        %v723 = vpop.f32.mrb[0].mxu0
        %v724 = vadd.f32 0.0, %v723
        %v725 = vpop.f32.mrb[0].mxu0
        %726 = vmatprep.mubr.f32.mxu0 %v334
        %727 = vmatmul.mubr.f32.gmra.mrb[0].mxu0 %v333
        %v728 = vpop.f32.mrb[0].mxu0
        %v729 = vadd.f32 0.0, %v728
        %v730 = vpop.f32.mrb[0].mxu0
        %731 = vmatprep.mubr.f32.mxu0 %v339
        %732 = vmatmul.mubr.f32.gmra.mrb[0].mxu0 %v338
        %v733 = vpop.f32.mrb[0].mxu0
        %v734 = vadd.f32 0.0, %v733
        %v735 = vpop.f32.mrb[0].mxu0
        %736 = vdwg.mxu0
        %737 = vmatprep.subr.mxu0 0.0
        %738 = vmatpush1.msra.mxu0 %v375
        %739 = vmatprep.subr.mxu0 0.0
        %740 = vmatpush1.msra.mxu0 %v376
        %741 = vmatprep.subr.mxu0 0.0
        %742 = vmatpush1.msra.mxu0 %v377
        %743 = vmatprep.subr.mxu0 0.0
        %744 = vmatpush1.msra.mxu0 %v378
        %745 = vmatprep.subr.mxu0 0.0
        %746 = vmatpush1.msra.mxu0 %v379
        %747 = vmatprep.subr.mxu0 0.0
        %748 = vmatpush1.msra.mxu0 %v380
        %749 = vmatprep.subr.mxu0 0.0
        %750 = vmatpush1.msra.mxu0 %v381
        %751 = vmatprep.subr.mxu0 0.0
        %752 = vmatpush1.msra.mxu0 %v382
        %753 = vmatprep.subr.mxu0 0.0
        %754 = vmatpush1.msra.mxu0 %v383
        %755 = vmatprep.subr.mxu0 0.0
        %756 = vmatpush1.msra.mxu0 %v384
        %757 = vmatprep.subr.mxu0 0.0
        %758 = vmatpush1.msra.mxu0 %v385
        %759 = vmatprep.subr.mxu0 0.0
        %760 = vmatpush1.msra.mxu0 %v386
        %761 = vmatprep.subr.mxu0 0.0
        %762 = vmatpush1.msra.mxu0 %v387
        %763 = vmatprep.subr.mxu0 0.0
        %764 = vmatpush1.msra.mxu0 %v388
        %765 = vmatprep.subr.mxu0 0.0
        %766 = vmatpush1.msra.mxu0 %v389
        %767 = vmatprep.subr.mxu0 0.0
        %768 = vmatpush1.msra.mxu0 %v390
        %769 = vmatprep.subr.mxu0 0.0
        %770 = vmatpush1.msra.mxu0 %v391
        %771 = vmatprep.subr.mxu0 0.0
        %772 = vmatpush1.msra.mxu0 %v392
        %773 = vmatprep.subr.mxu0 0.0
        %774 = vmatpush1.msra.mxu0 %v393
        %775 = vmatprep.subr.mxu0 0.0
        %776 = vmatpush1.msra.mxu0 %v394
        %777 = vmatprep.subr.mxu0 0.0
        %778 = vmatpush1.msra.mxu0 %v395
        %779 = vmatprep.subr.mxu0 0.0
        %780 = vmatpush1.msra.mxu0 %v396
        %781 = vmatprep.subr.mxu0 0.0
        %782 = vmatpush1.msra.mxu0 %v397
        %783 = vmatprep.subr.mxu0 0.0
        %784 = vmatpush1.msra.mxu0 %v398
        %785 = vmatprep.subr.mxu0 0.0
        %786 = vmatpush1.msra.mxu0 %v399
        %787 = vmatprep.subr.mxu0 0.0
        %788 = vmatpush1.msra.mxu0 %v400
        %789 = vmatprep.subr.mxu0 0.0
        %790 = vmatpush1.msra.mxu0 %v401
        %791 = vmatprep.subr.mxu0 0.0
        %792 = vmatpush1.msra.mxu0 %v402
        %793 = vmatprep.subr.mxu0 0.0
        %794 = vmatpush1.msra.mxu0 %v403
        %795 = vmatprep.subr.mxu0 0.0
        %796 = vmatpush1.msra.mxu0 %v404
        %797 = vmatprep.subr.mxu0 0.0
        %798 = vmatpush1.msra.mxu0 %v405
        %799 = vmatprep.subr.mxu0 0.0
        %800 = vmatpush1.msra.mxu0 %v406
        %801 = vmatprep.mubr.f32.mxu0 %v186
        %802 = vmatmul.mubr.f32.gmra.mrb[0].mxu0 %v185
        %v803 = vpop.f32.mrb[0].mxu0
        %v804 = vadd.f32 %v579, %v803
        %v805 = vpop.f32.mrb[0].mxu0
        %806 = vmatprep.mubr.f32.mxu0 %v191
        %807 = vmatmul.mubr.f32.gmra.mrb[0].mxu0 %v190
        %v808 = vpop.f32.mrb[0].mxu0
        %v809 = vadd.f32 %v584, %v808
        %v810 = vpop.f32.mrb[0].mxu0
        %811 = vmatprep.mubr.f32.mxu0 %v196
        %812 = vmatmul.mubr.f32.gmra.mrb[0].mxu0 %v195
        %v813 = vpop.f32.mrb[0].mxu0
        %v814 = vadd.f32 %v589, %v813
        %v815 = vpop.f32.mrb[0].mxu0
        %816 = vmatprep.mubr.f32.mxu0 %v201
        %817 = vmatmul.mubr.f32.gmra.mrb[0].mxu0 %v200
        %v818 = vpop.f32.mrb[0].mxu0
        %v819 = vadd.f32 %v594, %v818
        %v820 = vpop.f32.mrb[0].mxu0
        %821 = vmatprep.mubr.f32.mxu0 %v206
        %822 = vmatmul.mubr.f32.gmra.mrb[0].mxu0 %v205
        %v823 = vpop.f32.mrb[0].mxu0
        %v824 = vadd.f32 %v599, %v823
        %v825 = vpop.f32.mrb[0].mxu0
        %826 = vmatprep.mubr.f32.mxu0 %v211
        %827 = vmatmul.mubr.f32.gmra.mrb[0].mxu0 %v210
        %v828 = vpop.f32.mrb[0].mxu0
        %v829 = vadd.f32 %v604, %v828
        %v830 = vpop.f32.mrb[0].mxu0
        %831 = vmatprep.mubr.f32.mxu0 %v216
        %832 = vmatmul.mubr.f32.gmra.mrb[0].mxu0 %v215
        %v833 = vpop.f32.mrb[0].mxu0
        %v834 = vadd.f32 %v609, %v833
        %v835 = vpop.f32.mrb[0].mxu0
        %836 = vmatprep.mubr.f32.mxu0 %v221
        %837 = vmatmul.mubr.f32.gmra.mrb[0].mxu0 %v220
        %v838 = vpop.f32.mrb[0].mxu0
        %v839 = vadd.f32 %v614, %v838
        %v840 = vpop.f32.mrb[0].mxu0
        %841 = vmatprep.mubr.f32.mxu0 %v226
        %842 = vmatmul.mubr.f32.gmra.mrb[0].mxu0 %v225
        %v843 = vpop.f32.mrb[0].mxu0
        %v844 = vadd.f32 %v619, %v843
        %v845 = vpop.f32.mrb[0].mxu0
        %846 = vmatprep.mubr.f32.mxu0 %v231
        %847 = vmatmul.mubr.f32.gmra.mrb[0].mxu0 %v230
        %v848 = vpop.f32.mrb[0].mxu0
        %v849 = vadd.f32 %v624, %v848
        %v850 = vpop.f32.mrb[0].mxu0
        %851 = vmatprep.mubr.f32.mxu0 %v236
        %852 = vmatmul.mubr.f32.gmra.mrb[0].mxu0 %v235
        %v853 = vpop.f32.mrb[0].mxu0
        %v854 = vadd.f32 %v629, %v853
        %v855 = vpop.f32.mrb[0].mxu0
        %856 = vmatprep.mubr.f32.mxu0 %v241
        %857 = vmatmul.mubr.f32.gmra.mrb[0].mxu0 %v240
        %v858 = vpop.f32.mrb[0].mxu0
        %v859 = vadd.f32 %v634, %v858
        %v860 = vpop.f32.mrb[0].mxu0
        %861 = vmatprep.mubr.f32.mxu0 %v246
        %862 = vmatmul.mubr.f32.gmra.mrb[0].mxu0 %v245
        %v863 = vpop.f32.mrb[0].mxu0
        %v864 = vadd.f32 %v639, %v863
        %v865 = vpop.f32.mrb[0].mxu0
        %866 = vmatprep.mubr.f32.mxu0 %v251
        %867 = vmatmul.mubr.f32.gmra.mrb[0].mxu0 %v250
        %v868 = vpop.f32.mrb[0].mxu0
        %v869 = vadd.f32 %v644, %v868
        %v870 = vpop.f32.mrb[0].mxu0
        %871 = vmatprep.mubr.f32.mxu0 %v256
        %872 = vmatmul.mubr.f32.gmra.mrb[0].mxu0 %v255
        %v873 = vpop.f32.mrb[0].mxu0
        %v874 = vadd.f32 %v649, %v873
        %v875 = vpop.f32.mrb[0].mxu0
        %876 = vmatprep.mubr.f32.mxu0 %v261
        %877 = vmatmul.mubr.f32.gmra.mrb[0].mxu0 %v260
        %v878 = vpop.f32.mrb[0].mxu0
        %v879 = vadd.f32 %v654, %v878
        %v880 = vpop.f32.mrb[0].mxu0
        %881 = vmatprep.mubr.f32.mxu0 %v266
        %882 = vmatmul.mubr.f32.gmra.mrb[0].mxu0 %v265
        %v883 = vpop.f32.mrb[0].mxu0
        %v884 = vadd.f32 %v659, %v883
        %v885 = vpop.f32.mrb[0].mxu0
        %886 = vmatprep.mubr.f32.mxu0 %v271
        %887 = vmatmul.mubr.f32.gmra.mrb[0].mxu0 %v270
        %v888 = vpop.f32.mrb[0].mxu0
        %v889 = vadd.f32 %v664, %v888
        %v890 = vpop.f32.mrb[0].mxu0
        %891 = vmatprep.mubr.f32.mxu0 %v276
        %892 = vmatmul.mubr.f32.gmra.mrb[0].mxu0 %v275
        %v893 = vpop.f32.mrb[0].mxu0
        %v894 = vadd.f32 %v669, %v893
        %v895 = vpop.f32.mrb[0].mxu0
        %896 = vmatprep.mubr.f32.mxu0 %v281
        %897 = vmatmul.mubr.f32.gmra.mrb[0].mxu0 %v280
        %v898 = vpop.f32.mrb[0].mxu0
        %v899 = vadd.f32 %v674, %v898
        %v900 = vpop.f32.mrb[0].mxu0
        %901 = vmatprep.mubr.f32.mxu0 %v286
        %902 = vmatmul.mubr.f32.gmra.mrb[0].mxu0 %v285
        %v903 = vpop.f32.mrb[0].mxu0
        %v904 = vadd.f32 %v679, %v903
        %v905 = vpop.f32.mrb[0].mxu0
        %906 = vmatprep.mubr.f32.mxu0 %v291
        %907 = vmatmul.mubr.f32.gmra.mrb[0].mxu0 %v290
        %v908 = vpop.f32.mrb[0].mxu0
        %v909 = vadd.f32 %v684, %v908
        %v910 = vpop.f32.mrb[0].mxu0
        %911 = vmatprep.mubr.f32.mxu0 %v296
        %912 = vmatmul.mubr.f32.gmra.mrb[0].mxu0 %v295
        %v913 = vpop.f32.mrb[0].mxu0
        %v914 = vadd.f32 %v689, %v913
        %v915 = vpop.f32.mrb[0].mxu0
        %916 = vmatprep.mubr.f32.mxu0 %v301
        %917 = vmatmul.mubr.f32.gmra.mrb[0].mxu0 %v300
        %v918 = vpop.f32.mrb[0].mxu0
        %v919 = vadd.f32 %v694, %v918
        %v920 = vpop.f32.mrb[0].mxu0
        %921 = vmatprep.mubr.f32.mxu0 %v306
        %922 = vmatmul.mubr.f32.gmra.mrb[0].mxu0 %v305
        %v923 = vpop.f32.mrb[0].mxu0
        %v924 = vadd.f32 %v699, %v923
        %v925 = vpop.f32.mrb[0].mxu0
        %926 = vmatprep.mubr.f32.mxu0 %v311
        %927 = vmatmul.mubr.f32.gmra.mrb[0].mxu0 %v310
        %v928 = vpop.f32.mrb[0].mxu0
        %v929 = vadd.f32 %v704, %v928
        %v930 = vpop.f32.mrb[0].mxu0
        %931 = vmatprep.mubr.f32.mxu0 %v316
        %932 = vmatmul.mubr.f32.gmra.mrb[0].mxu0 %v315
        %v933 = vpop.f32.mrb[0].mxu0
        %v934 = vadd.f32 %v709, %v933
        %v935 = vpop.f32.mrb[0].mxu0
        %936 = vmatprep.mubr.f32.mxu0 %v321
        %937 = vmatmul.mubr.f32.gmra.mrb[0].mxu0 %v320
        %v938 = vpop.f32.mrb[0].mxu0
        %v939 = vadd.f32 %v714, %v938
        %v940 = vpop.f32.mrb[0].mxu0
        %941 = vmatprep.mubr.f32.mxu0 %v326
        %942 = vmatmul.mubr.f32.gmra.mrb[0].mxu0 %v325
        %v943 = vpop.f32.mrb[0].mxu0
        %v944 = vadd.f32 %v719, %v943
        %v945 = vpop.f32.mrb[0].mxu0
        %946 = vmatprep.mubr.f32.mxu0 %v331
        %947 = vmatmul.mubr.f32.gmra.mrb[0].mxu0 %v330
        %v948 = vpop.f32.mrb[0].mxu0
        %v949 = vadd.f32 %v724, %v948
        %v950 = vpop.f32.mrb[0].mxu0
        %951 = vmatprep.mubr.f32.mxu0 %v336
        %952 = vmatmul.mubr.f32.gmra.mrb[0].mxu0 %v335
        %v953 = vpop.f32.mrb[0].mxu0
        %v954 = vadd.f32 %v729, %v953
        %v955 = vpop.f32.mrb[0].mxu0
        %956 = vmatprep.mubr.f32.mxu0 %v341
        %957 = vmatmul.mubr.f32.gmra.mrb[0].mxu0 %v340
        %v958 = vpop.f32.mrb[0].mxu0
        %v959 = vadd.f32 %v734, %v958
        %v960 = vpop.f32.mrb[0].mxu0
        %961 = vdwg.mxu0
        %962 = vmatprep.subr.mxu0 0.0
        %963 = vmatpush1.msra.mxu0 %v407
        %964 = vmatprep.subr.mxu0 0.0
        %965 = vmatpush1.msra.mxu0 %v408
        %966 = vmatprep.subr.mxu0 0.0
        %967 = vmatpush1.msra.mxu0 %v409
        %968 = vmatprep.subr.mxu0 0.0
        %969 = vmatpush1.msra.mxu0 %v410
        %970 = vmatprep.subr.mxu0 0.0
        %971 = vmatpush1.msra.mxu0 %v411
        %972 = vmatprep.subr.mxu0 0.0
        %973 = vmatpush1.msra.mxu0 %v412
        %974 = vmatprep.subr.mxu0 0.0
        %975 = vmatpush1.msra.mxu0 %v413
        %976 = vmatprep.subr.mxu0 0.0
        %977 = vmatpush1.msra.mxu0 %v414
        %978 = vmatprep.subr.mxu0 0.0
        %979 = vmatpush1.msra.mxu0 0.0
        %980 = vmatprep.subr.mxu0 0.0
        %981 = vmatpush1.msra.mxu0 0.0
        %982 = vmatprep.subr.mxu0 0.0
        %983 = vmatpush1.msra.mxu0 0.0
        %984 = vmatprep.subr.mxu0 0.0
        %985 = vmatpush1.msra.mxu0 0.0
        %986 = vmatprep.subr.mxu0 0.0
        %987 = vmatpush1.msra.mxu0 0.0
        %988 = vmatprep.subr.mxu0 0.0
        %989 = vmatpush1.msra.mxu0 0.0
        %990 = vmatprep.subr.mxu0 0.0
        %991 = vmatpush1.msra.mxu0 0.0
        %992 = vmatprep.subr.mxu0 0.0
        %993 = vmatpush1.msra.mxu0 0.0
        %994 = vmatprep.subr.mxu0 0.0
        %995 = vmatpush1.msra.mxu0 0.0
        %996 = vmatprep.subr.mxu0 0.0
        %997 = vmatpush1.msra.mxu0 0.0
        %998 = vmatprep.subr.mxu0 0.0
        %999 = vmatpush1.msra.mxu0 0.0
        %1000 = vmatprep.subr.mxu0 0.0
        %1001 = vmatpush1.msra.mxu0 0.0
        %1002 = vmatprep.subr.mxu0 0.0
        %1003 = vmatpush1.msra.mxu0 0.0
        %1004 = vmatprep.subr.mxu0 0.0
        %1005 = vmatpush1.msra.mxu0 0.0
        %1006 = vmatprep.subr.mxu0 0.0
        %1007 = vmatpush1.msra.mxu0 0.0
        %1008 = vmatprep.subr.mxu0 0.0
        %1009 = vmatpush1.msra.mxu0 0.0
        %1010 = vmatprep.subr.mxu0 0.0
        %1011 = vmatpush1.msra.mxu0 0.0
        %1012 = vmatprep.subr.mxu0 0.0
        %1013 = vmatpush1.msra.mxu0 0.0
        %1014 = vmatprep.subr.mxu0 0.0
        %1015 = vmatpush1.msra.mxu0 0.0
        %1016 = vmatprep.subr.mxu0 0.0
        %1017 = vmatpush1.msra.mxu0 0.0
        %1018 = vmatprep.subr.mxu0 0.0
        %1019 = vmatpush1.msra.mxu0 0.0
        %1020 = vmatprep.subr.mxu0 0.0
        %1021 = vmatpush1.msra.mxu0 0.0
        %1022 = vmatprep.subr.mxu0 0.0
        %1023 = vmatpush1.msra.mxu0 0.0
        %1024 = vmatprep.subr.mxu0 0.0
        %1025 = vmatpush1.msra.mxu0 0.0
        %1026 = vmatprep.mubr.f32.mxu0 0.0
        %1027 = vmatmul.mubr.f32.gmra.mrb[0].mxu0 %v417
        %v1028 = vpop.f32.mrb[0].mxu0
        %v1029 = vadd.f32 %v804, %v1028
        %v1030 = vpop.f32.mrb[0].mxu0
        %1031 = vmatprep.mubr.f32.mxu0 0.0
        %1032 = vmatmul.mubr.f32.gmra.mrb[0].mxu0 %v420
        %v1033 = vpop.f32.mrb[0].mxu0
        %v1034 = vadd.f32 %v809, %v1033
        %v1035 = vpop.f32.mrb[0].mxu0
        %1036 = vmatprep.mubr.f32.mxu0 0.0
        %1037 = vmatmul.mubr.f32.gmra.mrb[0].mxu0 %v423
        %v1038 = vpop.f32.mrb[0].mxu0
        %v1039 = vadd.f32 %v814, %v1038
        %v1040 = vpop.f32.mrb[0].mxu0
        %1041 = vmatprep.mubr.f32.mxu0 0.0
        %1042 = vmatmul.mubr.f32.gmra.mrb[0].mxu0 %v426
        %v1043 = vpop.f32.mrb[0].mxu0
        %v1044 = vadd.f32 %v819, %v1043
        %v1045 = vpop.f32.mrb[0].mxu0
        %1046 = vmatprep.mubr.f32.mxu0 0.0
        %1047 = vmatmul.mubr.f32.gmra.mrb[0].mxu0 %v429
        %v1048 = vpop.f32.mrb[0].mxu0
        %v1049 = vadd.f32 %v824, %v1048
        %v1050 = vpop.f32.mrb[0].mxu0
        %1051 = vmatprep.mubr.f32.mxu0 0.0
        %1052 = vmatmul.mubr.f32.gmra.mrb[0].mxu0 %v432
        %v1053 = vpop.f32.mrb[0].mxu0
        %v1054 = vadd.f32 %v829, %v1053
        %v1055 = vpop.f32.mrb[0].mxu0
        %1056 = vmatprep.mubr.f32.mxu0 0.0
        %1057 = vmatmul.mubr.f32.gmra.mrb[0].mxu0 %v435
        %v1058 = vpop.f32.mrb[0].mxu0
        %v1059 = vadd.f32 %v834, %v1058
        %v1060 = vpop.f32.mrb[0].mxu0
        %1061 = vmatprep.mubr.f32.mxu0 0.0
        %1062 = vmatmul.mubr.f32.gmra.mrb[0].mxu0 %v438
        %v1063 = vpop.f32.mrb[0].mxu0
        %v1064 = vadd.f32 %v839, %v1063
        %v1065 = vpop.f32.mrb[0].mxu0
        %1066 = vmatprep.mubr.f32.mxu0 0.0
        %1067 = vmatmul.mubr.f32.gmra.mrb[0].mxu0 %v441
        %v1068 = vpop.f32.mrb[0].mxu0
        %v1069 = vadd.f32 %v844, %v1068
        %v1070 = vpop.f32.mrb[0].mxu0
        %1071 = vmatprep.mubr.f32.mxu0 0.0
        %1072 = vmatmul.mubr.f32.gmra.mrb[0].mxu0 %v444
        %v1073 = vpop.f32.mrb[0].mxu0
        %v1074 = vadd.f32 %v849, %v1073
        %v1075 = vpop.f32.mrb[0].mxu0
        %1076 = vmatprep.mubr.f32.mxu0 0.0
        %1077 = vmatmul.mubr.f32.gmra.mrb[0].mxu0 %v447
        %v1078 = vpop.f32.mrb[0].mxu0
        %v1079 = vadd.f32 %v854, %v1078
        %v1080 = vpop.f32.mrb[0].mxu0
        %1081 = vmatprep.mubr.f32.mxu0 0.0
        %1082 = vmatmul.mubr.f32.gmra.mrb[0].mxu0 %v450
        %v1083 = vpop.f32.mrb[0].mxu0
        %v1084 = vadd.f32 %v859, %v1083
        %v1085 = vpop.f32.mrb[0].mxu0
        %1086 = vmatprep.mubr.f32.mxu0 0.0
        %1087 = vmatmul.mubr.f32.gmra.mrb[0].mxu0 %v453
        %v1088 = vpop.f32.mrb[0].mxu0
        %v1089 = vadd.f32 %v864, %v1088
        %v1090 = vpop.f32.mrb[0].mxu0
        %1091 = vmatprep.mubr.f32.mxu0 0.0
        %1092 = vmatmul.mubr.f32.gmra.mrb[0].mxu0 %v456
        %v1093 = vpop.f32.mrb[0].mxu0
        %v1094 = vadd.f32 %v869, %v1093
        %v1095 = vpop.f32.mrb[0].mxu0
        %1096 = vmatprep.mubr.f32.mxu0 0.0
        %1097 = vmatmul.mubr.f32.gmra.mrb[0].mxu0 %v459
        %v1098 = vpop.f32.mrb[0].mxu0
        %v1099 = vadd.f32 %v874, %v1098
        %v1100 = vpop.f32.mrb[0].mxu0
        %1101 = vmatprep.mubr.f32.mxu0 0.0
        %1102 = vmatmul.mubr.f32.gmra.mrb[0].mxu0 %v462
        %v1103 = vpop.f32.mrb[0].mxu0
        %v1104 = vadd.f32 %v879, %v1103
        %v1105 = vpop.f32.mrb[0].mxu0
        %1106 = vmatprep.mubr.f32.mxu0 0.0
        %1107 = vmatmul.mubr.f32.gmra.mrb[0].mxu0 %v465
        %v1108 = vpop.f32.mrb[0].mxu0
        %v1109 = vadd.f32 %v884, %v1108
        %v1110 = vpop.f32.mrb[0].mxu0
        %1111 = vmatprep.mubr.f32.mxu0 0.0
        %1112 = vmatmul.mubr.f32.gmra.mrb[0].mxu0 %v468
        %v1113 = vpop.f32.mrb[0].mxu0
        %v1114 = vadd.f32 %v889, %v1113
        %v1115 = vpop.f32.mrb[0].mxu0
        %1116 = vmatprep.mubr.f32.mxu0 0.0
        %1117 = vmatmul.mubr.f32.gmra.mrb[0].mxu0 %v471
        %v1118 = vpop.f32.mrb[0].mxu0
        %v1119 = vadd.f32 %v894, %v1118
        %v1120 = vpop.f32.mrb[0].mxu0
        %1121 = vmatprep.mubr.f32.mxu0 0.0
        %1122 = vmatmul.mubr.f32.gmra.mrb[0].mxu0 %v474
        %v1123 = vpop.f32.mrb[0].mxu0
        %v1124 = vadd.f32 %v899, %v1123
        %v1125 = vpop.f32.mrb[0].mxu0
        %1126 = vmatprep.mubr.f32.mxu0 0.0
        %1127 = vmatmul.mubr.f32.gmra.mrb[0].mxu0 %v477
        %v1128 = vpop.f32.mrb[0].mxu0
        %v1129 = vadd.f32 %v904, %v1128
        %v1130 = vpop.f32.mrb[0].mxu0
        %1131 = vmatprep.mubr.f32.mxu0 0.0
        %1132 = vmatmul.mubr.f32.gmra.mrb[0].mxu0 %v480
        %v1133 = vpop.f32.mrb[0].mxu0
        %v1134 = vadd.f32 %v909, %v1133
        %v1135 = vpop.f32.mrb[0].mxu0
        %1136 = vmatprep.mubr.f32.mxu0 0.0
        %1137 = vmatmul.mubr.f32.gmra.mrb[0].mxu0 %v483
        %v1138 = vpop.f32.mrb[0].mxu0
        %v1139 = vadd.f32 %v914, %v1138
        %v1140 = vpop.f32.mrb[0].mxu0
        %1141 = vmatprep.mubr.f32.mxu0 0.0
        %1142 = vmatmul.mubr.f32.gmra.mrb[0].mxu0 %v486
        %v1143 = vpop.f32.mrb[0].mxu0
        %v1144 = vadd.f32 %v919, %v1143
        %v1145 = vpop.f32.mrb[0].mxu0
        %1146 = vmatprep.mubr.f32.mxu0 0.0
        %1147 = vmatmul.mubr.f32.gmra.mrb[0].mxu0 %v489
        %v1148 = vpop.f32.mrb[0].mxu0
        %v1149 = vadd.f32 %v924, %v1148
        %v1150 = vpop.f32.mrb[0].mxu0
        %1151 = vmatprep.mubr.f32.mxu0 0.0
        %1152 = vmatmul.mubr.f32.gmra.mrb[0].mxu0 %v492
        %v1153 = vpop.f32.mrb[0].mxu0
        %v1154 = vadd.f32 %v929, %v1153
        %v1155 = vpop.f32.mrb[0].mxu0
        %1156 = vmatprep.mubr.f32.mxu0 0.0
        %1157 = vmatmul.mubr.f32.gmra.mrb[0].mxu0 %v495
        %v1158 = vpop.f32.mrb[0].mxu0
        %v1159 = vadd.f32 %v934, %v1158
        %v1160 = vpop.f32.mrb[0].mxu0
        %1161 = vmatprep.mubr.f32.mxu0 0.0
        %1162 = vmatmul.mubr.f32.gmra.mrb[0].mxu0 %v498
        %v1163 = vpop.f32.mrb[0].mxu0
        %v1164 = vadd.f32 %v939, %v1163
        %v1165 = vpop.f32.mrb[0].mxu0
        %1166 = vmatprep.mubr.f32.mxu0 0.0
        %1167 = vmatmul.mubr.f32.gmra.mrb[0].mxu0 %v501
        %v1168 = vpop.f32.mrb[0].mxu0
        %v1169 = vadd.f32 %v944, %v1168
        %v1170 = vpop.f32.mrb[0].mxu0
        %1171 = vmatprep.mubr.f32.mxu0 0.0
        %1172 = vmatmul.mubr.f32.gmra.mrb[0].mxu0 %v504
        %v1173 = vpop.f32.mrb[0].mxu0
        %v1174 = vadd.f32 %v949, %v1173
        %v1175 = vpop.f32.mrb[0].mxu0
        %1176 = vmatprep.mubr.f32.mxu0 0.0
        %1177 = vmatmul.mubr.f32.gmra.mrb[0].mxu0 %v507
        %v1178 = vpop.f32.mrb[0].mxu0
        %v1179 = vadd.f32 %v954, %v1178
        %v1180 = vpop.f32.mrb[0].mxu0
        %1181 = vmatprep.mubr.f32.mxu0 0.0
        %1182 = vmatmul.mubr.f32.gmra.mrb[0].mxu0 %v510
        %v1183 = vpop.f32.mrb[0].mxu0
        %v1184 = vadd.f32 %v959, %v1183
        %v1185 = vpop.f32.mrb[0].mxu0
        %1186 = vdwg.mxu0
        %1187 = vst.msk [vmem:[#allocation2] sm:$0xff] %vm415, %v1029
        %1188 = vst.msk [vmem:[#allocation2 + $0x8] sm:$0xff] %vm415, %v1034
        %1189 = vst.msk [vmem:[#allocation2 + $0x10] sm:$0xff] %vm415, %v1039
        %1190 = vst.msk [vmem:[#allocation2 + $0x18] sm:$0xff] %vm415, %v1044
        %1191 = vst.msk [vmem:[#allocation2 + $0x20] sm:$0xff] %vm415, %v1049
        %1192 = vst.msk [vmem:[#allocation2 + $0x28] sm:$0xff] %vm415, %v1054
        %1193 = vst.msk [vmem:[#allocation2 + $0x30] sm:$0xff] %vm415, %v1059
        %1194 = vst.msk [vmem:[#allocation2 + $0x38] sm:$0xff] %vm415, %v1064
        %1195 = vst.msk [vmem:[#allocation2 + $0x40] sm:$0xff] %vm415, %v1069
        %1196 = vst.msk [vmem:[#allocation2 + $0x48] sm:$0xff] %vm415, %v1074
        %1197 = vst.msk [vmem:[#allocation2 + $0x50] sm:$0xff] %vm415, %v1079
        %1198 = vst.msk [vmem:[#allocation2 + $0x58] sm:$0xff] %vm415, %v1084
        %1199 = vst.msk [vmem:[#allocation2 + $0x60] sm:$0xff] %vm415, %v1089
        %1200 = vst.msk [vmem:[#allocation2 + $0x68] sm:$0xff] %vm415, %v1094
        %1201 = vst.msk [vmem:[#allocation2 + $0x70] sm:$0xff] %vm415, %v1099
        %1202 = vst.msk [vmem:[#allocation2 + $0x78] sm:$0xff] %vm415, %v1104
        %1203 = vst.msk [vmem:[#allocation2 + $0x80] sm:$0xff] %vm415, %v1109
        %1204 = vst.msk [vmem:[#allocation2 + $0x88] sm:$0xff] %vm415, %v1114
        %1205 = vst.msk [vmem:[#allocation2 + $0x90] sm:$0xff] %vm415, %v1119
        %1206 = vst.msk [vmem:[#allocation2 + $0x98] sm:$0xff] %vm415, %v1124
        %1207 = vst.msk [vmem:[#allocation2 + $0xa0] sm:$0xff] %vm415, %v1129
        %1208 = vst.msk [vmem:[#allocation2 + $0xa8] sm:$0xff] %vm415, %v1134
        %1209 = vst.msk [vmem:[#allocation2 + $0xb0] sm:$0xff] %vm415, %v1139
        %1210 = vst.msk [vmem:[#allocation2 + $0xb8] sm:$0xff] %vm415, %v1144
        %1211 = vst.msk [vmem:[#allocation2 + $0xc0] sm:$0xff] %vm415, %v1149
        %1212 = vst.msk [vmem:[#allocation2 + $0xc8] sm:$0xff] %vm415, %v1154
        %1213 = vst.msk [vmem:[#allocation2 + $0xd0] sm:$0xff] %vm415, %v1159
        %1214 = vst.msk [vmem:[#allocation2 + $0xd8] sm:$0xff] %vm415, %v1164
        %1215 = vst.msk [vmem:[#allocation2 + $0xe0] sm:$0xff] %vm415, %v1169
        %1216 = vst.msk [vmem:[#allocation2 + $0xe8] sm:$0xff] %vm415, %v1174
        %1217 = vst.msk [vmem:[#allocation2 + $0xf0] sm:$0xff] %vm415, %v1179
        %1218 = vst.msk [vmem:[#allocation2 + $0xf8] sm:$0xff] %vm415, %v1184
        %s1219 = scalar_lea.vmem %s160, 40 [#allocation3]
        %v1220 = vld [vmem:[%s1219] sm:$0xff]
        %v1221 = vld [vmem:[%s1219 + $0x8] sm:$0xff]
        %v1222 = vld [vmem:[%s1219 + $0x10] sm:$0xff]
        %v1223 = vld [vmem:[%s1219 + $0x18] sm:$0xff]
        %v1224 = vld [vmem:[%s1219 + $0x20] sm:$0xff]
        %v1225 = vld [vmem:[%s1219 + $0x28] sm:$0xff]
        %v1226 = vld [vmem:[%s1219 + $0x30] sm:$0xff]
        %v1227 = vld [vmem:[%s1219 + $0x38] sm:$0xff]
        %v1228 = vld [vmem:[%s1219 + $0x40] sm:$0xff]
        %v1229 = vld [vmem:[%s1219 + $0x48] sm:$0xff]
        %v1230 = vld [vmem:[%s1219 + $0x50] sm:$0xff]
        %v1231 = vld [vmem:[%s1219 + $0x58] sm:$0xff]
        %v1232 = vld [vmem:[%s1219 + $0x60] sm:$0xff]
        %v1233 = vld [vmem:[%s1219 + $0x68] sm:$0xff]
        %v1234 = vld [vmem:[%s1219 + $0x70] sm:$0xff]
        %v1235 = vld [vmem:[%s1219 + $0x78] sm:$0xff]
        %v1236 = vld [vmem:[%s1219 + $0x80] sm:$0xff]
        %v1237 = vld [vmem:[%s1219 + $0x88] sm:$0xff]
        %v1238 = vld [vmem:[%s1219 + $0x90] sm:$0xff]
        %v1239 = vld [vmem:[%s1219 + $0x98] sm:$0xff]
        %v1240 = vld [vmem:[%s1219 + $0xa0] sm:$0xff]
        %v1241 = vld [vmem:[%s1219 + $0xa8] sm:$0xff]
        %v1242 = vld [vmem:[%s1219 + $0xb0] sm:$0xff]
        %v1243 = vld [vmem:[%s1219 + $0xb8] sm:$0xff]
        %v1244 = vld [vmem:[%s1219 + $0xc0] sm:$0xff]
        %v1245 = vld [vmem:[%s1219 + $0xc8] sm:$0xff]
        %v1246 = vld [vmem:[%s1219 + $0xd0] sm:$0xff]
        %v1247 = vld [vmem:[%s1219 + $0xd8] sm:$0xff]
        %v1248 = vld [vmem:[%s1219 + $0xe0] sm:$0xff]
        %v1249 = vld [vmem:[%s1219 + $0xe8] sm:$0xff]
        %v1250 = vld [vmem:[%s1219 + $0xf0] sm:$0xff]
        %v1251 = vld [vmem:[%s1219 + $0xf8] sm:$0xff]
        %v1252 = vld [vmem:[%s1219 + $0x100] sm:$0xff]
        %v1253 = vld [vmem:[%s1219 + $0x108] sm:$0xff]
        %v1254 = vld [vmem:[%s1219 + $0x110] sm:$0xff]
        %v1255 = vld [vmem:[%s1219 + $0x118] sm:$0xff]
        %v1256 = vld [vmem:[%s1219 + $0x120] sm:$0xff]
        %v1257 = vld [vmem:[%s1219 + $0x128] sm:$0xff]
        %v1258 = vld [vmem:[%s1219 + $0x130] sm:$0xff]
        %v1259 = vld [vmem:[%s1219 + $0x138] sm:$0xff]
        %v1260 = vld [vmem:[%s1219 + $0x190] sm:$0xff]
        %v1261 = vld [vmem:[%s1219 + $0x198] sm:$0xff]
        %v1262 = vld [vmem:[%s1219 + $0x1a0] sm:$0xff]
        %v1263 = vld [vmem:[%s1219 + $0x1a8] sm:$0xff]
        %v1264 = vld [vmem:[%s1219 + $0x1b0] sm:$0xff]
        %v1265 = vld [vmem:[%s1219 + $0x1b8] sm:$0xff]
        %v1266 = vld [vmem:[%s1219 + $0x1c0] sm:$0xff]
        %v1267 = vld [vmem:[%s1219 + $0x1c8] sm:$0xff]
        %v1268 = vld [vmem:[%s1219 + $0x1d0] sm:$0xff]
        %v1269 = vld [vmem:[%s1219 + $0x1d8] sm:$0xff]
        %v1270 = vld [vmem:[%s1219 + $0x1e0] sm:$0xff]
        %v1271 = vld [vmem:[%s1219 + $0x1e8] sm:$0xff]
        %v1272 = vld [vmem:[%s1219 + $0x1f0] sm:$0xff]
        %v1273 = vld [vmem:[%s1219 + $0x1f8] sm:$0xff]
        %v1274 = vld [vmem:[%s1219 + $0x200] sm:$0xff]
        %v1275 = vld [vmem:[%s1219 + $0x208] sm:$0xff]
        %v1276 = vld [vmem:[%s1219 + $0x210] sm:$0xff]
        %v1277 = vld [vmem:[%s1219 + $0x218] sm:$0xff]
        %v1278 = vld [vmem:[%s1219 + $0x220] sm:$0xff]
        %v1279 = vld [vmem:[%s1219 + $0x228] sm:$0xff]
        %v1280 = vld [vmem:[%s1219 + $0x230] sm:$0xff]
        %v1281 = vld [vmem:[%s1219 + $0x238] sm:$0xff]
        %v1282 = vld [vmem:[%s1219 + $0x240] sm:$0xff]
        %v1283 = vld [vmem:[%s1219 + $0x248] sm:$0xff]
        %v1284 = vld [vmem:[%s1219 + $0x250] sm:$0xff]
        %v1285 = vld [vmem:[%s1219 + $0x258] sm:$0xff]
        %v1286 = vld [vmem:[%s1219 + $0x260] sm:$0xff]
        %v1287 = vld [vmem:[%s1219 + $0x268] sm:$0xff]
        %v1288 = vld [vmem:[%s1219 + $0x270] sm:$0xff]
        %v1289 = vld [vmem:[%s1219 + $0x278] sm:$0xff]
        %v1290 = vld [vmem:[%s1219 + $0x280] sm:$0xff]
        %v1291 = vld [vmem:[%s1219 + $0x288] sm:$0xff]
        %v1292 = vld [vmem:[%s1219 + $0x290] sm:$0xff]
        %v1293 = vld [vmem:[%s1219 + $0x298] sm:$0xff]
        %v1294 = vld [vmem:[%s1219 + $0x2a0] sm:$0xff]
        %v1295 = vld [vmem:[%s1219 + $0x2a8] sm:$0xff]
        %v1296 = vld [vmem:[%s1219 + $0x2b0] sm:$0xff]
        %v1297 = vld [vmem:[%s1219 + $0x2b8] sm:$0xff]
        %v1298 = vld [vmem:[%s1219 + $0x2c0] sm:$0xff]
        %v1299 = vld [vmem:[%s1219 + $0x2c8] sm:$0xff]
        %v1300 = vld [vmem:[%s1219 + $0x320] sm:$0xff]
        %v1301 = vld [vmem:[%s1219 + $0x328] sm:$0xff]
        %v1302 = vld [vmem:[%s1219 + $0x330] sm:$0xff]
        %v1303 = vld [vmem:[%s1219 + $0x338] sm:$0xff]
        %v1304 = vld [vmem:[%s1219 + $0x340] sm:$0xff]
        %v1305 = vld [vmem:[%s1219 + $0x348] sm:$0xff]
        %v1306 = vld [vmem:[%s1219 + $0x350] sm:$0xff]
        %v1307 = vld [vmem:[%s1219 + $0x358] sm:$0xff]
        %v1308 = vld [vmem:[%s1219 + $0x360] sm:$0xff]
        %v1309 = vld [vmem:[%s1219 + $0x368] sm:$0xff]
        %v1310 = vld [vmem:[%s1219 + $0x370] sm:$0xff]
        %v1311 = vld [vmem:[%s1219 + $0x378] sm:$0xff]
        %v1312 = vld [vmem:[%s1219 + $0x380] sm:$0xff]
        %v1313 = vld [vmem:[%s1219 + $0x388] sm:$0xff]
        %v1314 = vld [vmem:[%s1219 + $0x390] sm:$0xff]
        %v1315 = vld [vmem:[%s1219 + $0x398] sm:$0xff]
        %v1316 = vld [vmem:[%s1219 + $0x3a0] sm:$0xff]
        %v1317 = vld [vmem:[%s1219 + $0x3a8] sm:$0xff]
        %v1318 = vld [vmem:[%s1219 + $0x3b0] sm:$0xff]
        %v1319 = vld [vmem:[%s1219 + $0x3b8] sm:$0xff]
        %v1320 = vld [vmem:[%s1219 + $0x3c0] sm:$0xff]
        %v1321 = vld [vmem:[%s1219 + $0x3c8] sm:$0xff]
        %v1322 = vld [vmem:[%s1219 + $0x3d0] sm:$0xff]
        %v1323 = vld [vmem:[%s1219 + $0x3d8] sm:$0xff]
        %v1324 = vld [vmem:[%s1219 + $0x3e0] sm:$0xff]
        %v1325 = vld [vmem:[%s1219 + $0x3e8] sm:$0xff]
        %v1326 = vld [vmem:[%s1219 + $0x3f0] sm:$0xff]
        %v1327 = vld [vmem:[%s1219 + $0x3f8] sm:$0xff]
        %v1328 = vld [vmem:[%s1219 + $0x400] sm:$0xff]
        %v1329 = vld [vmem:[%s1219 + $0x408] sm:$0xff]
        %v1330 = vld [vmem:[%s1219 + $0x410] sm:$0xff]
        %v1331 = vld [vmem:[%s1219 + $0x418] sm:$0xff]
        %v1332 = vld [vmem:[%s1219 + $0x420] sm:$0xff]
        %v1333 = vld [vmem:[%s1219 + $0x428] sm:$0xff]
        %v1334 = vld [vmem:[%s1219 + $0x430] sm:$0xff]
        %v1335 = vld [vmem:[%s1219 + $0x438] sm:$0xff]
        %v1336 = vld [vmem:[%s1219 + $0x440] sm:$0xff]
        %v1337 = vld [vmem:[%s1219 + $0x448] sm:$0xff]
        %v1338 = vld [vmem:[%s1219 + $0x450] sm:$0xff]
        %v1339 = vld [vmem:[%s1219 + $0x458] sm:$0xff]
        %v1340 = vld [vmem:[%s1219 + $0x4b0] sm:$0xff]
        %v1341 = vld [vmem:[%s1219 + $0x4b8] sm:$0xff]
        %v1342 = vld [vmem:[%s1219 + $0x4c0] sm:$0xff]
        %v1343 = vld [vmem:[%s1219 + $0x4c8] sm:$0xff]
        %v1344 = vld [vmem:[%s1219 + $0x4d0] sm:$0xff]
        %v1345 = vld [vmem:[%s1219 + $0x4d8] sm:$0xff]
        %v1346 = vld [vmem:[%s1219 + $0x4e0] sm:$0xff]
        %v1347 = vld [vmem:[%s1219 + $0x4e8] sm:$0xff]
        %v1348 = vld [vmem:[%s1219 + $0x4f0] sm:$0xff]
        %v1349 = vld [vmem:[%s1219 + $0x4f8] sm:$0xff]
        %v1350 = vld [vmem:[%s1219 + $0x500] sm:$0xff]
        %v1351 = vld [vmem:[%s1219 + $0x508] sm:$0xff]
        %v1352 = vld [vmem:[%s1219 + $0x510] sm:$0xff]
        %v1353 = vld [vmem:[%s1219 + $0x518] sm:$0xff]
        %v1354 = vld [vmem:[%s1219 + $0x520] sm:$0xff]
        %v1355 = vld [vmem:[%s1219 + $0x528] sm:$0xff]
        %v1356 = vld [vmem:[%s1219 + $0x530] sm:$0xff]
        %v1357 = vld [vmem:[%s1219 + $0x538] sm:$0xff]
        %v1358 = vld [vmem:[%s1219 + $0x540] sm:$0xff]
        %v1359 = vld [vmem:[%s1219 + $0x548] sm:$0xff]
        %v1360 = vld [vmem:[%s1219 + $0x550] sm:$0xff]
        %v1361 = vld [vmem:[%s1219 + $0x558] sm:$0xff]
        %v1362 = vld [vmem:[%s1219 + $0x560] sm:$0xff]
        %v1363 = vld [vmem:[%s1219 + $0x568] sm:$0xff]
        %v1364 = vld [vmem:[%s1219 + $0x570] sm:$0xff]
        %v1365 = vld [vmem:[%s1219 + $0x578] sm:$0xff]
        %v1366 = vld [vmem:[%s1219 + $0x580] sm:$0xff]
        %v1367 = vld [vmem:[%s1219 + $0x588] sm:$0xff]
        %v1368 = vld [vmem:[%s1219 + $0x590] sm:$0xff]
        %v1369 = vld [vmem:[%s1219 + $0x598] sm:$0xff]
        %v1370 = vld [vmem:[%s1219 + $0x5a0] sm:$0xff]
        %v1371 = vld [vmem:[%s1219 + $0x5a8] sm:$0xff]
        %v1372 = vld [vmem:[%s1219 + $0x5b0] sm:$0xff]
        %v1373 = vld [vmem:[%s1219 + $0x5b8] sm:$0xff]
        %v1374 = vld [vmem:[%s1219 + $0x5c0] sm:$0xff]
        %v1375 = vld [vmem:[%s1219 + $0x5c8] sm:$0xff]
        %v1376 = vld [vmem:[%s1219 + $0x5d0] sm:$0xff]
        %v1377 = vld [vmem:[%s1219 + $0x5d8] sm:$0xff]
        %v1378 = vld [vmem:[%s1219 + $0x5e0] sm:$0xff]
        %v1379 = vld [vmem:[%s1219 + $0x5e8] sm:$0xff]
        %s1380 = scalar_lea.vmem %s1, 576
        %v1381 = vld [vmem:[%s1380] sm:$0xff]
        %v1382 = vld [vmem:[%s1380 + $0x8] sm:$0xff]
        %v1383 = vld [vmem:[%s1380 + $0x10] sm:$0xff]
        %v1384 = vld [vmem:[%s1380 + $0x18] sm:$0xff]
        %v1385 = vld [vmem:[%s1380 + $0x20] sm:$0xff]
        %v1386 = vld [vmem:[%s1380 + $0x28] sm:$0xff]
        %v1387 = vld [vmem:[%s1380 + $0x30] sm:$0xff]
        %v1388 = vld [vmem:[%s1380 + $0x38] sm:$0xff]
        %v1389 = vld [vmem:[%s1380 + $0x40] sm:$0xff]
        %v1390 = vld [vmem:[%s1380 + $0x48] sm:$0xff]
        %v1391 = vld [vmem:[%s1380 + $0x50] sm:$0xff]
        %v1392 = vld [vmem:[%s1380 + $0x58] sm:$0xff]
        %v1393 = vld [vmem:[%s1380 + $0x60] sm:$0xff]
        %v1394 = vld [vmem:[%s1380 + $0x68] sm:$0xff]
        %v1395 = vld [vmem:[%s1380 + $0x70] sm:$0xff]
        %v1396 = vld [vmem:[%s1380 + $0x78] sm:$0xff]
        %v1397 = vld [vmem:[%s1380 + $0x80] sm:$0xff]
        %v1398 = vld [vmem:[%s1380 + $0x88] sm:$0xff]
        %v1399 = vld [vmem:[%s1380 + $0x90] sm:$0xff]
        %v1400 = vld [vmem:[%s1380 + $0x98] sm:$0xff]
        %v1401 = vld [vmem:[%s1380 + $0xa0] sm:$0xff]
        %v1402 = vld [vmem:[%s1380 + $0xa8] sm:$0xff]
        %v1403 = vld [vmem:[%s1380 + $0xb0] sm:$0xff]
        %v1404 = vld [vmem:[%s1380 + $0xb8] sm:$0xff]
        %v1405 = vld [vmem:[%s1380 + $0xc0] sm:$0xff]
        %v1406 = vld [vmem:[%s1380 + $0xc8] sm:$0xff]
        %v1407 = vld [vmem:[%s1380 + $0xd0] sm:$0xff]
        %v1408 = vld [vmem:[%s1380 + $0xd8] sm:$0xff]
        %v1409 = vld [vmem:[%s1380 + $0xe0] sm:$0xff]
        %v1410 = vld [vmem:[%s1380 + $0xe8] sm:$0xff]
        %v1411 = vld [vmem:[%s1380 + $0xf0] sm:$0xff]
        %v1412 = vld [vmem:[%s1380 + $0xf8] sm:$0xff]
        %v1413 = vld [vmem:[%s1380 + $0x100] sm:$0xff]
        %v1414 = vld [vmem:[%s1380 + $0x108] sm:$0xff]
        %v1415 = vld [vmem:[%s1380 + $0x110] sm:$0xff]
        %v1416 = vld [vmem:[%s1380 + $0x118] sm:$0xff]
        %v1417 = vld [vmem:[%s1380 + $0x120] sm:$0xff]
        %v1418 = vld [vmem:[%s1380 + $0x128] sm:$0xff]
        %v1419 = vld [vmem:[%s1380 + $0x130] sm:$0xff]
        %v1420 = vld [vmem:[%s1380 + $0x138] sm:$0xff]
        %v1421 = vld [vmem:[%s1380 + $0x140] sm:$0xff]
        %v1422 = vld [vmem:[%s1380 + $0x148] sm:$0xff]
        %v1423 = vld [vmem:[%s1380 + $0x150] sm:$0xff]
        %v1424 = vld [vmem:[%s1380 + $0x158] sm:$0xff]
        %v1425 = vld [vmem:[%s1380 + $0x160] sm:$0xff]
        %v1426 = vld [vmem:[%s1380 + $0x168] sm:$0xff]
        %v1427 = vld [vmem:[%s1380 + $0x170] sm:$0xff]
        %v1428 = vld [vmem:[%s1380 + $0x178] sm:$0xff]
        %v1429 = vld [vmem:[%s1380 + $0x180] sm:$0xff]
        %v1430 = vld [vmem:[%s1380 + $0x188] sm:$0xff]
        %v1431 = vld [vmem:[%s1380 + $0x190] sm:$0xff]
        %v1432 = vld [vmem:[%s1380 + $0x198] sm:$0xff]
        %v1433 = vld [vmem:[%s1380 + $0x1a0] sm:$0xff]
        %v1434 = vld [vmem:[%s1380 + $0x1a8] sm:$0xff]
        %v1435 = vld [vmem:[%s1380 + $0x1b0] sm:$0xff]
        %v1436 = vld [vmem:[%s1380 + $0x1b8] sm:$0xff]
        %v1437 = vld [vmem:[%s1380 + $0x1c0] sm:$0xff]
        %v1438 = vld [vmem:[%s1380 + $0x1c8] sm:$0xff]
        %v1439 = vld [vmem:[%s1380 + $0x1d0] sm:$0xff]
        %v1440 = vld [vmem:[%s1380 + $0x1d8] sm:$0xff]
        %v1441 = vld [vmem:[%s1380 + $0x1e0] sm:$0xff]
        %v1442 = vld [vmem:[%s1380 + $0x1e8] sm:$0xff]
        %v1443 = vld [vmem:[%s1380 + $0x1f0] sm:$0xff]
        %v1444 = vld [vmem:[%s1380 + $0x1f8] sm:$0xff]
        %v1445 = vld [vmem:[%s1380 + $0x200] sm:$0xff]
        %v1446 = vld [vmem:[%s1380 + $0x208] sm:$0xff]
        %v1447 = vld [vmem:[%s1380 + $0x210] sm:$0xff]
        %v1448 = vld [vmem:[%s1380 + $0x218] sm:$0xff]
        %v1449 = vld [vmem:[%s1380 + $0x220] sm:$0xff]
        %v1450 = vld [vmem:[%s1380 + $0x228] sm:$0xff]
        %v1451 = vld [vmem:[%s1380 + $0x230] sm:$0xff]
        %v1452 = vld [vmem:[%s1380 + $0x238] sm:$0xff]
        %v1454 = vsel %vm415, %v1224, 0
        %v1457 = vsel %vm415, %v1229, 0
        %v1460 = vsel %vm415, %v1234, 0
        %v1463 = vsel %vm415, %v1239, 0
        %v1466 = vsel %vm415, %v1244, 0
        %v1469 = vsel %vm415, %v1249, 0
        %v1472 = vsel %vm415, %v1254, 0
        %v1475 = vsel %vm415, %v1259, 0
        %v1478 = vsel %vm415, %v1264, 0
        %v1481 = vsel %vm415, %v1269, 0
        %v1484 = vsel %vm415, %v1274, 0
        %v1487 = vsel %vm415, %v1279, 0
        %v1490 = vsel %vm415, %v1284, 0
        %v1493 = vsel %vm415, %v1289, 0
        %v1496 = vsel %vm415, %v1294, 0
        %v1499 = vsel %vm415, %v1299, 0
        %v1502 = vsel %vm415, %v1304, 0
        %v1505 = vsel %vm415, %v1309, 0
        %v1508 = vsel %vm415, %v1314, 0
        %v1511 = vsel %vm415, %v1319, 0
        %v1514 = vsel %vm415, %v1324, 0
        %v1517 = vsel %vm415, %v1329, 0
        %v1520 = vsel %vm415, %v1334, 0
        %v1523 = vsel %vm415, %v1339, 0
        %v1526 = vsel %vm415, %v1344, 0
        %v1529 = vsel %vm415, %v1349, 0
        %v1532 = vsel %vm415, %v1354, 0
        %v1535 = vsel %vm415, %v1359, 0
        %v1538 = vsel %vm415, %v1364, 0
        %v1541 = vsel %vm415, %v1369, 0
        %v1544 = vsel %vm415, %v1374, 0
        %v1547 = vsel %vm415, %v1379, 0
        %1549 = vmatprep.subr.mxu0 0.0
        %1550 = vmatpush1.msra.mxu0 %v1381
        %1551 = vmatprep.subr.mxu0 0.0
        %1552 = vmatpush1.msra.mxu0 %v1382
        %1553 = vmatprep.subr.mxu0 0.0
        %1554 = vmatpush1.msra.mxu0 %v1383
        %1555 = vmatprep.subr.mxu0 0.0
        %1556 = vmatpush1.msra.mxu0 %v1384
        %1557 = vmatprep.subr.mxu0 0.0
        %1558 = vmatpush1.msra.mxu0 %v1385
        %1559 = vmatprep.subr.mxu0 0.0
        %1560 = vmatpush1.msra.mxu0 %v1386
        %1561 = vmatprep.subr.mxu0 0.0
        %1562 = vmatpush1.msra.mxu0 %v1387
        %1563 = vmatprep.subr.mxu0 0.0
        %1564 = vmatpush1.msra.mxu0 %v1388
        %1565 = vmatprep.subr.mxu0 0.0
        %1566 = vmatpush1.msra.mxu0 %v1389
        %1567 = vmatprep.subr.mxu0 0.0
        %1568 = vmatpush1.msra.mxu0 %v1390
        %1569 = vmatprep.subr.mxu0 0.0
        %1570 = vmatpush1.msra.mxu0 %v1391
        %1571 = vmatprep.subr.mxu0 0.0
        %1572 = vmatpush1.msra.mxu0 %v1392
        %1573 = vmatprep.subr.mxu0 0.0
        %1574 = vmatpush1.msra.mxu0 %v1393
        %1575 = vmatprep.subr.mxu0 0.0
        %1576 = vmatpush1.msra.mxu0 %v1394
        %1577 = vmatprep.subr.mxu0 0.0
        %1578 = vmatpush1.msra.mxu0 %v1395
        %1579 = vmatprep.subr.mxu0 0.0
        %1580 = vmatpush1.msra.mxu0 %v1396
        %1581 = vmatprep.subr.mxu0 0.0
        %1582 = vmatpush1.msra.mxu0 %v1397
        %1583 = vmatprep.subr.mxu0 0.0
        %1584 = vmatpush1.msra.mxu0 %v1398
        %1585 = vmatprep.subr.mxu0 0.0
        %1586 = vmatpush1.msra.mxu0 %v1399
        %1587 = vmatprep.subr.mxu0 0.0
        %1588 = vmatpush1.msra.mxu0 %v1400
        %1589 = vmatprep.subr.mxu0 0.0
        %1590 = vmatpush1.msra.mxu0 %v1401
        %1591 = vmatprep.subr.mxu0 0.0
        %1592 = vmatpush1.msra.mxu0 %v1402
        %1593 = vmatprep.subr.mxu0 0.0
        %1594 = vmatpush1.msra.mxu0 %v1403
        %1595 = vmatprep.subr.mxu0 0.0
        %1596 = vmatpush1.msra.mxu0 %v1404
        %1597 = vmatprep.subr.mxu0 0.0
        %1598 = vmatpush1.msra.mxu0 %v1405
        %1599 = vmatprep.subr.mxu0 0.0
        %1600 = vmatpush1.msra.mxu0 %v1406
        %1601 = vmatprep.subr.mxu0 0.0
        %1602 = vmatpush1.msra.mxu0 %v1407
        %1603 = vmatprep.subr.mxu0 0.0
        %1604 = vmatpush1.msra.mxu0 %v1408
        %1605 = vmatprep.subr.mxu0 0.0
        %1606 = vmatpush1.msra.mxu0 %v1409
        %1607 = vmatprep.subr.mxu0 0.0
        %1608 = vmatpush1.msra.mxu0 %v1410
        %1609 = vmatprep.subr.mxu0 0.0
        %1610 = vmatpush1.msra.mxu0 %v1411
        %1611 = vmatprep.subr.mxu0 0.0
        %1612 = vmatpush1.msra.mxu0 %v1412
        %1613 = vmatprep.mubr.f32.mxu0 %v1221
        %1614 = vmatmul.mubr.f32.gmra.mrb[0].mxu0 %v1220
        %v1615 = vpop.f32.mrb[0].mxu0
        %v1616 = vadd.f32 0.0, %v1615
        %v1617 = vpop.f32.mrb[0].mxu0
        %1618 = vmatprep.mubr.f32.mxu0 %v1226
        %1619 = vmatmul.mubr.f32.gmra.mrb[0].mxu0 %v1225
        %v1620 = vpop.f32.mrb[0].mxu0
        %v1621 = vadd.f32 0.0, %v1620
        %v1622 = vpop.f32.mrb[0].mxu0
        %1623 = vmatprep.mubr.f32.mxu0 %v1231
        %1624 = vmatmul.mubr.f32.gmra.mrb[0].mxu0 %v1230
        %v1625 = vpop.f32.mrb[0].mxu0
        %v1626 = vadd.f32 0.0, %v1625
        %v1627 = vpop.f32.mrb[0].mxu0
        %1628 = vmatprep.mubr.f32.mxu0 %v1236
        %1629 = vmatmul.mubr.f32.gmra.mrb[0].mxu0 %v1235
        %v1630 = vpop.f32.mrb[0].mxu0
        %v1631 = vadd.f32 0.0, %v1630
        %v1632 = vpop.f32.mrb[0].mxu0
        %1633 = vmatprep.mubr.f32.mxu0 %v1241
        %1634 = vmatmul.mubr.f32.gmra.mrb[0].mxu0 %v1240
        %v1635 = vpop.f32.mrb[0].mxu0
        %v1636 = vadd.f32 0.0, %v1635
        %v1637 = vpop.f32.mrb[0].mxu0
        %1638 = vmatprep.mubr.f32.mxu0 %v1246
        %1639 = vmatmul.mubr.f32.gmra.mrb[0].mxu0 %v1245
        %v1640 = vpop.f32.mrb[0].mxu0
        %v1641 = vadd.f32 0.0, %v1640
        %v1642 = vpop.f32.mrb[0].mxu0
        %1643 = vmatprep.mubr.f32.mxu0 %v1251
        %1644 = vmatmul.mubr.f32.gmra.mrb[0].mxu0 %v1250
        %v1645 = vpop.f32.mrb[0].mxu0
        %v1646 = vadd.f32 0.0, %v1645
        %v1647 = vpop.f32.mrb[0].mxu0
        %1648 = vmatprep.mubr.f32.mxu0 %v1256
        %1649 = vmatmul.mubr.f32.gmra.mrb[0].mxu0 %v1255
        %v1650 = vpop.f32.mrb[0].mxu0
        %v1651 = vadd.f32 0.0, %v1650
        %v1652 = vpop.f32.mrb[0].mxu0
        %1653 = vmatprep.mubr.f32.mxu0 %v1261
        %1654 = vmatmul.mubr.f32.gmra.mrb[0].mxu0 %v1260
        %v1655 = vpop.f32.mrb[0].mxu0
        %v1656 = vadd.f32 0.0, %v1655
        %v1657 = vpop.f32.mrb[0].mxu0
        %1658 = vmatprep.mubr.f32.mxu0 %v1266
        %1659 = vmatmul.mubr.f32.gmra.mrb[0].mxu0 %v1265
        %v1660 = vpop.f32.mrb[0].mxu0
        %v1661 = vadd.f32 0.0, %v1660
        %v1662 = vpop.f32.mrb[0].mxu0
        %1663 = vmatprep.mubr.f32.mxu0 %v1271
        %1664 = vmatmul.mubr.f32.gmra.mrb[0].mxu0 %v1270
        %v1665 = vpop.f32.mrb[0].mxu0
        %v1666 = vadd.f32 0.0, %v1665
        %v1667 = vpop.f32.mrb[0].mxu0
        %1668 = vmatprep.mubr.f32.mxu0 %v1276
        %1669 = vmatmul.mubr.f32.gmra.mrb[0].mxu0 %v1275
        %v1670 = vpop.f32.mrb[0].mxu0
        %v1671 = vadd.f32 0.0, %v1670
        %v1672 = vpop.f32.mrb[0].mxu0
        %1673 = vmatprep.mubr.f32.mxu0 %v1281
        %1674 = vmatmul.mubr.f32.gmra.mrb[0].mxu0 %v1280
        %v1675 = vpop.f32.mrb[0].mxu0
        %v1676 = vadd.f32 0.0, %v1675
        %v1677 = vpop.f32.mrb[0].mxu0
        %1678 = vmatprep.mubr.f32.mxu0 %v1286
        %1679 = vmatmul.mubr.f32.gmra.mrb[0].mxu0 %v1285
        %v1680 = vpop.f32.mrb[0].mxu0
        %v1681 = vadd.f32 0.0, %v1680
        %v1682 = vpop.f32.mrb[0].mxu0
        %1683 = vmatprep.mubr.f32.mxu0 %v1291
        %1684 = vmatmul.mubr.f32.gmra.mrb[0].mxu0 %v1290
        %v1685 = vpop.f32.mrb[0].mxu0
        %v1686 = vadd.f32 0.0, %v1685
        %v1687 = vpop.f32.mrb[0].mxu0
        %1688 = vmatprep.mubr.f32.mxu0 %v1296
        %1689 = vmatmul.mubr.f32.gmra.mrb[0].mxu0 %v1295
        %v1690 = vpop.f32.mrb[0].mxu0
        %v1691 = vadd.f32 0.0, %v1690
        %v1692 = vpop.f32.mrb[0].mxu0
        %1693 = vmatprep.mubr.f32.mxu0 %v1301
        %1694 = vmatmul.mubr.f32.gmra.mrb[0].mxu0 %v1300
        %v1695 = vpop.f32.mrb[0].mxu0
        %v1696 = vadd.f32 0.0, %v1695
        %v1697 = vpop.f32.mrb[0].mxu0
        %1698 = vmatprep.mubr.f32.mxu0 %v1306
        %1699 = vmatmul.mubr.f32.gmra.mrb[0].mxu0 %v1305
        %v1700 = vpop.f32.mrb[0].mxu0
        %v1701 = vadd.f32 0.0, %v1700
        %v1702 = vpop.f32.mrb[0].mxu0
        %1703 = vmatprep.mubr.f32.mxu0 %v1311
        %1704 = vmatmul.mubr.f32.gmra.mrb[0].mxu0 %v1310
        %v1705 = vpop.f32.mrb[0].mxu0
        %v1706 = vadd.f32 0.0, %v1705
        %v1707 = vpop.f32.mrb[0].mxu0
        %1708 = vmatprep.mubr.f32.mxu0 %v1316
        %1709 = vmatmul.mubr.f32.gmra.mrb[0].mxu0 %v1315
        %v1710 = vpop.f32.mrb[0].mxu0
        %v1711 = vadd.f32 0.0, %v1710
        %v1712 = vpop.f32.mrb[0].mxu0
        %1713 = vmatprep.mubr.f32.mxu0 %v1321
        %1714 = vmatmul.mubr.f32.gmra.mrb[0].mxu0 %v1320
        %v1715 = vpop.f32.mrb[0].mxu0
        %v1716 = vadd.f32 0.0, %v1715
        %v1717 = vpop.f32.mrb[0].mxu0
        %1718 = vmatprep.mubr.f32.mxu0 %v1326
        %1719 = vmatmul.mubr.f32.gmra.mrb[0].mxu0 %v1325
        %v1720 = vpop.f32.mrb[0].mxu0
        %v1721 = vadd.f32 0.0, %v1720
        %v1722 = vpop.f32.mrb[0].mxu0
        %1723 = vmatprep.mubr.f32.mxu0 %v1331
        %1724 = vmatmul.mubr.f32.gmra.mrb[0].mxu0 %v1330
        %v1725 = vpop.f32.mrb[0].mxu0
        %v1726 = vadd.f32 0.0, %v1725
        %v1727 = vpop.f32.mrb[0].mxu0
        %1728 = vmatprep.mubr.f32.mxu0 %v1336
        %1729 = vmatmul.mubr.f32.gmra.mrb[0].mxu0 %v1335
        %v1730 = vpop.f32.mrb[0].mxu0
        %v1731 = vadd.f32 0.0, %v1730
        %v1732 = vpop.f32.mrb[0].mxu0
        %1733 = vmatprep.mubr.f32.mxu0 %v1341
        %1734 = vmatmul.mubr.f32.gmra.mrb[0].mxu0 %v1340
        %v1735 = vpop.f32.mrb[0].mxu0
        %v1736 = vadd.f32 0.0, %v1735
        %v1737 = vpop.f32.mrb[0].mxu0
        %1738 = vmatprep.mubr.f32.mxu0 %v1346
        %1739 = vmatmul.mubr.f32.gmra.mrb[0].mxu0 %v1345
        %v1740 = vpop.f32.mrb[0].mxu0
        %v1741 = vadd.f32 0.0, %v1740
        %v1742 = vpop.f32.mrb[0].mxu0
        %1743 = vmatprep.mubr.f32.mxu0 %v1351
        %1744 = vmatmul.mubr.f32.gmra.mrb[0].mxu0 %v1350
        %v1745 = vpop.f32.mrb[0].mxu0
        %v1746 = vadd.f32 0.0, %v1745
        %v1747 = vpop.f32.mrb[0].mxu0
        %1748 = vmatprep.mubr.f32.mxu0 %v1356
        %1749 = vmatmul.mubr.f32.gmra.mrb[0].mxu0 %v1355
        %v1750 = vpop.f32.mrb[0].mxu0
        %v1751 = vadd.f32 0.0, %v1750
        %v1752 = vpop.f32.mrb[0].mxu0
        %1753 = vmatprep.mubr.f32.mxu0 %v1361
        %1754 = vmatmul.mubr.f32.gmra.mrb[0].mxu0 %v1360
        %v1755 = vpop.f32.mrb[0].mxu0
        %v1756 = vadd.f32 0.0, %v1755
        %v1757 = vpop.f32.mrb[0].mxu0
        %1758 = vmatprep.mubr.f32.mxu0 %v1366
        %1759 = vmatmul.mubr.f32.gmra.mrb[0].mxu0 %v1365
        %v1760 = vpop.f32.mrb[0].mxu0
        %v1761 = vadd.f32 0.0, %v1760
        %v1762 = vpop.f32.mrb[0].mxu0
        %1763 = vmatprep.mubr.f32.mxu0 %v1371
        %1764 = vmatmul.mubr.f32.gmra.mrb[0].mxu0 %v1370
        %v1765 = vpop.f32.mrb[0].mxu0
        %v1766 = vadd.f32 0.0, %v1765
        %v1767 = vpop.f32.mrb[0].mxu0
        %1768 = vmatprep.mubr.f32.mxu0 %v1376
        %1769 = vmatmul.mubr.f32.gmra.mrb[0].mxu0 %v1375
        %v1770 = vpop.f32.mrb[0].mxu0
        %v1771 = vadd.f32 0.0, %v1770
        %v1772 = vpop.f32.mrb[0].mxu0
        %1773 = vdwg.mxu0
        %1774 = vmatprep.subr.mxu0 0.0
        %1775 = vmatpush1.msra.mxu0 %v1413
        %1776 = vmatprep.subr.mxu0 0.0
        %1777 = vmatpush1.msra.mxu0 %v1414
        %1778 = vmatprep.subr.mxu0 0.0
        %1779 = vmatpush1.msra.mxu0 %v1415
        %1780 = vmatprep.subr.mxu0 0.0
        %1781 = vmatpush1.msra.mxu0 %v1416
        %1782 = vmatprep.subr.mxu0 0.0
        %1783 = vmatpush1.msra.mxu0 %v1417
        %1784 = vmatprep.subr.mxu0 0.0
        %1785 = vmatpush1.msra.mxu0 %v1418
        %1786 = vmatprep.subr.mxu0 0.0
        %1787 = vmatpush1.msra.mxu0 %v1419
        %1788 = vmatprep.subr.mxu0 0.0
        %1789 = vmatpush1.msra.mxu0 %v1420
        %1790 = vmatprep.subr.mxu0 0.0
        %1791 = vmatpush1.msra.mxu0 %v1421
        %1792 = vmatprep.subr.mxu0 0.0
        %1793 = vmatpush1.msra.mxu0 %v1422
        %1794 = vmatprep.subr.mxu0 0.0
        %1795 = vmatpush1.msra.mxu0 %v1423
        %1796 = vmatprep.subr.mxu0 0.0
        %1797 = vmatpush1.msra.mxu0 %v1424
        %1798 = vmatprep.subr.mxu0 0.0
        %1799 = vmatpush1.msra.mxu0 %v1425
        %1800 = vmatprep.subr.mxu0 0.0
        %1801 = vmatpush1.msra.mxu0 %v1426
        %1802 = vmatprep.subr.mxu0 0.0
        %1803 = vmatpush1.msra.mxu0 %v1427
        %1804 = vmatprep.subr.mxu0 0.0
        %1805 = vmatpush1.msra.mxu0 %v1428
        %1806 = vmatprep.subr.mxu0 0.0
        %1807 = vmatpush1.msra.mxu0 %v1429
        %1808 = vmatprep.subr.mxu0 0.0
        %1809 = vmatpush1.msra.mxu0 %v1430
        %1810 = vmatprep.subr.mxu0 0.0
        %1811 = vmatpush1.msra.mxu0 %v1431
        %1812 = vmatprep.subr.mxu0 0.0
        %1813 = vmatpush1.msra.mxu0 %v1432
        %1814 = vmatprep.subr.mxu0 0.0
        %1815 = vmatpush1.msra.mxu0 %v1433
        %1816 = vmatprep.subr.mxu0 0.0
        %1817 = vmatpush1.msra.mxu0 %v1434
        %1818 = vmatprep.subr.mxu0 0.0
        %1819 = vmatpush1.msra.mxu0 %v1435
        %1820 = vmatprep.subr.mxu0 0.0
        %1821 = vmatpush1.msra.mxu0 %v1436
        %1822 = vmatprep.subr.mxu0 0.0
        %1823 = vmatpush1.msra.mxu0 %v1437
        %1824 = vmatprep.subr.mxu0 0.0
        %1825 = vmatpush1.msra.mxu0 %v1438
        %1826 = vmatprep.subr.mxu0 0.0
        %1827 = vmatpush1.msra.mxu0 %v1439
        %1828 = vmatprep.subr.mxu0 0.0
        %1829 = vmatpush1.msra.mxu0 %v1440
        %1830 = vmatprep.subr.mxu0 0.0
        %1831 = vmatpush1.msra.mxu0 %v1441
        %1832 = vmatprep.subr.mxu0 0.0
        %1833 = vmatpush1.msra.mxu0 %v1442
        %1834 = vmatprep.subr.mxu0 0.0
        %1835 = vmatpush1.msra.mxu0 %v1443
        %1836 = vmatprep.subr.mxu0 0.0
        %1837 = vmatpush1.msra.mxu0 %v1444
        %1838 = vmatprep.mubr.f32.mxu0 %v1223
        %1839 = vmatmul.mubr.f32.gmra.mrb[0].mxu0 %v1222
        %v1840 = vpop.f32.mrb[0].mxu0
        %v1841 = vadd.f32 %v1616, %v1840
        %v1842 = vpop.f32.mrb[0].mxu0
        %1843 = vmatprep.mubr.f32.mxu0 %v1228
        %1844 = vmatmul.mubr.f32.gmra.mrb[0].mxu0 %v1227
        %v1845 = vpop.f32.mrb[0].mxu0
        %v1846 = vadd.f32 %v1621, %v1845
        %v1847 = vpop.f32.mrb[0].mxu0
        %1848 = vmatprep.mubr.f32.mxu0 %v1233
        %1849 = vmatmul.mubr.f32.gmra.mrb[0].mxu0 %v1232
        %v1850 = vpop.f32.mrb[0].mxu0
        %v1851 = vadd.f32 %v1626, %v1850
        %v1852 = vpop.f32.mrb[0].mxu0
        %1853 = vmatprep.mubr.f32.mxu0 %v1238
        %1854 = vmatmul.mubr.f32.gmra.mrb[0].mxu0 %v1237
        %v1855 = vpop.f32.mrb[0].mxu0
        %v1856 = vadd.f32 %v1631, %v1855
        %v1857 = vpop.f32.mrb[0].mxu0
        %1858 = vmatprep.mubr.f32.mxu0 %v1243
        %1859 = vmatmul.mubr.f32.gmra.mrb[0].mxu0 %v1242
        %v1860 = vpop.f32.mrb[0].mxu0
        %v1861 = vadd.f32 %v1636, %v1860
        %v1862 = vpop.f32.mrb[0].mxu0
        %1863 = vmatprep.mubr.f32.mxu0 %v1248
        %1864 = vmatmul.mubr.f32.gmra.mrb[0].mxu0 %v1247
        %v1865 = vpop.f32.mrb[0].mxu0
        %v1866 = vadd.f32 %v1641, %v1865
        %v1867 = vpop.f32.mrb[0].mxu0
        %1868 = vmatprep.mubr.f32.mxu0 %v1253
        %1869 = vmatmul.mubr.f32.gmra.mrb[0].mxu0 %v1252
        %v1870 = vpop.f32.mrb[0].mxu0
        %v1871 = vadd.f32 %v1646, %v1870
        %v1872 = vpop.f32.mrb[0].mxu0
        %1873 = vmatprep.mubr.f32.mxu0 %v1258
        %1874 = vmatmul.mubr.f32.gmra.mrb[0].mxu0 %v1257
        %v1875 = vpop.f32.mrb[0].mxu0
        %v1876 = vadd.f32 %v1651, %v1875
        %v1877 = vpop.f32.mrb[0].mxu0
        %1878 = vmatprep.mubr.f32.mxu0 %v1263
        %1879 = vmatmul.mubr.f32.gmra.mrb[0].mxu0 %v1262
        %v1880 = vpop.f32.mrb[0].mxu0
        %v1881 = vadd.f32 %v1656, %v1880
        %v1882 = vpop.f32.mrb[0].mxu0
        %1883 = vmatprep.mubr.f32.mxu0 %v1268
        %1884 = vmatmul.mubr.f32.gmra.mrb[0].mxu0 %v1267
        %v1885 = vpop.f32.mrb[0].mxu0
        %v1886 = vadd.f32 %v1661, %v1885
        %v1887 = vpop.f32.mrb[0].mxu0
        %1888 = vmatprep.mubr.f32.mxu0 %v1273
        %1889 = vmatmul.mubr.f32.gmra.mrb[0].mxu0 %v1272
        %v1890 = vpop.f32.mrb[0].mxu0
        %v1891 = vadd.f32 %v1666, %v1890
        %v1892 = vpop.f32.mrb[0].mxu0
        %1893 = vmatprep.mubr.f32.mxu0 %v1278
        %1894 = vmatmul.mubr.f32.gmra.mrb[0].mxu0 %v1277
        %v1895 = vpop.f32.mrb[0].mxu0
        %v1896 = vadd.f32 %v1671, %v1895
        %v1897 = vpop.f32.mrb[0].mxu0
        %1898 = vmatprep.mubr.f32.mxu0 %v1283
        %1899 = vmatmul.mubr.f32.gmra.mrb[0].mxu0 %v1282
        %v1900 = vpop.f32.mrb[0].mxu0
        %v1901 = vadd.f32 %v1676, %v1900
        %v1902 = vpop.f32.mrb[0].mxu0
        %1903 = vmatprep.mubr.f32.mxu0 %v1288
        %1904 = vmatmul.mubr.f32.gmra.mrb[0].mxu0 %v1287
        %v1905 = vpop.f32.mrb[0].mxu0
        %v1906 = vadd.f32 %v1681, %v1905
        %v1907 = vpop.f32.mrb[0].mxu0
        %1908 = vmatprep.mubr.f32.mxu0 %v1293
        %1909 = vmatmul.mubr.f32.gmra.mrb[0].mxu0 %v1292
        %v1910 = vpop.f32.mrb[0].mxu0
        %v1911 = vadd.f32 %v1686, %v1910
        %v1912 = vpop.f32.mrb[0].mxu0
        %1913 = vmatprep.mubr.f32.mxu0 %v1298
        %1914 = vmatmul.mubr.f32.gmra.mrb[0].mxu0 %v1297
        %v1915 = vpop.f32.mrb[0].mxu0
        %v1916 = vadd.f32 %v1691, %v1915
        %v1917 = vpop.f32.mrb[0].mxu0
        %1918 = vmatprep.mubr.f32.mxu0 %v1303
        %1919 = vmatmul.mubr.f32.gmra.mrb[0].mxu0 %v1302
        %v1920 = vpop.f32.mrb[0].mxu0
        %v1921 = vadd.f32 %v1696, %v1920
        %v1922 = vpop.f32.mrb[0].mxu0
        %1923 = vmatprep.mubr.f32.mxu0 %v1308
        %1924 = vmatmul.mubr.f32.gmra.mrb[0].mxu0 %v1307
        %v1925 = vpop.f32.mrb[0].mxu0
        %v1926 = vadd.f32 %v1701, %v1925
        %v1927 = vpop.f32.mrb[0].mxu0
        %1928 = vmatprep.mubr.f32.mxu0 %v1313
        %1929 = vmatmul.mubr.f32.gmra.mrb[0].mxu0 %v1312
        %v1930 = vpop.f32.mrb[0].mxu0
        %v1931 = vadd.f32 %v1706, %v1930
        %v1932 = vpop.f32.mrb[0].mxu0
        %1933 = vmatprep.mubr.f32.mxu0 %v1318
        %1934 = vmatmul.mubr.f32.gmra.mrb[0].mxu0 %v1317
        %v1935 = vpop.f32.mrb[0].mxu0
        %v1936 = vadd.f32 %v1711, %v1935
        %v1937 = vpop.f32.mrb[0].mxu0
        %1938 = vmatprep.mubr.f32.mxu0 %v1323
        %1939 = vmatmul.mubr.f32.gmra.mrb[0].mxu0 %v1322
        %v1940 = vpop.f32.mrb[0].mxu0
        %v1941 = vadd.f32 %v1716, %v1940
        %v1942 = vpop.f32.mrb[0].mxu0
        %1943 = vmatprep.mubr.f32.mxu0 %v1328
        %1944 = vmatmul.mubr.f32.gmra.mrb[0].mxu0 %v1327
        %v1945 = vpop.f32.mrb[0].mxu0
        %v1946 = vadd.f32 %v1721, %v1945
        %v1947 = vpop.f32.mrb[0].mxu0
        %1948 = vmatprep.mubr.f32.mxu0 %v1333
        %1949 = vmatmul.mubr.f32.gmra.mrb[0].mxu0 %v1332
        %v1950 = vpop.f32.mrb[0].mxu0
        %v1951 = vadd.f32 %v1726, %v1950
        %v1952 = vpop.f32.mrb[0].mxu0
        %1953 = vmatprep.mubr.f32.mxu0 %v1338
        %1954 = vmatmul.mubr.f32.gmra.mrb[0].mxu0 %v1337
        %v1955 = vpop.f32.mrb[0].mxu0
        %v1956 = vadd.f32 %v1731, %v1955
        %v1957 = vpop.f32.mrb[0].mxu0
        %1958 = vmatprep.mubr.f32.mxu0 %v1343
        %1959 = vmatmul.mubr.f32.gmra.mrb[0].mxu0 %v1342
        %v1960 = vpop.f32.mrb[0].mxu0
        %v1961 = vadd.f32 %v1736, %v1960
        %v1962 = vpop.f32.mrb[0].mxu0
        %1963 = vmatprep.mubr.f32.mxu0 %v1348
        %1964 = vmatmul.mubr.f32.gmra.mrb[0].mxu0 %v1347
        %v1965 = vpop.f32.mrb[0].mxu0
        %v1966 = vadd.f32 %v1741, %v1965
        %v1967 = vpop.f32.mrb[0].mxu0
        %1968 = vmatprep.mubr.f32.mxu0 %v1353
        %1969 = vmatmul.mubr.f32.gmra.mrb[0].mxu0 %v1352
        %v1970 = vpop.f32.mrb[0].mxu0
        %v1971 = vadd.f32 %v1746, %v1970
        %v1972 = vpop.f32.mrb[0].mxu0
        %1973 = vmatprep.mubr.f32.mxu0 %v1358
        %1974 = vmatmul.mubr.f32.gmra.mrb[0].mxu0 %v1357
        %v1975 = vpop.f32.mrb[0].mxu0
        %v1976 = vadd.f32 %v1751, %v1975
        %v1977 = vpop.f32.mrb[0].mxu0
        %1978 = vmatprep.mubr.f32.mxu0 %v1363
        %1979 = vmatmul.mubr.f32.gmra.mrb[0].mxu0 %v1362
        %v1980 = vpop.f32.mrb[0].mxu0
        %v1981 = vadd.f32 %v1756, %v1980
        %v1982 = vpop.f32.mrb[0].mxu0
        %1983 = vmatprep.mubr.f32.mxu0 %v1368
        %1984 = vmatmul.mubr.f32.gmra.mrb[0].mxu0 %v1367
        %v1985 = vpop.f32.mrb[0].mxu0
        %v1986 = vadd.f32 %v1761, %v1985
        %v1987 = vpop.f32.mrb[0].mxu0
        %1988 = vmatprep.mubr.f32.mxu0 %v1373
        %1989 = vmatmul.mubr.f32.gmra.mrb[0].mxu0 %v1372
        %v1990 = vpop.f32.mrb[0].mxu0
        %v1991 = vadd.f32 %v1766, %v1990
        %v1992 = vpop.f32.mrb[0].mxu0
        %1993 = vmatprep.mubr.f32.mxu0 %v1378
        %1994 = vmatmul.mubr.f32.gmra.mrb[0].mxu0 %v1377
        %v1995 = vpop.f32.mrb[0].mxu0
        %v1996 = vadd.f32 %v1771, %v1995
        %v1997 = vpop.f32.mrb[0].mxu0
        %1998 = vdwg.mxu0
        %1999 = vmatprep.subr.mxu0 0.0
        %2000 = vmatpush1.msra.mxu0 %v1445
        %2001 = vmatprep.subr.mxu0 0.0
        %2002 = vmatpush1.msra.mxu0 %v1446
        %2003 = vmatprep.subr.mxu0 0.0
        %2004 = vmatpush1.msra.mxu0 %v1447
        %2005 = vmatprep.subr.mxu0 0.0
        %2006 = vmatpush1.msra.mxu0 %v1448
        %2007 = vmatprep.subr.mxu0 0.0
        %2008 = vmatpush1.msra.mxu0 %v1449
        %2009 = vmatprep.subr.mxu0 0.0
        %2010 = vmatpush1.msra.mxu0 %v1450
        %2011 = vmatprep.subr.mxu0 0.0
        %2012 = vmatpush1.msra.mxu0 %v1451
        %2013 = vmatprep.subr.mxu0 0.0
        %2014 = vmatpush1.msra.mxu0 %v1452
        %2015 = vmatprep.subr.mxu0 0.0
        %2016 = vmatpush1.msra.mxu0 0.0
        %2017 = vmatprep.subr.mxu0 0.0
        %2018 = vmatpush1.msra.mxu0 0.0
        %2019 = vmatprep.subr.mxu0 0.0
        %2020 = vmatpush1.msra.mxu0 0.0
        %2021 = vmatprep.subr.mxu0 0.0
        %2022 = vmatpush1.msra.mxu0 0.0
        %2023 = vmatprep.subr.mxu0 0.0
        %2024 = vmatpush1.msra.mxu0 0.0
        %2025 = vmatprep.subr.mxu0 0.0
        %2026 = vmatpush1.msra.mxu0 0.0
        %2027 = vmatprep.subr.mxu0 0.0
        %2028 = vmatpush1.msra.mxu0 0.0
        %2029 = vmatprep.subr.mxu0 0.0
        %2030 = vmatpush1.msra.mxu0 0.0
        %2031 = vmatprep.subr.mxu0 0.0
        %2032 = vmatpush1.msra.mxu0 0.0
        %2033 = vmatprep.subr.mxu0 0.0
        %2034 = vmatpush1.msra.mxu0 0.0
        %2035 = vmatprep.subr.mxu0 0.0
        %2036 = vmatpush1.msra.mxu0 0.0
        %2037 = vmatprep.subr.mxu0 0.0
        %2038 = vmatpush1.msra.mxu0 0.0
        %2039 = vmatprep.subr.mxu0 0.0
        %2040 = vmatpush1.msra.mxu0 0.0
        %2041 = vmatprep.subr.mxu0 0.0
        %2042 = vmatpush1.msra.mxu0 0.0
        %2043 = vmatprep.subr.mxu0 0.0
        %2044 = vmatpush1.msra.mxu0 0.0
        %2045 = vmatprep.subr.mxu0 0.0
        %2046 = vmatpush1.msra.mxu0 0.0
        %2047 = vmatprep.subr.mxu0 0.0
        %2048 = vmatpush1.msra.mxu0 0.0
        %2049 = vmatprep.subr.mxu0 0.0
        %2050 = vmatpush1.msra.mxu0 0.0
        %2051 = vmatprep.subr.mxu0 0.0
        %2052 = vmatpush1.msra.mxu0 0.0
        %2053 = vmatprep.subr.mxu0 0.0
        %2054 = vmatpush1.msra.mxu0 0.0
        %2055 = vmatprep.subr.mxu0 0.0
        %2056 = vmatpush1.msra.mxu0 0.0
        %2057 = vmatprep.subr.mxu0 0.0
        %2058 = vmatpush1.msra.mxu0 0.0
        %2059 = vmatprep.subr.mxu0 0.0
        %2060 = vmatpush1.msra.mxu0 0.0
        %2061 = vmatprep.subr.mxu0 0.0
        %2062 = vmatpush1.msra.mxu0 0.0
        %2063 = vmatprep.mubr.f32.mxu0 0.0
        %2064 = vmatmul.mubr.f32.gmra.mrb[0].mxu0 %v1454
        %v2065 = vpop.f32.mrb[0].mxu0
        %v2066 = vadd.f32 %v1841, %v2065
        %v2067 = vpop.f32.mrb[0].mxu0
        %2068 = vmatprep.mubr.f32.mxu0 0.0
        %2069 = vmatmul.mubr.f32.gmra.mrb[0].mxu0 %v1457
        %v2070 = vpop.f32.mrb[0].mxu0
        %v2071 = vadd.f32 %v1846, %v2070
        %v2072 = vpop.f32.mrb[0].mxu0
        %2073 = vmatprep.mubr.f32.mxu0 0.0
        %2074 = vmatmul.mubr.f32.gmra.mrb[0].mxu0 %v1460
        %v2075 = vpop.f32.mrb[0].mxu0
        %v2076 = vadd.f32 %v1851, %v2075
        %v2077 = vpop.f32.mrb[0].mxu0
        %2078 = vmatprep.mubr.f32.mxu0 0.0
        %2079 = vmatmul.mubr.f32.gmra.mrb[0].mxu0 %v1463
        %v2080 = vpop.f32.mrb[0].mxu0
        %v2081 = vadd.f32 %v1856, %v2080
        %v2082 = vpop.f32.mrb[0].mxu0
        %2083 = vmatprep.mubr.f32.mxu0 0.0
        %2084 = vmatmul.mubr.f32.gmra.mrb[0].mxu0 %v1466
        %v2085 = vpop.f32.mrb[0].mxu0
        %v2086 = vadd.f32 %v1861, %v2085
        %v2087 = vpop.f32.mrb[0].mxu0
        %2088 = vmatprep.mubr.f32.mxu0 0.0
        %2089 = vmatmul.mubr.f32.gmra.mrb[0].mxu0 %v1469
        %v2090 = vpop.f32.mrb[0].mxu0
        %v2091 = vadd.f32 %v1866, %v2090
        %v2092 = vpop.f32.mrb[0].mxu0
        %2093 = vmatprep.mubr.f32.mxu0 0.0
        %2094 = vmatmul.mubr.f32.gmra.mrb[0].mxu0 %v1472
        %v2095 = vpop.f32.mrb[0].mxu0
        %v2096 = vadd.f32 %v1871, %v2095
        %v2097 = vpop.f32.mrb[0].mxu0
        %2098 = vmatprep.mubr.f32.mxu0 0.0
        %2099 = vmatmul.mubr.f32.gmra.mrb[0].mxu0 %v1475
        %v2100 = vpop.f32.mrb[0].mxu0
        %v2101 = vadd.f32 %v1876, %v2100
        %v2102 = vpop.f32.mrb[0].mxu0
        %2103 = vmatprep.mubr.f32.mxu0 0.0
        %2104 = vmatmul.mubr.f32.gmra.mrb[0].mxu0 %v1478
        %v2105 = vpop.f32.mrb[0].mxu0
        %v2106 = vadd.f32 %v1881, %v2105
        %v2107 = vpop.f32.mrb[0].mxu0
        %2108 = vmatprep.mubr.f32.mxu0 0.0
        %2109 = vmatmul.mubr.f32.gmra.mrb[0].mxu0 %v1481
        %v2110 = vpop.f32.mrb[0].mxu0
        %v2111 = vadd.f32 %v1886, %v2110
        %v2112 = vpop.f32.mrb[0].mxu0
        %2113 = vmatprep.mubr.f32.mxu0 0.0
        %2114 = vmatmul.mubr.f32.gmra.mrb[0].mxu0 %v1484
        %v2115 = vpop.f32.mrb[0].mxu0
        %v2116 = vadd.f32 %v1891, %v2115
        %v2117 = vpop.f32.mrb[0].mxu0
        %2118 = vmatprep.mubr.f32.mxu0 0.0
        %2119 = vmatmul.mubr.f32.gmra.mrb[0].mxu0 %v1487
        %v2120 = vpop.f32.mrb[0].mxu0
        %v2121 = vadd.f32 %v1896, %v2120
        %v2122 = vpop.f32.mrb[0].mxu0
        %2123 = vmatprep.mubr.f32.mxu0 0.0
        %2124 = vmatmul.mubr.f32.gmra.mrb[0].mxu0 %v1490
        %v2125 = vpop.f32.mrb[0].mxu0
        %v2126 = vadd.f32 %v1901, %v2125
        %v2127 = vpop.f32.mrb[0].mxu0
        %2128 = vmatprep.mubr.f32.mxu0 0.0
        %2129 = vmatmul.mubr.f32.gmra.mrb[0].mxu0 %v1493
        %v2130 = vpop.f32.mrb[0].mxu0
        %v2131 = vadd.f32 %v1906, %v2130
        %v2132 = vpop.f32.mrb[0].mxu0
        %2133 = vmatprep.mubr.f32.mxu0 0.0
        %2134 = vmatmul.mubr.f32.gmra.mrb[0].mxu0 %v1496
        %v2135 = vpop.f32.mrb[0].mxu0
        %v2136 = vadd.f32 %v1911, %v2135
        %v2137 = vpop.f32.mrb[0].mxu0
        %2138 = vmatprep.mubr.f32.mxu0 0.0
        %2139 = vmatmul.mubr.f32.gmra.mrb[0].mxu0 %v1499
        %v2140 = vpop.f32.mrb[0].mxu0
        %v2141 = vadd.f32 %v1916, %v2140
        %v2142 = vpop.f32.mrb[0].mxu0
        %2143 = vmatprep.mubr.f32.mxu0 0.0
        %2144 = vmatmul.mubr.f32.gmra.mrb[0].mxu0 %v1502
        %v2145 = vpop.f32.mrb[0].mxu0
        %v2146 = vadd.f32 %v1921, %v2145
        %v2147 = vpop.f32.mrb[0].mxu0
        %2148 = vmatprep.mubr.f32.mxu0 0.0
        %2149 = vmatmul.mubr.f32.gmra.mrb[0].mxu0 %v1505
        %v2150 = vpop.f32.mrb[0].mxu0
        %v2151 = vadd.f32 %v1926, %v2150
        %v2152 = vpop.f32.mrb[0].mxu0
        %2153 = vmatprep.mubr.f32.mxu0 0.0
        %2154 = vmatmul.mubr.f32.gmra.mrb[0].mxu0 %v1508
        %v2155 = vpop.f32.mrb[0].mxu0
        %v2156 = vadd.f32 %v1931, %v2155
        %v2157 = vpop.f32.mrb[0].mxu0
        %2158 = vmatprep.mubr.f32.mxu0 0.0
        %2159 = vmatmul.mubr.f32.gmra.mrb[0].mxu0 %v1511
        %v2160 = vpop.f32.mrb[0].mxu0
        %v2161 = vadd.f32 %v1936, %v2160
        %v2162 = vpop.f32.mrb[0].mxu0
        %2163 = vmatprep.mubr.f32.mxu0 0.0
        %2164 = vmatmul.mubr.f32.gmra.mrb[0].mxu0 %v1514
        %v2165 = vpop.f32.mrb[0].mxu0
        %v2166 = vadd.f32 %v1941, %v2165
        %v2167 = vpop.f32.mrb[0].mxu0
        %2168 = vmatprep.mubr.f32.mxu0 0.0
        %2169 = vmatmul.mubr.f32.gmra.mrb[0].mxu0 %v1517
        %v2170 = vpop.f32.mrb[0].mxu0
        %v2171 = vadd.f32 %v1946, %v2170
        %v2172 = vpop.f32.mrb[0].mxu0
        %2173 = vmatprep.mubr.f32.mxu0 0.0
        %2174 = vmatmul.mubr.f32.gmra.mrb[0].mxu0 %v1520
        %v2175 = vpop.f32.mrb[0].mxu0
        %v2176 = vadd.f32 %v1951, %v2175
        %v2177 = vpop.f32.mrb[0].mxu0
        %2178 = vmatprep.mubr.f32.mxu0 0.0
        %2179 = vmatmul.mubr.f32.gmra.mrb[0].mxu0 %v1523
        %v2180 = vpop.f32.mrb[0].mxu0
        %v2181 = vadd.f32 %v1956, %v2180
        %v2182 = vpop.f32.mrb[0].mxu0
        %2183 = vmatprep.mubr.f32.mxu0 0.0
        %2184 = vmatmul.mubr.f32.gmra.mrb[0].mxu0 %v1526
        %v2185 = vpop.f32.mrb[0].mxu0
        %v2186 = vadd.f32 %v1961, %v2185
        %v2187 = vpop.f32.mrb[0].mxu0
        %2188 = vmatprep.mubr.f32.mxu0 0.0
        %2189 = vmatmul.mubr.f32.gmra.mrb[0].mxu0 %v1529
        %v2190 = vpop.f32.mrb[0].mxu0
        %v2191 = vadd.f32 %v1966, %v2190
        %v2192 = vpop.f32.mrb[0].mxu0
        %2193 = vmatprep.mubr.f32.mxu0 0.0
        %2194 = vmatmul.mubr.f32.gmra.mrb[0].mxu0 %v1532
        %v2195 = vpop.f32.mrb[0].mxu0
        %v2196 = vadd.f32 %v1971, %v2195
        %v2197 = vpop.f32.mrb[0].mxu0
        %2198 = vmatprep.mubr.f32.mxu0 0.0
        %2199 = vmatmul.mubr.f32.gmra.mrb[0].mxu0 %v1535
        %v2200 = vpop.f32.mrb[0].mxu0
        %v2201 = vadd.f32 %v1976, %v2200
        %v2202 = vpop.f32.mrb[0].mxu0
        %2203 = vmatprep.mubr.f32.mxu0 0.0
        %2204 = vmatmul.mubr.f32.gmra.mrb[0].mxu0 %v1538
        %v2205 = vpop.f32.mrb[0].mxu0
        %v2206 = vadd.f32 %v1981, %v2205
        %v2207 = vpop.f32.mrb[0].mxu0
        %2208 = vmatprep.mubr.f32.mxu0 0.0
        %2209 = vmatmul.mubr.f32.gmra.mrb[0].mxu0 %v1541
        %v2210 = vpop.f32.mrb[0].mxu0
        %v2211 = vadd.f32 %v1986, %v2210
        %v2212 = vpop.f32.mrb[0].mxu0
        %2213 = vmatprep.mubr.f32.mxu0 0.0
        %2214 = vmatmul.mubr.f32.gmra.mrb[0].mxu0 %v1544
        %v2215 = vpop.f32.mrb[0].mxu0
        %v2216 = vadd.f32 %v1991, %v2215
        %v2217 = vpop.f32.mrb[0].mxu0
        %2218 = vmatprep.mubr.f32.mxu0 0.0
        %2219 = vmatmul.mubr.f32.gmra.mrb[0].mxu0 %v1547
        %v2220 = vpop.f32.mrb[0].mxu0
        %v2221 = vadd.f32 %v1996, %v2220
        %v2222 = vpop.f32.mrb[0].mxu0
        %2223 = vdwg.mxu0
        %v2224 = vld [vmem:[#allocation2] sm:$0xff]
        %v2225 = vld [vmem:[#allocation2 + $0x8] sm:$0xff]
        %v2226 = vld [vmem:[#allocation2 + $0x10] sm:$0xff]
        %v2227 = vld [vmem:[#allocation2 + $0x18] sm:$0xff]
        %v2228 = vld [vmem:[#allocation2 + $0x20] sm:$0xff]
        %v2229 = vld [vmem:[#allocation2 + $0x28] sm:$0xff]
        %v2230 = vld [vmem:[#allocation2 + $0x30] sm:$0xff]
        %v2231 = vld [vmem:[#allocation2 + $0x38] sm:$0xff]
        %v2232 = vld [vmem:[#allocation2 + $0x40] sm:$0xff]
        %v2233 = vld [vmem:[#allocation2 + $0x48] sm:$0xff]
        %v2234 = vld [vmem:[#allocation2 + $0x50] sm:$0xff]
        %v2235 = vld [vmem:[#allocation2 + $0x58] sm:$0xff]
        %v2236 = vld [vmem:[#allocation2 + $0x60] sm:$0xff]
        %v2237 = vld [vmem:[#allocation2 + $0x68] sm:$0xff]
        %v2238 = vld [vmem:[#allocation2 + $0x70] sm:$0xff]
        %v2239 = vld [vmem:[#allocation2 + $0x78] sm:$0xff]
        %v2240 = vld [vmem:[#allocation2 + $0x80] sm:$0xff]
        %v2241 = vld [vmem:[#allocation2 + $0x88] sm:$0xff]
        %v2242 = vld [vmem:[#allocation2 + $0x90] sm:$0xff]
        %v2243 = vld [vmem:[#allocation2 + $0x98] sm:$0xff]
        %v2244 = vld [vmem:[#allocation2 + $0xa0] sm:$0xff]
        %v2245 = vld [vmem:[#allocation2 + $0xa8] sm:$0xff]
        %v2246 = vld [vmem:[#allocation2 + $0xb0] sm:$0xff]
        %v2247 = vld [vmem:[#allocation2 + $0xb8] sm:$0xff]
        %v2248 = vld [vmem:[#allocation2 + $0xc0] sm:$0xff]
        %v2249 = vld [vmem:[#allocation2 + $0xc8] sm:$0xff]
        %v2250 = vld [vmem:[#allocation2 + $0xd0] sm:$0xff]
        %v2251 = vld [vmem:[#allocation2 + $0xd8] sm:$0xff]
        %v2252 = vld [vmem:[#allocation2 + $0xe0] sm:$0xff]
        %v2253 = vld [vmem:[#allocation2 + $0xe8] sm:$0xff]
        %v2254 = vld [vmem:[#allocation2 + $0xf0] sm:$0xff]
        %v2255 = vld [vmem:[#allocation2 + $0xf8] sm:$0xff]
        %v2256 = vadd.f32 %v2224, %v2066
        %v2257 = vadd.f32 %v2225, %v2071
        %v2258 = vadd.f32 %v2226, %v2076
        %v2259 = vadd.f32 %v2227, %v2081
        %v2260 = vadd.f32 %v2228, %v2086
        %v2261 = vadd.f32 %v2229, %v2091
        %v2262 = vadd.f32 %v2230, %v2096
        %v2263 = vadd.f32 %v2231, %v2101
        %v2264 = vadd.f32 %v2232, %v2106
        %v2265 = vadd.f32 %v2233, %v2111
        %v2266 = vadd.f32 %v2234, %v2116
        %v2267 = vadd.f32 %v2235, %v2121
        %v2268 = vadd.f32 %v2236, %v2126
        %v2269 = vadd.f32 %v2237, %v2131
        %v2270 = vadd.f32 %v2238, %v2136
        %v2271 = vadd.f32 %v2239, %v2141
        %v2272 = vadd.f32 %v2240, %v2146
        %v2273 = vadd.f32 %v2241, %v2151
        %v2274 = vadd.f32 %v2242, %v2156
        %v2275 = vadd.f32 %v2243, %v2161
        %v2276 = vadd.f32 %v2244, %v2166
        %v2277 = vadd.f32 %v2245, %v2171
        %v2278 = vadd.f32 %v2246, %v2176
        %v2279 = vadd.f32 %v2247, %v2181
        %v2280 = vadd.f32 %v2248, %v2186
        %v2281 = vadd.f32 %v2249, %v2191
        %v2282 = vadd.f32 %v2250, %v2196
        %v2283 = vadd.f32 %v2251, %v2201
        %v2284 = vadd.f32 %v2252, %v2206
        %v2285 = vadd.f32 %v2253, %v2211
        %v2286 = vadd.f32 %v2254, %v2216
        %v2287 = vadd.f32 %v2255, %v2221
        %2288 = vst.msk [vmem:[#allocation2] sm:$0xff] %vm415, %v2256
        %2289 = vst.msk [vmem:[#allocation2 + $0x8] sm:$0xff] %vm415, %v2257
        %2290 = vst.msk [vmem:[#allocation2 + $0x10] sm:$0xff] %vm415, %v2258
        %2291 = vst.msk [vmem:[#allocation2 + $0x18] sm:$0xff] %vm415, %v2259
        %2292 = vst.msk [vmem:[#allocation2 + $0x20] sm:$0xff] %vm415, %v2260
        %2293 = vst.msk [vmem:[#allocation2 + $0x28] sm:$0xff] %vm415, %v2261
        %2294 = vst.msk [vmem:[#allocation2 + $0x30] sm:$0xff] %vm415, %v2262
        %2295 = vst.msk [vmem:[#allocation2 + $0x38] sm:$0xff] %vm415, %v2263
        %2296 = vst.msk [vmem:[#allocation2 + $0x40] sm:$0xff] %vm415, %v2264
        %2297 = vst.msk [vmem:[#allocation2 + $0x48] sm:$0xff] %vm415, %v2265
        %2298 = vst.msk [vmem:[#allocation2 + $0x50] sm:$0xff] %vm415, %v2266
        %2299 = vst.msk [vmem:[#allocation2 + $0x58] sm:$0xff] %vm415, %v2267
        %2300 = vst.msk [vmem:[#allocation2 + $0x60] sm:$0xff] %vm415, %v2268
        %2301 = vst.msk [vmem:[#allocation2 + $0x68] sm:$0xff] %vm415, %v2269
        %2302 = vst.msk [vmem:[#allocation2 + $0x70] sm:$0xff] %vm415, %v2270
        %2303 = vst.msk [vmem:[#allocation2 + $0x78] sm:$0xff] %vm415, %v2271
        %2304 = vst.msk [vmem:[#allocation2 + $0x80] sm:$0xff] %vm415, %v2272
        %2305 = vst.msk [vmem:[#allocation2 + $0x88] sm:$0xff] %vm415, %v2273
        %2306 = vst.msk [vmem:[#allocation2 + $0x90] sm:$0xff] %vm415, %v2274
        %2307 = vst.msk [vmem:[#allocation2 + $0x98] sm:$0xff] %vm415, %v2275
        %2308 = vst.msk [vmem:[#allocation2 + $0xa0] sm:$0xff] %vm415, %v2276
        %2309 = vst.msk [vmem:[#allocation2 + $0xa8] sm:$0xff] %vm415, %v2277
        %2310 = vst.msk [vmem:[#allocation2 + $0xb0] sm:$0xff] %vm415, %v2278
        %2311 = vst.msk [vmem:[#allocation2 + $0xb8] sm:$0xff] %vm415, %v2279
        %2312 = vst.msk [vmem:[#allocation2 + $0xc0] sm:$0xff] %vm415, %v2280
        %2313 = vst.msk [vmem:[#allocation2 + $0xc8] sm:$0xff] %vm415, %v2281
        %2314 = vst.msk [vmem:[#allocation2 + $0xd0] sm:$0xff] %vm415, %v2282
        %2315 = vst.msk [vmem:[#allocation2 + $0xd8] sm:$0xff] %vm415, %v2283
        %2316 = vst.msk [vmem:[#allocation2 + $0xe0] sm:$0xff] %vm415, %v2284
        %2317 = vst.msk [vmem:[#allocation2 + $0xe8] sm:$0xff] %vm415, %v2285
        %2318 = vst.msk [vmem:[#allocation2 + $0xf0] sm:$0xff] %vm415, %v2286
        %2319 = vst.msk [vmem:[#allocation2 + $0xf8] sm:$0xff] %vm415, %v2287
        %s2320 = scalar_lea.vmem %s160, 80 [#allocation3]
        %v2321 = vld [vmem:[%s2320] sm:$0xff]
        %v2322 = vld [vmem:[%s2320 + $0x8] sm:$0xff]
        %v2323 = vld [vmem:[%s2320 + $0x10] sm:$0xff]
        %v2324 = vld [vmem:[%s2320 + $0x18] sm:$0xff]
        %v2325 = vld [vmem:[%s2320 + $0x20] sm:$0xff]
        %v2326 = vld [vmem:[%s2320 + $0x28] sm:$0xff]
        %v2327 = vld [vmem:[%s2320 + $0x30] sm:$0xff]
        %v2328 = vld [vmem:[%s2320 + $0x38] sm:$0xff]
        %v2329 = vld [vmem:[%s2320 + $0x40] sm:$0xff]
        %v2330 = vld [vmem:[%s2320 + $0x48] sm:$0xff]
        %v2331 = vld [vmem:[%s2320 + $0x50] sm:$0xff]
        %v2332 = vld [vmem:[%s2320 + $0x58] sm:$0xff]
        %v2333 = vld [vmem:[%s2320 + $0x60] sm:$0xff]
        %v2334 = vld [vmem:[%s2320 + $0x68] sm:$0xff]
        %v2335 = vld [vmem:[%s2320 + $0x70] sm:$0xff]
        %v2336 = vld [vmem:[%s2320 + $0x78] sm:$0xff]
        %v2337 = vld [vmem:[%s2320 + $0x80] sm:$0xff]
        %v2338 = vld [vmem:[%s2320 + $0x88] sm:$0xff]
        %v2339 = vld [vmem:[%s2320 + $0x90] sm:$0xff]
        %v2340 = vld [vmem:[%s2320 + $0x98] sm:$0xff]
        %v2341 = vld [vmem:[%s2320 + $0xa0] sm:$0xff]
        %v2342 = vld [vmem:[%s2320 + $0xa8] sm:$0xff]
        %v2343 = vld [vmem:[%s2320 + $0xb0] sm:$0xff]
        %v2344 = vld [vmem:[%s2320 + $0xb8] sm:$0xff]
        %v2345 = vld [vmem:[%s2320 + $0xc0] sm:$0xff]
        %v2346 = vld [vmem:[%s2320 + $0xc8] sm:$0xff]
        %v2347 = vld [vmem:[%s2320 + $0xd0] sm:$0xff]
        %v2348 = vld [vmem:[%s2320 + $0xd8] sm:$0xff]
        %v2349 = vld [vmem:[%s2320 + $0xe0] sm:$0xff]
        %v2350 = vld [vmem:[%s2320 + $0xe8] sm:$0xff]
        %v2351 = vld [vmem:[%s2320 + $0xf0] sm:$0xff]
        %v2352 = vld [vmem:[%s2320 + $0xf8] sm:$0xff]
        %v2353 = vld [vmem:[%s2320 + $0x100] sm:$0xff]
        %v2354 = vld [vmem:[%s2320 + $0x108] sm:$0xff]
        %v2355 = vld [vmem:[%s2320 + $0x110] sm:$0xff]
        %v2356 = vld [vmem:[%s2320 + $0x118] sm:$0xff]
        %v2357 = vld [vmem:[%s2320 + $0x120] sm:$0xff]
        %v2358 = vld [vmem:[%s2320 + $0x128] sm:$0xff]
        %v2359 = vld [vmem:[%s2320 + $0x130] sm:$0xff]
        %v2360 = vld [vmem:[%s2320 + $0x138] sm:$0xff]
        %v2361 = vld [vmem:[%s2320 + $0x190] sm:$0xff]
        %v2362 = vld [vmem:[%s2320 + $0x198] sm:$0xff]
        %v2363 = vld [vmem:[%s2320 + $0x1a0] sm:$0xff]
        %v2364 = vld [vmem:[%s2320 + $0x1a8] sm:$0xff]
        %v2365 = vld [vmem:[%s2320 + $0x1b0] sm:$0xff]
        %v2366 = vld [vmem:[%s2320 + $0x1b8] sm:$0xff]
        %v2367 = vld [vmem:[%s2320 + $0x1c0] sm:$0xff]
        %v2368 = vld [vmem:[%s2320 + $0x1c8] sm:$0xff]
        %v2369 = vld [vmem:[%s2320 + $0x1d0] sm:$0xff]
        %v2370 = vld [vmem:[%s2320 + $0x1d8] sm:$0xff]
        %v2371 = vld [vmem:[%s2320 + $0x1e0] sm:$0xff]
        %v2372 = vld [vmem:[%s2320 + $0x1e8] sm:$0xff]
        %v2373 = vld [vmem:[%s2320 + $0x1f0] sm:$0xff]
        %v2374 = vld [vmem:[%s2320 + $0x1f8] sm:$0xff]
        %v2375 = vld [vmem:[%s2320 + $0x200] sm:$0xff]
        %v2376 = vld [vmem:[%s2320 + $0x208] sm:$0xff]
        %v2377 = vld [vmem:[%s2320 + $0x210] sm:$0xff]
        %v2378 = vld [vmem:[%s2320 + $0x218] sm:$0xff]
        %v2379 = vld [vmem:[%s2320 + $0x220] sm:$0xff]
        %v2380 = vld [vmem:[%s2320 + $0x228] sm:$0xff]
        %v2381 = vld [vmem:[%s2320 + $0x230] sm:$0xff]
        %v2382 = vld [vmem:[%s2320 + $0x238] sm:$0xff]
        %v2383 = vld [vmem:[%s2320 + $0x240] sm:$0xff]
        %v2384 = vld [vmem:[%s2320 + $0x248] sm:$0xff]
        %v2385 = vld [vmem:[%s2320 + $0x250] sm:$0xff]
        %v2386 = vld [vmem:[%s2320 + $0x258] sm:$0xff]
        %v2387 = vld [vmem:[%s2320 + $0x260] sm:$0xff]
        %v2388 = vld [vmem:[%s2320 + $0x268] sm:$0xff]
        %v2389 = vld [vmem:[%s2320 + $0x270] sm:$0xff]
        %v2390 = vld [vmem:[%s2320 + $0x278] sm:$0xff]
        %v2391 = vld [vmem:[%s2320 + $0x280] sm:$0xff]
        %v2392 = vld [vmem:[%s2320 + $0x288] sm:$0xff]
        %v2393 = vld [vmem:[%s2320 + $0x290] sm:$0xff]
        %v2394 = vld [vmem:[%s2320 + $0x298] sm:$0xff]
        %v2395 = vld [vmem:[%s2320 + $0x2a0] sm:$0xff]
        %v2396 = vld [vmem:[%s2320 + $0x2a8] sm:$0xff]
        %v2397 = vld [vmem:[%s2320 + $0x2b0] sm:$0xff]
        %v2398 = vld [vmem:[%s2320 + $0x2b8] sm:$0xff]
        %v2399 = vld [vmem:[%s2320 + $0x2c0] sm:$0xff]
        %v2400 = vld [vmem:[%s2320 + $0x2c8] sm:$0xff]
        %v2401 = vld [vmem:[%s2320 + $0x320] sm:$0xff]
        %v2402 = vld [vmem:[%s2320 + $0x328] sm:$0xff]
        %v2403 = vld [vmem:[%s2320 + $0x330] sm:$0xff]
        %v2404 = vld [vmem:[%s2320 + $0x338] sm:$0xff]
        %v2405 = vld [vmem:[%s2320 + $0x340] sm:$0xff]
        %v2406 = vld [vmem:[%s2320 + $0x348] sm:$0xff]
        %v2407 = vld [vmem:[%s2320 + $0x350] sm:$0xff]
        %v2408 = vld [vmem:[%s2320 + $0x358] sm:$0xff]
        %v2409 = vld [vmem:[%s2320 + $0x360] sm:$0xff]
        %v2410 = vld [vmem:[%s2320 + $0x368] sm:$0xff]
        %v2411 = vld [vmem:[%s2320 + $0x370] sm:$0xff]
        %v2412 = vld [vmem:[%s2320 + $0x378] sm:$0xff]
        %v2413 = vld [vmem:[%s2320 + $0x380] sm:$0xff]
        %v2414 = vld [vmem:[%s2320 + $0x388] sm:$0xff]
        %v2415 = vld [vmem:[%s2320 + $0x390] sm:$0xff]
        %v2416 = vld [vmem:[%s2320 + $0x398] sm:$0xff]
        %v2417 = vld [vmem:[%s2320 + $0x3a0] sm:$0xff]
        %v2418 = vld [vmem:[%s2320 + $0x3a8] sm:$0xff]
        %v2419 = vld [vmem:[%s2320 + $0x3b0] sm:$0xff]
        %v2420 = vld [vmem:[%s2320 + $0x3b8] sm:$0xff]
        %v2421 = vld [vmem:[%s2320 + $0x3c0] sm:$0xff]
        %v2422 = vld [vmem:[%s2320 + $0x3c8] sm:$0xff]
        %v2423 = vld [vmem:[%s2320 + $0x3d0] sm:$0xff]
        %v2424 = vld [vmem:[%s2320 + $0x3d8] sm:$0xff]
        %v2425 = vld [vmem:[%s2320 + $0x3e0] sm:$0xff]
        %v2426 = vld [vmem:[%s2320 + $0x3e8] sm:$0xff]
        %v2427 = vld [vmem:[%s2320 + $0x3f0] sm:$0xff]
        %v2428 = vld [vmem:[%s2320 + $0x3f8] sm:$0xff]
        %v2429 = vld [vmem:[%s2320 + $0x400] sm:$0xff]
        %v2430 = vld [vmem:[%s2320 + $0x408] sm:$0xff]
        %v2431 = vld [vmem:[%s2320 + $0x410] sm:$0xff]
        %v2432 = vld [vmem:[%s2320 + $0x418] sm:$0xff]
        %v2433 = vld [vmem:[%s2320 + $0x420] sm:$0xff]
        %v2434 = vld [vmem:[%s2320 + $0x428] sm:$0xff]
        %v2435 = vld [vmem:[%s2320 + $0x430] sm:$0xff]
        %v2436 = vld [vmem:[%s2320 + $0x438] sm:$0xff]
        %v2437 = vld [vmem:[%s2320 + $0x440] sm:$0xff]
        %v2438 = vld [vmem:[%s2320 + $0x448] sm:$0xff]
        %v2439 = vld [vmem:[%s2320 + $0x450] sm:$0xff]
        %v2440 = vld [vmem:[%s2320 + $0x458] sm:$0xff]
        %v2441 = vld [vmem:[%s2320 + $0x4b0] sm:$0xff]
        %v2442 = vld [vmem:[%s2320 + $0x4b8] sm:$0xff]
        %v2443 = vld [vmem:[%s2320 + $0x4c0] sm:$0xff]
        %v2444 = vld [vmem:[%s2320 + $0x4c8] sm:$0xff]
        %v2445 = vld [vmem:[%s2320 + $0x4d0] sm:$0xff]
        %v2446 = vld [vmem:[%s2320 + $0x4d8] sm:$0xff]
        %v2447 = vld [vmem:[%s2320 + $0x4e0] sm:$0xff]
        %v2448 = vld [vmem:[%s2320 + $0x4e8] sm:$0xff]
        %v2449 = vld [vmem:[%s2320 + $0x4f0] sm:$0xff]
        %v2450 = vld [vmem:[%s2320 + $0x4f8] sm:$0xff]
        %v2451 = vld [vmem:[%s2320 + $0x500] sm:$0xff]
        %v2452 = vld [vmem:[%s2320 + $0x508] sm:$0xff]
        %v2453 = vld [vmem:[%s2320 + $0x510] sm:$0xff]
        %v2454 = vld [vmem:[%s2320 + $0x518] sm:$0xff]
        %v2455 = vld [vmem:[%s2320 + $0x520] sm:$0xff]
        %v2456 = vld [vmem:[%s2320 + $0x528] sm:$0xff]
        %v2457 = vld [vmem:[%s2320 + $0x530] sm:$0xff]
        %v2458 = vld [vmem:[%s2320 + $0x538] sm:$0xff]
        %v2459 = vld [vmem:[%s2320 + $0x540] sm:$0xff]
        %v2460 = vld [vmem:[%s2320 + $0x548] sm:$0xff]
        %v2461 = vld [vmem:[%s2320 + $0x550] sm:$0xff]
        %v2462 = vld [vmem:[%s2320 + $0x558] sm:$0xff]
        %v2463 = vld [vmem:[%s2320 + $0x560] sm:$0xff]
        %v2464 = vld [vmem:[%s2320 + $0x568] sm:$0xff]
        %v2465 = vld [vmem:[%s2320 + $0x570] sm:$0xff]
        %v2466 = vld [vmem:[%s2320 + $0x578] sm:$0xff]
        %v2467 = vld [vmem:[%s2320 + $0x580] sm:$0xff]
        %v2468 = vld [vmem:[%s2320 + $0x588] sm:$0xff]
        %v2469 = vld [vmem:[%s2320 + $0x590] sm:$0xff]
        %v2470 = vld [vmem:[%s2320 + $0x598] sm:$0xff]
        %v2471 = vld [vmem:[%s2320 + $0x5a0] sm:$0xff]
        %v2472 = vld [vmem:[%s2320 + $0x5a8] sm:$0xff]
        %v2473 = vld [vmem:[%s2320 + $0x5b0] sm:$0xff]
        %v2474 = vld [vmem:[%s2320 + $0x5b8] sm:$0xff]
        %v2475 = vld [vmem:[%s2320 + $0x5c0] sm:$0xff]
        %v2476 = vld [vmem:[%s2320 + $0x5c8] sm:$0xff]
        %v2477 = vld [vmem:[%s2320 + $0x5d0] sm:$0xff]
        %v2478 = vld [vmem:[%s2320 + $0x5d8] sm:$0xff]
        %v2479 = vld [vmem:[%s2320 + $0x5e0] sm:$0xff]
        %v2480 = vld [vmem:[%s2320 + $0x5e8] sm:$0xff]
        %s2481 = scalar_lea.vmem %s1, 1152
        %v2482 = vld [vmem:[%s2481] sm:$0xff]
        %v2483 = vld [vmem:[%s2481 + $0x8] sm:$0xff]
        %v2484 = vld [vmem:[%s2481 + $0x10] sm:$0xff]
        %v2485 = vld [vmem:[%s2481 + $0x18] sm:$0xff]
        %v2486 = vld [vmem:[%s2481 + $0x20] sm:$0xff]
        %v2487 = vld [vmem:[%s2481 + $0x28] sm:$0xff]
        %v2488 = vld [vmem:[%s2481 + $0x30] sm:$0xff]
        %v2489 = vld [vmem:[%s2481 + $0x38] sm:$0xff]
        %v2490 = vld [vmem:[%s2481 + $0x40] sm:$0xff]
        %v2491 = vld [vmem:[%s2481 + $0x48] sm:$0xff]
        %v2492 = vld [vmem:[%s2481 + $0x50] sm:$0xff]
        %v2493 = vld [vmem:[%s2481 + $0x58] sm:$0xff]
        %v2494 = vld [vmem:[%s2481 + $0x60] sm:$0xff]
        %v2495 = vld [vmem:[%s2481 + $0x68] sm:$0xff]
        %v2496 = vld [vmem:[%s2481 + $0x70] sm:$0xff]
        %v2497 = vld [vmem:[%s2481 + $0x78] sm:$0xff]
        %v2498 = vld [vmem:[%s2481 + $0x80] sm:$0xff]
        %v2499 = vld [vmem:[%s2481 + $0x88] sm:$0xff]
        %v2500 = vld [vmem:[%s2481 + $0x90] sm:$0xff]
        %v2501 = vld [vmem:[%s2481 + $0x98] sm:$0xff]
        %v2502 = vld [vmem:[%s2481 + $0xa0] sm:$0xff]
        %v2503 = vld [vmem:[%s2481 + $0xa8] sm:$0xff]
        %v2504 = vld [vmem:[%s2481 + $0xb0] sm:$0xff]
        %v2505 = vld [vmem:[%s2481 + $0xb8] sm:$0xff]
        %v2506 = vld [vmem:[%s2481 + $0xc0] sm:$0xff]
        %v2507 = vld [vmem:[%s2481 + $0xc8] sm:$0xff]
        %v2508 = vld [vmem:[%s2481 + $0xd0] sm:$0xff]
        %v2509 = vld [vmem:[%s2481 + $0xd8] sm:$0xff]
        %v2510 = vld [vmem:[%s2481 + $0xe0] sm:$0xff]
        %v2511 = vld [vmem:[%s2481 + $0xe8] sm:$0xff]
        %v2512 = vld [vmem:[%s2481 + $0xf0] sm:$0xff]
        %v2513 = vld [vmem:[%s2481 + $0xf8] sm:$0xff]
        %v2514 = vld [vmem:[%s2481 + $0x100] sm:$0xff]
        %v2515 = vld [vmem:[%s2481 + $0x108] sm:$0xff]
        %v2516 = vld [vmem:[%s2481 + $0x110] sm:$0xff]
        %v2517 = vld [vmem:[%s2481 + $0x118] sm:$0xff]
        %v2518 = vld [vmem:[%s2481 + $0x120] sm:$0xff]
        %v2519 = vld [vmem:[%s2481 + $0x128] sm:$0xff]
        %v2520 = vld [vmem:[%s2481 + $0x130] sm:$0xff]
        %v2521 = vld [vmem:[%s2481 + $0x138] sm:$0xff]
        %v2522 = vld [vmem:[%s2481 + $0x140] sm:$0xff]
        %v2523 = vld [vmem:[%s2481 + $0x148] sm:$0xff]
        %v2524 = vld [vmem:[%s2481 + $0x150] sm:$0xff]
        %v2525 = vld [vmem:[%s2481 + $0x158] sm:$0xff]
        %v2526 = vld [vmem:[%s2481 + $0x160] sm:$0xff]
        %v2527 = vld [vmem:[%s2481 + $0x168] sm:$0xff]
        %v2528 = vld [vmem:[%s2481 + $0x170] sm:$0xff]
        %v2529 = vld [vmem:[%s2481 + $0x178] sm:$0xff]
        %v2530 = vld [vmem:[%s2481 + $0x180] sm:$0xff]
        %v2531 = vld [vmem:[%s2481 + $0x188] sm:$0xff]
        %v2532 = vld [vmem:[%s2481 + $0x190] sm:$0xff]
        %v2533 = vld [vmem:[%s2481 + $0x198] sm:$0xff]
        %v2534 = vld [vmem:[%s2481 + $0x1a0] sm:$0xff]
        %v2535 = vld [vmem:[%s2481 + $0x1a8] sm:$0xff]
        %v2536 = vld [vmem:[%s2481 + $0x1b0] sm:$0xff]
        %v2537 = vld [vmem:[%s2481 + $0x1b8] sm:$0xff]
        %v2538 = vld [vmem:[%s2481 + $0x1c0] sm:$0xff]
        %v2539 = vld [vmem:[%s2481 + $0x1c8] sm:$0xff]
        %v2540 = vld [vmem:[%s2481 + $0x1d0] sm:$0xff]
        %v2541 = vld [vmem:[%s2481 + $0x1d8] sm:$0xff]
        %v2542 = vld [vmem:[%s2481 + $0x1e0] sm:$0xff]
        %v2543 = vld [vmem:[%s2481 + $0x1e8] sm:$0xff]
        %v2544 = vld [vmem:[%s2481 + $0x1f0] sm:$0xff]
        %v2545 = vld [vmem:[%s2481 + $0x1f8] sm:$0xff]
        %v2546 = vld [vmem:[%s2481 + $0x200] sm:$0xff]
        %v2547 = vld [vmem:[%s2481 + $0x208] sm:$0xff]
        %v2548 = vld [vmem:[%s2481 + $0x210] sm:$0xff]
        %v2549 = vld [vmem:[%s2481 + $0x218] sm:$0xff]
        %v2550 = vld [vmem:[%s2481 + $0x220] sm:$0xff]
        %v2551 = vld [vmem:[%s2481 + $0x228] sm:$0xff]
        %v2552 = vld [vmem:[%s2481 + $0x230] sm:$0xff]
        %v2553 = vld [vmem:[%s2481 + $0x238] sm:$0xff]
        %v2555 = vsel %vm415, %v2325, 0
        %v2558 = vsel %vm415, %v2330, 0
        %v2561 = vsel %vm415, %v2335, 0
        %v2564 = vsel %vm415, %v2340, 0
        %v2567 = vsel %vm415, %v2345, 0
        %v2570 = vsel %vm415, %v2350, 0
        %v2573 = vsel %vm415, %v2355, 0
        %v2576 = vsel %vm415, %v2360, 0
        %v2579 = vsel %vm415, %v2365, 0
        %v2582 = vsel %vm415, %v2370, 0
        %v2585 = vsel %vm415, %v2375, 0
        %v2588 = vsel %vm415, %v2380, 0
        %v2591 = vsel %vm415, %v2385, 0
        %v2594 = vsel %vm415, %v2390, 0
        %v2597 = vsel %vm415, %v2395, 0
        %v2600 = vsel %vm415, %v2400, 0
        %v2603 = vsel %vm415, %v2405, 0
        %v2606 = vsel %vm415, %v2410, 0
        %v2609 = vsel %vm415, %v2415, 0
        %v2612 = vsel %vm415, %v2420, 0
        %v2615 = vsel %vm415, %v2425, 0
        %v2618 = vsel %vm415, %v2430, 0
        %v2621 = vsel %vm415, %v2435, 0
        %v2624 = vsel %vm415, %v2440, 0
        %v2627 = vsel %vm415, %v2445, 0
        %v2630 = vsel %vm415, %v2450, 0
        %v2633 = vsel %vm415, %v2455, 0
        %v2636 = vsel %vm415, %v2460, 0
        %v2639 = vsel %vm415, %v2465, 0
        %v2642 = vsel %vm415, %v2470, 0
        %v2645 = vsel %vm415, %v2475, 0
        %v2648 = vsel %vm415, %v2480, 0
        %2650 = vmatprep.subr.mxu0 0.0
        %2651 = vmatpush1.msra.mxu0 %v2482
        %2652 = vmatprep.subr.mxu0 0.0
        %2653 = vmatpush1.msra.mxu0 %v2483
        %2654 = vmatprep.subr.mxu0 0.0
        %2655 = vmatpush1.msra.mxu0 %v2484
        %2656 = vmatprep.subr.mxu0 0.0
        %2657 = vmatpush1.msra.mxu0 %v2485
        %2658 = vmatprep.subr.mxu0 0.0
        %2659 = vmatpush1.msra.mxu0 %v2486
        %2660 = vmatprep.subr.mxu0 0.0
        %2661 = vmatpush1.msra.mxu0 %v2487
        %2662 = vmatprep.subr.mxu0 0.0
        %2663 = vmatpush1.msra.mxu0 %v2488
        %2664 = vmatprep.subr.mxu0 0.0
        %2665 = vmatpush1.msra.mxu0 %v2489
        %2666 = vmatprep.subr.mxu0 0.0
        %2667 = vmatpush1.msra.mxu0 %v2490
        %2668 = vmatprep.subr.mxu0 0.0
        %2669 = vmatpush1.msra.mxu0 %v2491
        %2670 = vmatprep.subr.mxu0 0.0
        %2671 = vmatpush1.msra.mxu0 %v2492
        %2672 = vmatprep.subr.mxu0 0.0
        %2673 = vmatpush1.msra.mxu0 %v2493
        %2674 = vmatprep.subr.mxu0 0.0
        %2675 = vmatpush1.msra.mxu0 %v2494
        %2676 = vmatprep.subr.mxu0 0.0
        %2677 = vmatpush1.msra.mxu0 %v2495
        %2678 = vmatprep.subr.mxu0 0.0
        %2679 = vmatpush1.msra.mxu0 %v2496
        %2680 = vmatprep.subr.mxu0 0.0
        %2681 = vmatpush1.msra.mxu0 %v2497
        %2682 = vmatprep.subr.mxu0 0.0
        %2683 = vmatpush1.msra.mxu0 %v2498
        %2684 = vmatprep.subr.mxu0 0.0
        %2685 = vmatpush1.msra.mxu0 %v2499
        %2686 = vmatprep.subr.mxu0 0.0
        %2687 = vmatpush1.msra.mxu0 %v2500
        %2688 = vmatprep.subr.mxu0 0.0
        %2689 = vmatpush1.msra.mxu0 %v2501
        %2690 = vmatprep.subr.mxu0 0.0
        %2691 = vmatpush1.msra.mxu0 %v2502
        %2692 = vmatprep.subr.mxu0 0.0
        %2693 = vmatpush1.msra.mxu0 %v2503
        %2694 = vmatprep.subr.mxu0 0.0
        %2695 = vmatpush1.msra.mxu0 %v2504
        %2696 = vmatprep.subr.mxu0 0.0
        %2697 = vmatpush1.msra.mxu0 %v2505
        %2698 = vmatprep.subr.mxu0 0.0
        %2699 = vmatpush1.msra.mxu0 %v2506
        %2700 = vmatprep.subr.mxu0 0.0
        %2701 = vmatpush1.msra.mxu0 %v2507
        %2702 = vmatprep.subr.mxu0 0.0
        %2703 = vmatpush1.msra.mxu0 %v2508
        %2704 = vmatprep.subr.mxu0 0.0
        %2705 = vmatpush1.msra.mxu0 %v2509
        %2706 = vmatprep.subr.mxu0 0.0
        %2707 = vmatpush1.msra.mxu0 %v2510
        %2708 = vmatprep.subr.mxu0 0.0
        %2709 = vmatpush1.msra.mxu0 %v2511
        %2710 = vmatprep.subr.mxu0 0.0
        %2711 = vmatpush1.msra.mxu0 %v2512
        %2712 = vmatprep.subr.mxu0 0.0
        %2713 = vmatpush1.msra.mxu0 %v2513
        %2714 = vmatprep.mubr.f32.mxu0 %v2322
        %2715 = vmatmul.mubr.f32.gmra.mrb[0].mxu0 %v2321
        %v2716 = vpop.f32.mrb[0].mxu0
        %v2717 = vadd.f32 0.0, %v2716
        %v2718 = vpop.f32.mrb[0].mxu0
        %2719 = vmatprep.mubr.f32.mxu0 %v2327
        %2720 = vmatmul.mubr.f32.gmra.mrb[0].mxu0 %v2326
        %v2721 = vpop.f32.mrb[0].mxu0
        %v2722 = vadd.f32 0.0, %v2721
        %v2723 = vpop.f32.mrb[0].mxu0
        %2724 = vmatprep.mubr.f32.mxu0 %v2332
        %2725 = vmatmul.mubr.f32.gmra.mrb[0].mxu0 %v2331
        %v2726 = vpop.f32.mrb[0].mxu0
        %v2727 = vadd.f32 0.0, %v2726
        %v2728 = vpop.f32.mrb[0].mxu0
        %2729 = vmatprep.mubr.f32.mxu0 %v2337
        %2730 = vmatmul.mubr.f32.gmra.mrb[0].mxu0 %v2336
        %v2731 = vpop.f32.mrb[0].mxu0
        %v2732 = vadd.f32 0.0, %v2731
        %v2733 = vpop.f32.mrb[0].mxu0
        %2734 = vmatprep.mubr.f32.mxu0 %v2342
        %2735 = vmatmul.mubr.f32.gmra.mrb[0].mxu0 %v2341
        %v2736 = vpop.f32.mrb[0].mxu0
        %v2737 = vadd.f32 0.0, %v2736
        %v2738 = vpop.f32.mrb[0].mxu0
        %2739 = vmatprep.mubr.f32.mxu0 %v2347
        %2740 = vmatmul.mubr.f32.gmra.mrb[0].mxu0 %v2346
        %v2741 = vpop.f32.mrb[0].mxu0
        %v2742 = vadd.f32 0.0, %v2741
        %v2743 = vpop.f32.mrb[0].mxu0
        %2744 = vmatprep.mubr.f32.mxu0 %v2352
        %2745 = vmatmul.mubr.f32.gmra.mrb[0].mxu0 %v2351
        %v2746 = vpop.f32.mrb[0].mxu0
        %v2747 = vadd.f32 0.0, %v2746
        %v2748 = vpop.f32.mrb[0].mxu0
        %2749 = vmatprep.mubr.f32.mxu0 %v2357
        %2750 = vmatmul.mubr.f32.gmra.mrb[0].mxu0 %v2356
        %v2751 = vpop.f32.mrb[0].mxu0
        %v2752 = vadd.f32 0.0, %v2751
        %v2753 = vpop.f32.mrb[0].mxu0
        %2754 = vmatprep.mubr.f32.mxu0 %v2362
        %2755 = vmatmul.mubr.f32.gmra.mrb[0].mxu0 %v2361
        %v2756 = vpop.f32.mrb[0].mxu0
        %v2757 = vadd.f32 0.0, %v2756
        %v2758 = vpop.f32.mrb[0].mxu0
        %2759 = vmatprep.mubr.f32.mxu0 %v2367
        %2760 = vmatmul.mubr.f32.gmra.mrb[0].mxu0 %v2366
        %v2761 = vpop.f32.mrb[0].mxu0
        %v2762 = vadd.f32 0.0, %v2761
        %v2763 = vpop.f32.mrb[0].mxu0
        %2764 = vmatprep.mubr.f32.mxu0 %v2372
        %2765 = vmatmul.mubr.f32.gmra.mrb[0].mxu0 %v2371
        %v2766 = vpop.f32.mrb[0].mxu0
        %v2767 = vadd.f32 0.0, %v2766
        %v2768 = vpop.f32.mrb[0].mxu0
        %2769 = vmatprep.mubr.f32.mxu0 %v2377
        %2770 = vmatmul.mubr.f32.gmra.mrb[0].mxu0 %v2376
        %v2771 = vpop.f32.mrb[0].mxu0
        %v2772 = vadd.f32 0.0, %v2771
        %v2773 = vpop.f32.mrb[0].mxu0
        %2774 = vmatprep.mubr.f32.mxu0 %v2382
        %2775 = vmatmul.mubr.f32.gmra.mrb[0].mxu0 %v2381
        %v2776 = vpop.f32.mrb[0].mxu0
        %v2777 = vadd.f32 0.0, %v2776
        %v2778 = vpop.f32.mrb[0].mxu0
        %2779 = vmatprep.mubr.f32.mxu0 %v2387
        %2780 = vmatmul.mubr.f32.gmra.mrb[0].mxu0 %v2386
        %v2781 = vpop.f32.mrb[0].mxu0
        %v2782 = vadd.f32 0.0, %v2781
        %v2783 = vpop.f32.mrb[0].mxu0
        %2784 = vmatprep.mubr.f32.mxu0 %v2392
        %2785 = vmatmul.mubr.f32.gmra.mrb[0].mxu0 %v2391
        %v2786 = vpop.f32.mrb[0].mxu0
        %v2787 = vadd.f32 0.0, %v2786
        %v2788 = vpop.f32.mrb[0].mxu0
        %2789 = vmatprep.mubr.f32.mxu0 %v2397
        %2790 = vmatmul.mubr.f32.gmra.mrb[0].mxu0 %v2396
        %v2791 = vpop.f32.mrb[0].mxu0
        %v2792 = vadd.f32 0.0, %v2791
        %v2793 = vpop.f32.mrb[0].mxu0
        %2794 = vmatprep.mubr.f32.mxu0 %v2402
        %2795 = vmatmul.mubr.f32.gmra.mrb[0].mxu0 %v2401
        %v2796 = vpop.f32.mrb[0].mxu0
        %v2797 = vadd.f32 0.0, %v2796
        %v2798 = vpop.f32.mrb[0].mxu0
        %2799 = vmatprep.mubr.f32.mxu0 %v2407
        %2800 = vmatmul.mubr.f32.gmra.mrb[0].mxu0 %v2406
        %v2801 = vpop.f32.mrb[0].mxu0
        %v2802 = vadd.f32 0.0, %v2801
        %v2803 = vpop.f32.mrb[0].mxu0
        %2804 = vmatprep.mubr.f32.mxu0 %v2412
        %2805 = vmatmul.mubr.f32.gmra.mrb[0].mxu0 %v2411
        %v2806 = vpop.f32.mrb[0].mxu0
        %v2807 = vadd.f32 0.0, %v2806
        %v2808 = vpop.f32.mrb[0].mxu0
        %2809 = vmatprep.mubr.f32.mxu0 %v2417
        %2810 = vmatmul.mubr.f32.gmra.mrb[0].mxu0 %v2416
        %v2811 = vpop.f32.mrb[0].mxu0
        %v2812 = vadd.f32 0.0, %v2811
        %v2813 = vpop.f32.mrb[0].mxu0
        %2814 = vmatprep.mubr.f32.mxu0 %v2422
        %2815 = vmatmul.mubr.f32.gmra.mrb[0].mxu0 %v2421
        %v2816 = vpop.f32.mrb[0].mxu0
        %v2817 = vadd.f32 0.0, %v2816
        %v2818 = vpop.f32.mrb[0].mxu0
        %2819 = vmatprep.mubr.f32.mxu0 %v2427
        %2820 = vmatmul.mubr.f32.gmra.mrb[0].mxu0 %v2426
        %v2821 = vpop.f32.mrb[0].mxu0
        %v2822 = vadd.f32 0.0, %v2821
        %v2823 = vpop.f32.mrb[0].mxu0
        %2824 = vmatprep.mubr.f32.mxu0 %v2432
        %2825 = vmatmul.mubr.f32.gmra.mrb[0].mxu0 %v2431
        %v2826 = vpop.f32.mrb[0].mxu0
        %v2827 = vadd.f32 0.0, %v2826
        %v2828 = vpop.f32.mrb[0].mxu0
        %2829 = vmatprep.mubr.f32.mxu0 %v2437
        %2830 = vmatmul.mubr.f32.gmra.mrb[0].mxu0 %v2436
        %v2831 = vpop.f32.mrb[0].mxu0
        %v2832 = vadd.f32 0.0, %v2831
        %v2833 = vpop.f32.mrb[0].mxu0
        %2834 = vmatprep.mubr.f32.mxu0 %v2442
        %2835 = vmatmul.mubr.f32.gmra.mrb[0].mxu0 %v2441
        %v2836 = vpop.f32.mrb[0].mxu0
        %v2837 = vadd.f32 0.0, %v2836
        %v2838 = vpop.f32.mrb[0].mxu0
        %2839 = vmatprep.mubr.f32.mxu0 %v2447
        %2840 = vmatmul.mubr.f32.gmra.mrb[0].mxu0 %v2446
        %v2841 = vpop.f32.mrb[0].mxu0
        %v2842 = vadd.f32 0.0, %v2841
        %v2843 = vpop.f32.mrb[0].mxu0
        %2844 = vmatprep.mubr.f32.mxu0 %v2452
        %2845 = vmatmul.mubr.f32.gmra.mrb[0].mxu0 %v2451
        %v2846 = vpop.f32.mrb[0].mxu0
        %v2847 = vadd.f32 0.0, %v2846
        %v2848 = vpop.f32.mrb[0].mxu0
        %2849 = vmatprep.mubr.f32.mxu0 %v2457
        %2850 = vmatmul.mubr.f32.gmra.mrb[0].mxu0 %v2456
        %v2851 = vpop.f32.mrb[0].mxu0
        %v2852 = vadd.f32 0.0, %v2851
        %v2853 = vpop.f32.mrb[0].mxu0
        %2854 = vmatprep.mubr.f32.mxu0 %v2462
        %2855 = vmatmul.mubr.f32.gmra.mrb[0].mxu0 %v2461
        %v2856 = vpop.f32.mrb[0].mxu0
        %v2857 = vadd.f32 0.0, %v2856
        %v2858 = vpop.f32.mrb[0].mxu0
        %2859 = vmatprep.mubr.f32.mxu0 %v2467
        %2860 = vmatmul.mubr.f32.gmra.mrb[0].mxu0 %v2466
        %v2861 = vpop.f32.mrb[0].mxu0
        %v2862 = vadd.f32 0.0, %v2861
        %v2863 = vpop.f32.mrb[0].mxu0
        %2864 = vmatprep.mubr.f32.mxu0 %v2472
        %2865 = vmatmul.mubr.f32.gmra.mrb[0].mxu0 %v2471
        %v2866 = vpop.f32.mrb[0].mxu0
        %v2867 = vadd.f32 0.0, %v2866
        %v2868 = vpop.f32.mrb[0].mxu0
        %2869 = vmatprep.mubr.f32.mxu0 %v2477
        %2870 = vmatmul.mubr.f32.gmra.mrb[0].mxu0 %v2476
        %v2871 = vpop.f32.mrb[0].mxu0
        %v2872 = vadd.f32 0.0, %v2871
        %v2873 = vpop.f32.mrb[0].mxu0
        %2874 = vdwg.mxu0
        %2875 = vmatprep.subr.mxu0 0.0
        %2876 = vmatpush1.msra.mxu0 %v2514
        %2877 = vmatprep.subr.mxu0 0.0
        %2878 = vmatpush1.msra.mxu0 %v2515
        %2879 = vmatprep.subr.mxu0 0.0
        %2880 = vmatpush1.msra.mxu0 %v2516
        %2881 = vmatprep.subr.mxu0 0.0
        %2882 = vmatpush1.msra.mxu0 %v2517
        %2883 = vmatprep.subr.mxu0 0.0
        %2884 = vmatpush1.msra.mxu0 %v2518
        %2885 = vmatprep.subr.mxu0 0.0
        %2886 = vmatpush1.msra.mxu0 %v2519
        %2887 = vmatprep.subr.mxu0 0.0
        %2888 = vmatpush1.msra.mxu0 %v2520
        %2889 = vmatprep.subr.mxu0 0.0
        %2890 = vmatpush1.msra.mxu0 %v2521
        %2891 = vmatprep.subr.mxu0 0.0
        %2892 = vmatpush1.msra.mxu0 %v2522
        %2893 = vmatprep.subr.mxu0 0.0
        %2894 = vmatpush1.msra.mxu0 %v2523
        %2895 = vmatprep.subr.mxu0 0.0
        %2896 = vmatpush1.msra.mxu0 %v2524
        %2897 = vmatprep.subr.mxu0 0.0
        %2898 = vmatpush1.msra.mxu0 %v2525
        %2899 = vmatprep.subr.mxu0 0.0
        %2900 = vmatpush1.msra.mxu0 %v2526
        %2901 = vmatprep.subr.mxu0 0.0
        %2902 = vmatpush1.msra.mxu0 %v2527
        %2903 = vmatprep.subr.mxu0 0.0
        %2904 = vmatpush1.msra.mxu0 %v2528
        %2905 = vmatprep.subr.mxu0 0.0
        %2906 = vmatpush1.msra.mxu0 %v2529
        %2907 = vmatprep.subr.mxu0 0.0
        %2908 = vmatpush1.msra.mxu0 %v2530
        %2909 = vmatprep.subr.mxu0 0.0
        %2910 = vmatpush1.msra.mxu0 %v2531
        %2911 = vmatprep.subr.mxu0 0.0
        %2912 = vmatpush1.msra.mxu0 %v2532
        %2913 = vmatprep.subr.mxu0 0.0
        %2914 = vmatpush1.msra.mxu0 %v2533
        %2915 = vmatprep.subr.mxu0 0.0
        %2916 = vmatpush1.msra.mxu0 %v2534
        %2917 = vmatprep.subr.mxu0 0.0
        %2918 = vmatpush1.msra.mxu0 %v2535
        %2919 = vmatprep.subr.mxu0 0.0
        %2920 = vmatpush1.msra.mxu0 %v2536
        %2921 = vmatprep.subr.mxu0 0.0
        %2922 = vmatpush1.msra.mxu0 %v2537
        %2923 = vmatprep.subr.mxu0 0.0
        %2924 = vmatpush1.msra.mxu0 %v2538
        %2925 = vmatprep.subr.mxu0 0.0
        %2926 = vmatpush1.msra.mxu0 %v2539
        %2927 = vmatprep.subr.mxu0 0.0
        %2928 = vmatpush1.msra.mxu0 %v2540
        %2929 = vmatprep.subr.mxu0 0.0
        %2930 = vmatpush1.msra.mxu0 %v2541
        %2931 = vmatprep.subr.mxu0 0.0
        %2932 = vmatpush1.msra.mxu0 %v2542
        %2933 = vmatprep.subr.mxu0 0.0
        %2934 = vmatpush1.msra.mxu0 %v2543
        %2935 = vmatprep.subr.mxu0 0.0
        %2936 = vmatpush1.msra.mxu0 %v2544
        %2937 = vmatprep.subr.mxu0 0.0
        %2938 = vmatpush1.msra.mxu0 %v2545
        %2939 = vmatprep.mubr.f32.mxu0 %v2324
        %2940 = vmatmul.mubr.f32.gmra.mrb[0].mxu0 %v2323
        %v2941 = vpop.f32.mrb[0].mxu0
        %v2942 = vadd.f32 %v2717, %v2941
        %v2943 = vpop.f32.mrb[0].mxu0
        %2944 = vmatprep.mubr.f32.mxu0 %v2329
        %2945 = vmatmul.mubr.f32.gmra.mrb[0].mxu0 %v2328
        %v2946 = vpop.f32.mrb[0].mxu0
        %v2947 = vadd.f32 %v2722, %v2946
        %v2948 = vpop.f32.mrb[0].mxu0
        %2949 = vmatprep.mubr.f32.mxu0 %v2334
        %2950 = vmatmul.mubr.f32.gmra.mrb[0].mxu0 %v2333
        %v2951 = vpop.f32.mrb[0].mxu0
        %v2952 = vadd.f32 %v2727, %v2951
        %v2953 = vpop.f32.mrb[0].mxu0
        %2954 = vmatprep.mubr.f32.mxu0 %v2339
        %2955 = vmatmul.mubr.f32.gmra.mrb[0].mxu0 %v2338
        %v2956 = vpop.f32.mrb[0].mxu0
        %v2957 = vadd.f32 %v2732, %v2956
        %v2958 = vpop.f32.mrb[0].mxu0
        %2959 = vmatprep.mubr.f32.mxu0 %v2344
        %2960 = vmatmul.mubr.f32.gmra.mrb[0].mxu0 %v2343
        %v2961 = vpop.f32.mrb[0].mxu0
        %v2962 = vadd.f32 %v2737, %v2961
        %v2963 = vpop.f32.mrb[0].mxu0
        %2964 = vmatprep.mubr.f32.mxu0 %v2349
        %2965 = vmatmul.mubr.f32.gmra.mrb[0].mxu0 %v2348
        %v2966 = vpop.f32.mrb[0].mxu0
        %v2967 = vadd.f32 %v2742, %v2966
        %v2968 = vpop.f32.mrb[0].mxu0
        %2969 = vmatprep.mubr.f32.mxu0 %v2354
        %2970 = vmatmul.mubr.f32.gmra.mrb[0].mxu0 %v2353
        %v2971 = vpop.f32.mrb[0].mxu0
        %v2972 = vadd.f32 %v2747, %v2971
        %v2973 = vpop.f32.mrb[0].mxu0
        %2974 = vmatprep.mubr.f32.mxu0 %v2359
        %2975 = vmatmul.mubr.f32.gmra.mrb[0].mxu0 %v2358
        %v2976 = vpop.f32.mrb[0].mxu0
        %v2977 = vadd.f32 %v2752, %v2976
        %v2978 = vpop.f32.mrb[0].mxu0
        %2979 = vmatprep.mubr.f32.mxu0 %v2364
        %2980 = vmatmul.mubr.f32.gmra.mrb[0].mxu0 %v2363
        %v2981 = vpop.f32.mrb[0].mxu0
        %v2982 = vadd.f32 %v2757, %v2981
        %v2983 = vpop.f32.mrb[0].mxu0
        %2984 = vmatprep.mubr.f32.mxu0 %v2369
        %2985 = vmatmul.mubr.f32.gmra.mrb[0].mxu0 %v2368
        %v2986 = vpop.f32.mrb[0].mxu0
        %v2987 = vadd.f32 %v2762, %v2986
        %v2988 = vpop.f32.mrb[0].mxu0
        %2989 = vmatprep.mubr.f32.mxu0 %v2374
        %2990 = vmatmul.mubr.f32.gmra.mrb[0].mxu0 %v2373
        %v2991 = vpop.f32.mrb[0].mxu0
        %v2992 = vadd.f32 %v2767, %v2991
        %v2993 = vpop.f32.mrb[0].mxu0
        %2994 = vmatprep.mubr.f32.mxu0 %v2379
        %2995 = vmatmul.mubr.f32.gmra.mrb[0].mxu0 %v2378
        %v2996 = vpop.f32.mrb[0].mxu0
        %v2997 = vadd.f32 %v2772, %v2996
        %v2998 = vpop.f32.mrb[0].mxu0
        %2999 = vmatprep.mubr.f32.mxu0 %v2384
        %3000 = vmatmul.mubr.f32.gmra.mrb[0].mxu0 %v2383
        %v3001 = vpop.f32.mrb[0].mxu0
        %v3002 = vadd.f32 %v2777, %v3001
        %v3003 = vpop.f32.mrb[0].mxu0
        %3004 = vmatprep.mubr.f32.mxu0 %v2389
        %3005 = vmatmul.mubr.f32.gmra.mrb[0].mxu0 %v2388
        %v3006 = vpop.f32.mrb[0].mxu0
        %v3007 = vadd.f32 %v2782, %v3006
        %v3008 = vpop.f32.mrb[0].mxu0
        %3009 = vmatprep.mubr.f32.mxu0 %v2394
        %3010 = vmatmul.mubr.f32.gmra.mrb[0].mxu0 %v2393
        %v3011 = vpop.f32.mrb[0].mxu0
        %v3012 = vadd.f32 %v2787, %v3011
        %v3013 = vpop.f32.mrb[0].mxu0
        %3014 = vmatprep.mubr.f32.mxu0 %v2399
        %3015 = vmatmul.mubr.f32.gmra.mrb[0].mxu0 %v2398
        %v3016 = vpop.f32.mrb[0].mxu0
        %v3017 = vadd.f32 %v2792, %v3016
        %v3018 = vpop.f32.mrb[0].mxu0
        %3019 = vmatprep.mubr.f32.mxu0 %v2404
        %3020 = vmatmul.mubr.f32.gmra.mrb[0].mxu0 %v2403
        %v3021 = vpop.f32.mrb[0].mxu0
        %v3022 = vadd.f32 %v2797, %v3021
        %v3023 = vpop.f32.mrb[0].mxu0
        %3024 = vmatprep.mubr.f32.mxu0 %v2409
        %3025 = vmatmul.mubr.f32.gmra.mrb[0].mxu0 %v2408
        %v3026 = vpop.f32.mrb[0].mxu0
        %v3027 = vadd.f32 %v2802, %v3026
        %v3028 = vpop.f32.mrb[0].mxu0
        %3029 = vmatprep.mubr.f32.mxu0 %v2414
        %3030 = vmatmul.mubr.f32.gmra.mrb[0].mxu0 %v2413
        %v3031 = vpop.f32.mrb[0].mxu0
        %v3032 = vadd.f32 %v2807, %v3031
        %v3033 = vpop.f32.mrb[0].mxu0
        %3034 = vmatprep.mubr.f32.mxu0 %v2419
        %3035 = vmatmul.mubr.f32.gmra.mrb[0].mxu0 %v2418
        %v3036 = vpop.f32.mrb[0].mxu0
        %v3037 = vadd.f32 %v2812, %v3036
        %v3038 = vpop.f32.mrb[0].mxu0
        %3039 = vmatprep.mubr.f32.mxu0 %v2424
        %3040 = vmatmul.mubr.f32.gmra.mrb[0].mxu0 %v2423
        %v3041 = vpop.f32.mrb[0].mxu0
        %v3042 = vadd.f32 %v2817, %v3041
        %v3043 = vpop.f32.mrb[0].mxu0
        %3044 = vmatprep.mubr.f32.mxu0 %v2429
        %3045 = vmatmul.mubr.f32.gmra.mrb[0].mxu0 %v2428
        %v3046 = vpop.f32.mrb[0].mxu0
        %v3047 = vadd.f32 %v2822, %v3046
        %v3048 = vpop.f32.mrb[0].mxu0
        %3049 = vmatprep.mubr.f32.mxu0 %v2434
        %3050 = vmatmul.mubr.f32.gmra.mrb[0].mxu0 %v2433
        %v3051 = vpop.f32.mrb[0].mxu0
        %v3052 = vadd.f32 %v2827, %v3051
        %v3053 = vpop.f32.mrb[0].mxu0
        %3054 = vmatprep.mubr.f32.mxu0 %v2439
        %3055 = vmatmul.mubr.f32.gmra.mrb[0].mxu0 %v2438
        %v3056 = vpop.f32.mrb[0].mxu0
        %v3057 = vadd.f32 %v2832, %v3056
        %v3058 = vpop.f32.mrb[0].mxu0
        %3059 = vmatprep.mubr.f32.mxu0 %v2444
        %3060 = vmatmul.mubr.f32.gmra.mrb[0].mxu0 %v2443
        %v3061 = vpop.f32.mrb[0].mxu0
        %v3062 = vadd.f32 %v2837, %v3061
        %v3063 = vpop.f32.mrb[0].mxu0
        %3064 = vmatprep.mubr.f32.mxu0 %v2449
        %3065 = vmatmul.mubr.f32.gmra.mrb[0].mxu0 %v2448
        %v3066 = vpop.f32.mrb[0].mxu0
        %v3067 = vadd.f32 %v2842, %v3066
        %v3068 = vpop.f32.mrb[0].mxu0
        %3069 = vmatprep.mubr.f32.mxu0 %v2454
        %3070 = vmatmul.mubr.f32.gmra.mrb[0].mxu0 %v2453
        %v3071 = vpop.f32.mrb[0].mxu0
        %v3072 = vadd.f32 %v2847, %v3071
        %v3073 = vpop.f32.mrb[0].mxu0
        %3074 = vmatprep.mubr.f32.mxu0 %v2459
        %3075 = vmatmul.mubr.f32.gmra.mrb[0].mxu0 %v2458
        %v3076 = vpop.f32.mrb[0].mxu0
        %v3077 = vadd.f32 %v2852, %v3076
        %v3078 = vpop.f32.mrb[0].mxu0
        %3079 = vmatprep.mubr.f32.mxu0 %v2464
        %3080 = vmatmul.mubr.f32.gmra.mrb[0].mxu0 %v2463
        %v3081 = vpop.f32.mrb[0].mxu0
        %v3082 = vadd.f32 %v2857, %v3081
        %v3083 = vpop.f32.mrb[0].mxu0
        %3084 = vmatprep.mubr.f32.mxu0 %v2469
        %3085 = vmatmul.mubr.f32.gmra.mrb[0].mxu0 %v2468
        %v3086 = vpop.f32.mrb[0].mxu0
        %v3087 = vadd.f32 %v2862, %v3086
        %v3088 = vpop.f32.mrb[0].mxu0
        %3089 = vmatprep.mubr.f32.mxu0 %v2474
        %3090 = vmatmul.mubr.f32.gmra.mrb[0].mxu0 %v2473
        %v3091 = vpop.f32.mrb[0].mxu0
        %v3092 = vadd.f32 %v2867, %v3091
        %v3093 = vpop.f32.mrb[0].mxu0
        %3094 = vmatprep.mubr.f32.mxu0 %v2479
        %3095 = vmatmul.mubr.f32.gmra.mrb[0].mxu0 %v2478
        %v3096 = vpop.f32.mrb[0].mxu0
        %v3097 = vadd.f32 %v2872, %v3096
        %v3098 = vpop.f32.mrb[0].mxu0
        %3099 = vdwg.mxu0
        %3100 = vmatprep.subr.mxu0 0.0
        %3101 = vmatpush1.msra.mxu0 %v2546
        %3102 = vmatprep.subr.mxu0 0.0
        %3103 = vmatpush1.msra.mxu0 %v2547
        %3104 = vmatprep.subr.mxu0 0.0
        %3105 = vmatpush1.msra.mxu0 %v2548
        %3106 = vmatprep.subr.mxu0 0.0
        %3107 = vmatpush1.msra.mxu0 %v2549
        %3108 = vmatprep.subr.mxu0 0.0
        %3109 = vmatpush1.msra.mxu0 %v2550
        %3110 = vmatprep.subr.mxu0 0.0
        %3111 = vmatpush1.msra.mxu0 %v2551
        %3112 = vmatprep.subr.mxu0 0.0
        %3113 = vmatpush1.msra.mxu0 %v2552
        %3114 = vmatprep.subr.mxu0 0.0
        %3115 = vmatpush1.msra.mxu0 %v2553
        %3116 = vmatprep.subr.mxu0 0.0
        %3117 = vmatpush1.msra.mxu0 0.0
        %3118 = vmatprep.subr.mxu0 0.0
        %3119 = vmatpush1.msra.mxu0 0.0
        %3120 = vmatprep.subr.mxu0 0.0
        %3121 = vmatpush1.msra.mxu0 0.0
        %3122 = vmatprep.subr.mxu0 0.0
        %3123 = vmatpush1.msra.mxu0 0.0
        %3124 = vmatprep.subr.mxu0 0.0
        %3125 = vmatpush1.msra.mxu0 0.0
        %3126 = vmatprep.subr.mxu0 0.0
        %3127 = vmatpush1.msra.mxu0 0.0
        %3128 = vmatprep.subr.mxu0 0.0
        %3129 = vmatpush1.msra.mxu0 0.0
        %3130 = vmatprep.subr.mxu0 0.0
        %3131 = vmatpush1.msra.mxu0 0.0
        %3132 = vmatprep.subr.mxu0 0.0
        %3133 = vmatpush1.msra.mxu0 0.0
        %3134 = vmatprep.subr.mxu0 0.0
        %3135 = vmatpush1.msra.mxu0 0.0
        %3136 = vmatprep.subr.mxu0 0.0
        %3137 = vmatpush1.msra.mxu0 0.0
        %3138 = vmatprep.subr.mxu0 0.0
        %3139 = vmatpush1.msra.mxu0 0.0
        %3140 = vmatprep.subr.mxu0 0.0
        %3141 = vmatpush1.msra.mxu0 0.0
        %3142 = vmatprep.subr.mxu0 0.0
        %3143 = vmatpush1.msra.mxu0 0.0
        %3144 = vmatprep.subr.mxu0 0.0
        %3145 = vmatpush1.msra.mxu0 0.0
        %3146 = vmatprep.subr.mxu0 0.0
        %3147 = vmatpush1.msra.mxu0 0.0
        %3148 = vmatprep.subr.mxu0 0.0
        %3149 = vmatpush1.msra.mxu0 0.0
        %3150 = vmatprep.subr.mxu0 0.0
        %3151 = vmatpush1.msra.mxu0 0.0
        %3152 = vmatprep.subr.mxu0 0.0
        %3153 = vmatpush1.msra.mxu0 0.0
        %3154 = vmatprep.subr.mxu0 0.0
        %3155 = vmatpush1.msra.mxu0 0.0
        %3156 = vmatprep.subr.mxu0 0.0
        %3157 = vmatpush1.msra.mxu0 0.0
        %3158 = vmatprep.subr.mxu0 0.0
        %3159 = vmatpush1.msra.mxu0 0.0
        %3160 = vmatprep.subr.mxu0 0.0
        %3161 = vmatpush1.msra.mxu0 0.0
        %3162 = vmatprep.subr.mxu0 0.0
        %3163 = vmatpush1.msra.mxu0 0.0
        %3164 = vmatprep.mubr.f32.mxu0 0.0
        %3165 = vmatmul.mubr.f32.gmra.mrb[0].mxu0 %v2555
        %v3166 = vpop.f32.mrb[0].mxu0
        %v3167 = vadd.f32 %v2942, %v3166
        %v3168 = vpop.f32.mrb[0].mxu0
        %3169 = vmatprep.mubr.f32.mxu0 0.0
        %3170 = vmatmul.mubr.f32.gmra.mrb[0].mxu0 %v2558
        %v3171 = vpop.f32.mrb[0].mxu0
        %v3172 = vadd.f32 %v2947, %v3171
        %v3173 = vpop.f32.mrb[0].mxu0
        %3174 = vmatprep.mubr.f32.mxu0 0.0
        %3175 = vmatmul.mubr.f32.gmra.mrb[0].mxu0 %v2561
        %v3176 = vpop.f32.mrb[0].mxu0
        %v3177 = vadd.f32 %v2952, %v3176
        %v3178 = vpop.f32.mrb[0].mxu0
        %3179 = vmatprep.mubr.f32.mxu0 0.0
        %3180 = vmatmul.mubr.f32.gmra.mrb[0].mxu0 %v2564
        %v3181 = vpop.f32.mrb[0].mxu0
        %v3182 = vadd.f32 %v2957, %v3181
        %v3183 = vpop.f32.mrb[0].mxu0
        %3184 = vmatprep.mubr.f32.mxu0 0.0
        %3185 = vmatmul.mubr.f32.gmra.mrb[0].mxu0 %v2567
        %v3186 = vpop.f32.mrb[0].mxu0
        %v3187 = vadd.f32 %v2962, %v3186
        %v3188 = vpop.f32.mrb[0].mxu0
        %3189 = vmatprep.mubr.f32.mxu0 0.0
        %3190 = vmatmul.mubr.f32.gmra.mrb[0].mxu0 %v2570
        %v3191 = vpop.f32.mrb[0].mxu0
        %v3192 = vadd.f32 %v2967, %v3191
        %v3193 = vpop.f32.mrb[0].mxu0
        %3194 = vmatprep.mubr.f32.mxu0 0.0
        %3195 = vmatmul.mubr.f32.gmra.mrb[0].mxu0 %v2573
        %v3196 = vpop.f32.mrb[0].mxu0
        %v3197 = vadd.f32 %v2972, %v3196
        %v3198 = vpop.f32.mrb[0].mxu0
        %3199 = vmatprep.mubr.f32.mxu0 0.0
        %3200 = vmatmul.mubr.f32.gmra.mrb[0].mxu0 %v2576
        %v3201 = vpop.f32.mrb[0].mxu0
        %v3202 = vadd.f32 %v2977, %v3201
        %v3203 = vpop.f32.mrb[0].mxu0
        %3204 = vmatprep.mubr.f32.mxu0 0.0
        %3205 = vmatmul.mubr.f32.gmra.mrb[0].mxu0 %v2579
        %v3206 = vpop.f32.mrb[0].mxu0
        %v3207 = vadd.f32 %v2982, %v3206
        %v3208 = vpop.f32.mrb[0].mxu0
        %3209 = vmatprep.mubr.f32.mxu0 0.0
        %3210 = vmatmul.mubr.f32.gmra.mrb[0].mxu0 %v2582
        %v3211 = vpop.f32.mrb[0].mxu0
        %v3212 = vadd.f32 %v2987, %v3211
        %v3213 = vpop.f32.mrb[0].mxu0
        %3214 = vmatprep.mubr.f32.mxu0 0.0
        %3215 = vmatmul.mubr.f32.gmra.mrb[0].mxu0 %v2585
        %v3216 = vpop.f32.mrb[0].mxu0
        %v3217 = vadd.f32 %v2992, %v3216
        %v3218 = vpop.f32.mrb[0].mxu0
        %3219 = vmatprep.mubr.f32.mxu0 0.0
        %3220 = vmatmul.mubr.f32.gmra.mrb[0].mxu0 %v2588
        %v3221 = vpop.f32.mrb[0].mxu0
        %v3222 = vadd.f32 %v2997, %v3221
        %v3223 = vpop.f32.mrb[0].mxu0
        %3224 = vmatprep.mubr.f32.mxu0 0.0
        %3225 = vmatmul.mubr.f32.gmra.mrb[0].mxu0 %v2591
        %v3226 = vpop.f32.mrb[0].mxu0
        %v3227 = vadd.f32 %v3002, %v3226
        %v3228 = vpop.f32.mrb[0].mxu0
        %3229 = vmatprep.mubr.f32.mxu0 0.0
        %3230 = vmatmul.mubr.f32.gmra.mrb[0].mxu0 %v2594
        %v3231 = vpop.f32.mrb[0].mxu0
        %v3232 = vadd.f32 %v3007, %v3231
        %v3233 = vpop.f32.mrb[0].mxu0
        %3234 = vmatprep.mubr.f32.mxu0 0.0
        %3235 = vmatmul.mubr.f32.gmra.mrb[0].mxu0 %v2597
        %v3236 = vpop.f32.mrb[0].mxu0
        %v3237 = vadd.f32 %v3012, %v3236
        %v3238 = vpop.f32.mrb[0].mxu0
        %3239 = vmatprep.mubr.f32.mxu0 0.0
        %3240 = vmatmul.mubr.f32.gmra.mrb[0].mxu0 %v2600
        %v3241 = vpop.f32.mrb[0].mxu0
        %v3242 = vadd.f32 %v3017, %v3241
        %v3243 = vpop.f32.mrb[0].mxu0
        %3244 = vmatprep.mubr.f32.mxu0 0.0
        %3245 = vmatmul.mubr.f32.gmra.mrb[0].mxu0 %v2603
        %v3246 = vpop.f32.mrb[0].mxu0
        %v3247 = vadd.f32 %v3022, %v3246
        %v3248 = vpop.f32.mrb[0].mxu0
        %3249 = vmatprep.mubr.f32.mxu0 0.0
        %3250 = vmatmul.mubr.f32.gmra.mrb[0].mxu0 %v2606
        %v3251 = vpop.f32.mrb[0].mxu0
        %v3252 = vadd.f32 %v3027, %v3251
        %v3253 = vpop.f32.mrb[0].mxu0
        %3254 = vmatprep.mubr.f32.mxu0 0.0
        %3255 = vmatmul.mubr.f32.gmra.mrb[0].mxu0 %v2609
        %v3256 = vpop.f32.mrb[0].mxu0
        %v3257 = vadd.f32 %v3032, %v3256
        %v3258 = vpop.f32.mrb[0].mxu0
        %3259 = vmatprep.mubr.f32.mxu0 0.0
        %3260 = vmatmul.mubr.f32.gmra.mrb[0].mxu0 %v2612
        %v3261 = vpop.f32.mrb[0].mxu0
        %v3262 = vadd.f32 %v3037, %v3261
        %v3263 = vpop.f32.mrb[0].mxu0
        %3264 = vmatprep.mubr.f32.mxu0 0.0
        %3265 = vmatmul.mubr.f32.gmra.mrb[0].mxu0 %v2615
        %v3266 = vpop.f32.mrb[0].mxu0
        %v3267 = vadd.f32 %v3042, %v3266
        %v3268 = vpop.f32.mrb[0].mxu0
        %3269 = vmatprep.mubr.f32.mxu0 0.0
        %3270 = vmatmul.mubr.f32.gmra.mrb[0].mxu0 %v2618
        %v3271 = vpop.f32.mrb[0].mxu0
        %v3272 = vadd.f32 %v3047, %v3271
        %v3273 = vpop.f32.mrb[0].mxu0
        %3274 = vmatprep.mubr.f32.mxu0 0.0
        %3275 = vmatmul.mubr.f32.gmra.mrb[0].mxu0 %v2621
        %v3276 = vpop.f32.mrb[0].mxu0
        %v3277 = vadd.f32 %v3052, %v3276
        %v3278 = vpop.f32.mrb[0].mxu0
        %3279 = vmatprep.mubr.f32.mxu0 0.0
        %3280 = vmatmul.mubr.f32.gmra.mrb[0].mxu0 %v2624
        %v3281 = vpop.f32.mrb[0].mxu0
        %v3282 = vadd.f32 %v3057, %v3281
        %v3283 = vpop.f32.mrb[0].mxu0
        %3284 = vmatprep.mubr.f32.mxu0 0.0
        %3285 = vmatmul.mubr.f32.gmra.mrb[0].mxu0 %v2627
        %v3286 = vpop.f32.mrb[0].mxu0
        %v3287 = vadd.f32 %v3062, %v3286
        %v3288 = vpop.f32.mrb[0].mxu0
        %3289 = vmatprep.mubr.f32.mxu0 0.0
        %3290 = vmatmul.mubr.f32.gmra.mrb[0].mxu0 %v2630
        %v3291 = vpop.f32.mrb[0].mxu0
        %v3292 = vadd.f32 %v3067, %v3291
        %v3293 = vpop.f32.mrb[0].mxu0
        %3294 = vmatprep.mubr.f32.mxu0 0.0
        %3295 = vmatmul.mubr.f32.gmra.mrb[0].mxu0 %v2633
        %v3296 = vpop.f32.mrb[0].mxu0
        %v3297 = vadd.f32 %v3072, %v3296
        %v3298 = vpop.f32.mrb[0].mxu0
        %3299 = vmatprep.mubr.f32.mxu0 0.0
        %3300 = vmatmul.mubr.f32.gmra.mrb[0].mxu0 %v2636
        %v3301 = vpop.f32.mrb[0].mxu0
        %v3302 = vadd.f32 %v3077, %v3301
        %v3303 = vpop.f32.mrb[0].mxu0
        %3304 = vmatprep.mubr.f32.mxu0 0.0
        %3305 = vmatmul.mubr.f32.gmra.mrb[0].mxu0 %v2639
        %v3306 = vpop.f32.mrb[0].mxu0
        %v3307 = vadd.f32 %v3082, %v3306
        %v3308 = vpop.f32.mrb[0].mxu0
        %3309 = vmatprep.mubr.f32.mxu0 0.0
        %3310 = vmatmul.mubr.f32.gmra.mrb[0].mxu0 %v2642
        %v3311 = vpop.f32.mrb[0].mxu0
        %v3312 = vadd.f32 %v3087, %v3311
        %v3313 = vpop.f32.mrb[0].mxu0
        %3314 = vmatprep.mubr.f32.mxu0 0.0
        %3315 = vmatmul.mubr.f32.gmra.mrb[0].mxu0 %v2645
        %v3316 = vpop.f32.mrb[0].mxu0
        %v3317 = vadd.f32 %v3092, %v3316
        %v3318 = vpop.f32.mrb[0].mxu0
        %3319 = vmatprep.mubr.f32.mxu0 0.0
        %3320 = vmatmul.mubr.f32.gmra.mrb[0].mxu0 %v2648
        %v3321 = vpop.f32.mrb[0].mxu0
        %v3322 = vadd.f32 %v3097, %v3321
        %v3323 = vpop.f32.mrb[0].mxu0
        %3324 = vdwg.mxu0
        %v3325 = vld [vmem:[#allocation2] sm:$0xff]
        %v3326 = vld [vmem:[#allocation2 + $0x8] sm:$0xff]
        %v3327 = vld [vmem:[#allocation2 + $0x10] sm:$0xff]
        %v3328 = vld [vmem:[#allocation2 + $0x18] sm:$0xff]
        %v3329 = vld [vmem:[#allocation2 + $0x20] sm:$0xff]
        %v3330 = vld [vmem:[#allocation2 + $0x28] sm:$0xff]
        %v3331 = vld [vmem:[#allocation2 + $0x30] sm:$0xff]
        %v3332 = vld [vmem:[#allocation2 + $0x38] sm:$0xff]
        %v3333 = vld [vmem:[#allocation2 + $0x40] sm:$0xff]
        %v3334 = vld [vmem:[#allocation2 + $0x48] sm:$0xff]
        %v3335 = vld [vmem:[#allocation2 + $0x50] sm:$0xff]
        %v3336 = vld [vmem:[#allocation2 + $0x58] sm:$0xff]
        %v3337 = vld [vmem:[#allocation2 + $0x60] sm:$0xff]
        %v3338 = vld [vmem:[#allocation2 + $0x68] sm:$0xff]
        %v3339 = vld [vmem:[#allocation2 + $0x70] sm:$0xff]
        %v3340 = vld [vmem:[#allocation2 + $0x78] sm:$0xff]
        %v3341 = vld [vmem:[#allocation2 + $0x80] sm:$0xff]
        %v3342 = vld [vmem:[#allocation2 + $0x88] sm:$0xff]
        %v3343 = vld [vmem:[#allocation2 + $0x90] sm:$0xff]
        %v3344 = vld [vmem:[#allocation2 + $0x98] sm:$0xff]
        %v3345 = vld [vmem:[#allocation2 + $0xa0] sm:$0xff]
        %v3346 = vld [vmem:[#allocation2 + $0xa8] sm:$0xff]
        %v3347 = vld [vmem:[#allocation2 + $0xb0] sm:$0xff]
        %v3348 = vld [vmem:[#allocation2 + $0xb8] sm:$0xff]
        %v3349 = vld [vmem:[#allocation2 + $0xc0] sm:$0xff]
        %v3350 = vld [vmem:[#allocation2 + $0xc8] sm:$0xff]
        %v3351 = vld [vmem:[#allocation2 + $0xd0] sm:$0xff]
        %v3352 = vld [vmem:[#allocation2 + $0xd8] sm:$0xff]
        %v3353 = vld [vmem:[#allocation2 + $0xe0] sm:$0xff]
        %v3354 = vld [vmem:[#allocation2 + $0xe8] sm:$0xff]
        %v3355 = vld [vmem:[#allocation2 + $0xf0] sm:$0xff]
        %v3356 = vld [vmem:[#allocation2 + $0xf8] sm:$0xff]
        %v3357 = vadd.f32 %v3325, %v3167
        %v3358 = vadd.f32 %v3326, %v3172
        %v3359 = vadd.f32 %v3327, %v3177
        %v3360 = vadd.f32 %v3328, %v3182
        %v3361 = vadd.f32 %v3329, %v3187
        %v3362 = vadd.f32 %v3330, %v3192
        %v3363 = vadd.f32 %v3331, %v3197
        %v3364 = vadd.f32 %v3332, %v3202
        %v3365 = vadd.f32 %v3333, %v3207
        %v3366 = vadd.f32 %v3334, %v3212
        %v3367 = vadd.f32 %v3335, %v3217
        %v3368 = vadd.f32 %v3336, %v3222
        %v3369 = vadd.f32 %v3337, %v3227
        %v3370 = vadd.f32 %v3338, %v3232
        %v3371 = vadd.f32 %v3339, %v3237
        %v3372 = vadd.f32 %v3340, %v3242
        %v3373 = vadd.f32 %v3341, %v3247
        %v3374 = vadd.f32 %v3342, %v3252
        %v3375 = vadd.f32 %v3343, %v3257
        %v3376 = vadd.f32 %v3344, %v3262
        %v3377 = vadd.f32 %v3345, %v3267
        %v3378 = vadd.f32 %v3346, %v3272
        %v3379 = vadd.f32 %v3347, %v3277
        %v3380 = vadd.f32 %v3348, %v3282
        %v3381 = vadd.f32 %v3349, %v3287
        %v3382 = vadd.f32 %v3350, %v3292
        %v3383 = vadd.f32 %v3351, %v3297
        %v3384 = vadd.f32 %v3352, %v3302
        %v3385 = vadd.f32 %v3353, %v3307
        %v3386 = vadd.f32 %v3354, %v3312
        %v3387 = vadd.f32 %v3355, %v3317
        %v3388 = vadd.f32 %v3356, %v3322
        %3389 = vst.msk [vmem:[#allocation2] sm:$0xff] %vm415, %v3357
        %3390 = vst.msk [vmem:[#allocation2 + $0x8] sm:$0xff] %vm415, %v3358
        %3391 = vst.msk [vmem:[#allocation2 + $0x10] sm:$0xff] %vm415, %v3359
        %3392 = vst.msk [vmem:[#allocation2 + $0x18] sm:$0xff] %vm415, %v3360
        %3393 = vst.msk [vmem:[#allocation2 + $0x20] sm:$0xff] %vm415, %v3361
        %3394 = vst.msk [vmem:[#allocation2 + $0x28] sm:$0xff] %vm415, %v3362
        %3395 = vst.msk [vmem:[#allocation2 + $0x30] sm:$0xff] %vm415, %v3363
        %3396 = vst.msk [vmem:[#allocation2 + $0x38] sm:$0xff] %vm415, %v3364
        %3397 = vst.msk [vmem:[#allocation2 + $0x40] sm:$0xff] %vm415, %v3365
        %3398 = vst.msk [vmem:[#allocation2 + $0x48] sm:$0xff] %vm415, %v3366
        %3399 = vst.msk [vmem:[#allocation2 + $0x50] sm:$0xff] %vm415, %v3367
        %3400 = vst.msk [vmem:[#allocation2 + $0x58] sm:$0xff] %vm415, %v3368
        %3401 = vst.msk [vmem:[#allocation2 + $0x60] sm:$0xff] %vm415, %v3369
        %3402 = vst.msk [vmem:[#allocation2 + $0x68] sm:$0xff] %vm415, %v3370
        %3403 = vst.msk [vmem:[#allocation2 + $0x70] sm:$0xff] %vm415, %v3371
        %3404 = vst.msk [vmem:[#allocation2 + $0x78] sm:$0xff] %vm415, %v3372
        %3405 = vst.msk [vmem:[#allocation2 + $0x80] sm:$0xff] %vm415, %v3373
        %3406 = vst.msk [vmem:[#allocation2 + $0x88] sm:$0xff] %vm415, %v3374
        %3407 = vst.msk [vmem:[#allocation2 + $0x90] sm:$0xff] %vm415, %v3375
        %3408 = vst.msk [vmem:[#allocation2 + $0x98] sm:$0xff] %vm415, %v3376
        %3409 = vst.msk [vmem:[#allocation2 + $0xa0] sm:$0xff] %vm415, %v3377
        %3410 = vst.msk [vmem:[#allocation2 + $0xa8] sm:$0xff] %vm415, %v3378
        %3411 = vst.msk [vmem:[#allocation2 + $0xb0] sm:$0xff] %vm415, %v3379
        %3412 = vst.msk [vmem:[#allocation2 + $0xb8] sm:$0xff] %vm415, %v3380
        %3413 = vst.msk [vmem:[#allocation2 + $0xc0] sm:$0xff] %vm415, %v3381
        %3414 = vst.msk [vmem:[#allocation2 + $0xc8] sm:$0xff] %vm415, %v3382
        %3415 = vst.msk [vmem:[#allocation2 + $0xd0] sm:$0xff] %vm415, %v3383
        %3416 = vst.msk [vmem:[#allocation2 + $0xd8] sm:$0xff] %vm415, %v3384
        %3417 = vst.msk [vmem:[#allocation2 + $0xe0] sm:$0xff] %vm415, %v3385
        %3418 = vst.msk [vmem:[#allocation2 + $0xe8] sm:$0xff] %vm415, %v3386
        %3419 = vst.msk [vmem:[#allocation2 + $0xf0] sm:$0xff] %vm415, %v3387
        %3420 = vst.msk [vmem:[#allocation2 + $0xf8] sm:$0xff] %vm415, %v3388
        %v3421 = vld [vmem:[#allocation2] sm:$0xff]
        %v3422 = vld [vmem:[#allocation2 + $0x8] sm:$0xff]
        %v3423 = vld [vmem:[#allocation2 + $0x10] sm:$0xff]
        %v3424 = vld [vmem:[#allocation2 + $0x18] sm:$0xff]
        %v3425 = vld [vmem:[#allocation2 + $0x20] sm:$0xff]
        %v3426 = vld [vmem:[#allocation2 + $0x28] sm:$0xff]
        %v3427 = vld [vmem:[#allocation2 + $0x30] sm:$0xff]
        %v3428 = vld [vmem:[#allocation2 + $0x38] sm:$0xff]
        %v3429 = vld [vmem:[#allocation2 + $0x40] sm:$0xff]
        %v3430 = vld [vmem:[#allocation2 + $0x48] sm:$0xff]
        %v3431 = vld [vmem:[#allocation2 + $0x50] sm:$0xff]
        %v3432 = vld [vmem:[#allocation2 + $0x58] sm:$0xff]
        %v3433 = vld [vmem:[#allocation2 + $0x60] sm:$0xff]
        %v3434 = vld [vmem:[#allocation2 + $0x68] sm:$0xff]
        %v3435 = vld [vmem:[#allocation2 + $0x70] sm:$0xff]
        %v3436 = vld [vmem:[#allocation2 + $0x78] sm:$0xff]
        %v3437 = vld [vmem:[#allocation2 + $0x80] sm:$0xff]
        %v3438 = vld [vmem:[#allocation2 + $0x88] sm:$0xff]
        %v3439 = vld [vmem:[#allocation2 + $0x90] sm:$0xff]
        %v3440 = vld [vmem:[#allocation2 + $0x98] sm:$0xff]
        %v3441 = vld [vmem:[#allocation2 + $0xa0] sm:$0xff]
        %v3442 = vld [vmem:[#allocation2 + $0xa8] sm:$0xff]
        %v3443 = vld [vmem:[#allocation2 + $0xb0] sm:$0xff]
        %v3444 = vld [vmem:[#allocation2 + $0xb8] sm:$0xff]
        %v3445 = vld [vmem:[#allocation2 + $0xc0] sm:$0xff]
        %v3446 = vld [vmem:[#allocation2 + $0xc8] sm:$0xff]
        %v3447 = vld [vmem:[#allocation2 + $0xd0] sm:$0xff]
        %v3448 = vld [vmem:[#allocation2 + $0xd8] sm:$0xff]
        %v3449 = vld [vmem:[#allocation2 + $0xe0] sm:$0xff]
        %v3450 = vld [vmem:[#allocation2 + $0xe8] sm:$0xff]
        %v3451 = vld [vmem:[#allocation2 + $0xf0] sm:$0xff]
        %v3452 = vld [vmem:[#allocation2 + $0xf8] sm:$0xff]
        %v3453 = vmax.f32 %v3421, 0.0
        %v3454 = vmax.f32 %v3422, 0.0
        %v3455 = vmax.f32 %v3423, 0.0
        %v3456 = vmax.f32 %v3424, 0.0
        %v3457 = vmax.f32 %v3425, 0.0
        %v3458 = vmax.f32 %v3426, 0.0
        %v3459 = vmax.f32 %v3427, 0.0
        %v3460 = vmax.f32 %v3428, 0.0
        %v3461 = vmax.f32 %v3429, 0.0
        %v3462 = vmax.f32 %v3430, 0.0
        %v3463 = vmax.f32 %v3431, 0.0
        %v3464 = vmax.f32 %v3432, 0.0
        %v3465 = vmax.f32 %v3433, 0.0
        %v3466 = vmax.f32 %v3434, 0.0
        %v3467 = vmax.f32 %v3435, 0.0
        %v3468 = vmax.f32 %v3436, 0.0
        %v3469 = vmax.f32 %v3437, 0.0
        %v3470 = vmax.f32 %v3438, 0.0
        %v3471 = vmax.f32 %v3439, 0.0
        %v3472 = vmax.f32 %v3440, 0.0
        %v3473 = vmax.f32 %v3441, 0.0
        %v3474 = vmax.f32 %v3442, 0.0
        %v3475 = vmax.f32 %v3443, 0.0
        %v3476 = vmax.f32 %v3444, 0.0
        %v3477 = vmax.f32 %v3445, 0.0
        %v3478 = vmax.f32 %v3446, 0.0
        %v3479 = vmax.f32 %v3447, 0.0
        %v3480 = vmax.f32 %v3448, 0.0
        %v3481 = vmax.f32 %v3449, 0.0
        %v3482 = vmax.f32 %v3450, 0.0
        %v3483 = vmax.f32 %v3451, 0.0
        %v3484 = vmax.f32 %v3452, 0.0
        %3485 = vst.msk [vmem:[%s180] sm:$0xff] %vm415, %v3453
        %3486 = vst.msk [vmem:[%s180 + $0x8] sm:$0xff] %vm415, %v3454
        %3487 = vst.msk [vmem:[%s180 + $0x10] sm:$0xff] %vm415, %v3455
        %3488 = vst.msk [vmem:[%s180 + $0x18] sm:$0xff] %vm415, %v3456
        %3489 = vst.msk [vmem:[%s180 + $0x20] sm:$0xff] %vm415, %v3457
        %3490 = vst.msk [vmem:[%s180 + $0x28] sm:$0xff] %vm415, %v3458
        %3491 = vst.msk [vmem:[%s180 + $0x30] sm:$0xff] %vm415, %v3459
        %3492 = vst.msk [vmem:[%s180 + $0x38] sm:$0xff] %vm415, %v3460
        %3493 = vst.msk [vmem:[%s180 + $0x40] sm:$0xff] %vm415, %v3461
        %3494 = vst.msk [vmem:[%s180 + $0x48] sm:$0xff] %vm415, %v3462
        %3495 = vst.msk [vmem:[%s180 + $0x50] sm:$0xff] %vm415, %v3463
        %3496 = vst.msk [vmem:[%s180 + $0x58] sm:$0xff] %vm415, %v3464
        %3497 = vst.msk [vmem:[%s180 + $0x60] sm:$0xff] %vm415, %v3465
        %3498 = vst.msk [vmem:[%s180 + $0x68] sm:$0xff] %vm415, %v3466
        %3499 = vst.msk [vmem:[%s180 + $0x70] sm:$0xff] %vm415, %v3467
        %3500 = vst.msk [vmem:[%s180 + $0x78] sm:$0xff] %vm415, %v3468
        %3501 = vst.msk [vmem:[%s180 + $0x80] sm:$0xff] %vm415, %v3469
        %3502 = vst.msk [vmem:[%s180 + $0x88] sm:$0xff] %vm415, %v3470
        %3503 = vst.msk [vmem:[%s180 + $0x90] sm:$0xff] %vm415, %v3471
        %3504 = vst.msk [vmem:[%s180 + $0x98] sm:$0xff] %vm415, %v3472
        %3505 = vst.msk [vmem:[%s180 + $0xa0] sm:$0xff] %vm415, %v3473
        %3506 = vst.msk [vmem:[%s180 + $0xa8] sm:$0xff] %vm415, %v3474
        %3507 = vst.msk [vmem:[%s180 + $0xb0] sm:$0xff] %vm415, %v3475
        %3508 = vst.msk [vmem:[%s180 + $0xb8] sm:$0xff] %vm415, %v3476
        %3509 = vst.msk [vmem:[%s180 + $0xc0] sm:$0xff] %vm415, %v3477
        %3510 = vst.msk [vmem:[%s180 + $0xc8] sm:$0xff] %vm415, %v3478
        %3511 = vst.msk [vmem:[%s180 + $0xd0] sm:$0xff] %vm415, %v3479
        %3512 = vst.msk [vmem:[%s180 + $0xd8] sm:$0xff] %vm415, %v3480
        %3513 = vst.msk [vmem:[%s180 + $0xe0] sm:$0xff] %vm415, %v3481
        %3514 = vst.msk [vmem:[%s180 + $0xe8] sm:$0xff] %vm415, %v3482
        %3515 = vst.msk [vmem:[%s180 + $0xf0] sm:$0xff] %vm415, %v3483
        %3516 = vst.msk [vmem:[%s180 + $0xf8] sm:$0xff] %vm415, %v3484
        %s3517 = sand.u32 %s90, 1
        %s3518 = scalar_lea.sflag [#allocation5], %s3517
        %s3519 = sand.u32 %s90, 1
        %s3520 = smul.addr %s3519, 256
        %s3521 = scalar_lea.vmem [#allocation6], %s3520
        // Predicated region
        $region33: #{tpu_custom_call.1} parent=27 // pred_check
          %p3522 = pneg %p100
        $region34: #{tpu_custom_call.1} parent=27 // pred_check_branch
          %3524 = sbr.rel (%p3522) target = $region36
        $region35: #{tpu_custom_call.1} parent=27 // pred_region
          %s3525 = smul.u32 4, %s24
          %s3527 = ssub.s32 4096, 4096
          %3528 = vsyncadd %s3518, %s3527
          %s3529 = smul.addr %s3525, 8
          %s3530 = smul.addr %s23, 64
          %s3531 = sadd.s32 %s3529, %s3530
          %s3532 = smul.addr %s3531, 128
          %s3533 = scalar_lea.hbm %s2, %s3532
          %s3534 = sshll.u32 %s3521, 4
          %s3535 = int_to_ptr.vmem [resolvable:$true] %s3534
          %3540 = dma.vmem_to_hbm [thread:$0]  %s3535, 4096, %s3533, %s3518, 128, 128, 8
        $region36: #{tpu_custom_call.1} parent=27 // pred_fallthru
          _
      $region28: #{tpu_custom_call.1} parent=5 // pred_fallthru
        _
      %p3541 = scmp.le.s32.totalorder 2, %s14
      // Predicated region
      $region37: #{tpu_custom_call.1} parent=5 // pred_check
        %p3542 = pneg %p3541
      $region38: #{tpu_custom_call.1} parent=5 // pred_check_branch
        %3544 = sbr.rel (%p3542) target = $region40
      $region39: #{tpu_custom_call.1} parent=5 // pred_region
        %s3545 = ssub.s32 %s14, 2
        // Predicated region
        $region41: #{tpu_custom_call.1} parent=39 // pred_check
          %p3546 = pneg %p106
        $region42: #{tpu_custom_call.1} parent=39 // pred_check_branch
          %3548 = sbr.rel (%p3546) target = $region44
        $region43: #{tpu_custom_call.1} parent=39 // pred_region
          %s3549 = sand.u32 %s91, 1
          %s3550 = scalar_lea.sflag [#allocation5], %s3549
          %s3551 = sand.u32 %s91, 1
          %s3552 = smul.addr %s3551, 256
          %s3553 = scalar_lea.vmem [#allocation6], %s3552
          %3554 = dma.done %s3550, 4096
        $region44: #{tpu_custom_call.1} parent=39 // pred_fallthru
          _
      $region40: #{tpu_custom_call.1} parent=5 // pred_fallthru
        _
    $region6: #{tpu_custom_call.1} parent=1 // loop_footer
      %s18 = sadd.s32 1, %s14
    $region7: #{tpu_custom_call.1} parent=1 // loop_footer_branch
      %13 = sbr.rel target = $region3
    $region8: #{tpu_custom_call.1} parent=1 // loop_exit
      _
    %3555 = vsyncpa [#allocation4], 1
    %s3556 = scalar_lea.sflag [#allocation4], 1
    %3557 = vsyncpa %s3556, 1
    %3558 = vsyncpa [#allocation5], 1
    %s3559 = scalar_lea.sflag [#allocation5], 1
    %3560 = vsyncpa %s3559, 1

</llo_original>
